<compile_context>
chip_gen: v6e
topology: v6e:2x2x1
jax: 0.10.0
libtpu: 0.0.40
codegen_flags: <defaults>
</compile_context>

<pallas_src>
import functools

import jax
import jax.numpy as jnp
from jax.experimental import pallas as pl
from jax.experimental.pallas import tpu as pltpu

KH, KW = 6, 3                    # conv kernel (height, width), padding = 1
W_IMG = 20                       # feature-map width (constant through convs)
W_PAD = W_IMG + 2                # padded row stride of every flat feature map
H_IMG = 16                       # input height: 16 -> 13 -> 10 -> 7 -> 4
T_LSTM, H_LSTM = 4, 32           # LSTM: 4 time steps, hidden 32
N_GROUPS, N_ACT = 3, 4           # head: 12 logits -> (3, 4) grouped softmax
N_TAPS = KH * KW                 # 18 conv taps
CIN = 16                         # all conv layers run with Cin padded to 16
K_CONV = N_TAPS * CIN            # 288 = stacked contraction dim per conv
N1 = (H_IMG - 3) * W_PAD         # 286 = largest flat output extent (conv1)
SRC_COLS = 400                   # wrapper-embedded input width (covers all tap reads)
EMB_OFF = W_PAD + 1              # 23 = one pad row + one pad col shift between layers


def _sigmoid(z):
    # sigmoid via EUP tanh: keeps the divide off the serial recurrence path
    return 0.5 * jnp.tanh(0.5 * z) + 0.5


# ---------------------------------------------------------------------------
# The single fused kernel
# ---------------------------------------------------------------------------

def _actor_fused_kernel(x_ref, hc0_ref, mask_ref,
                        wconv_ref, bconv_ref, wx_ref, wrec_ref, whead_ref,
                        out_ref, pad_a, pad_b, col_ref):
    f32 = jnp.float32

    # ---- conv stack: one K=288 matmul per layer over an im2col scratch -----
    def conv_layer(src_ref, dst_ref, h_in, layer):
        h_out = h_in - 3                              # H + 2*pad - KH + 1
        n = h_out * W_PAD
        # 18 shifted tap windows -> sublane-aligned 16-row blocks of col_ref
        for kh in range(KH):
            for kw in range(KW):
                tap = kh * KW + kw
                off = kh * W_PAD + kw
                col_ref[CIN * tap:CIN * (tap + 1), 0:n] = src_ref[0:CIN, off:off + n]
        acc = jnp.dot(wconv_ref[layer], col_ref[:, 0:n],
                      preferred_element_type=f32)     # (16,288) @ (288,n)
        # bias + ReLU; zero the 2 junk columns per row (they become padding)
        act = jnp.maximum(acc + bconv_ref[layer], 0.0) * mask_ref[:, 0:n]
        if dst_ref is not None:
            # re-embed with a one-pad-row + one-pad-col shift; zero only the
            # head/tail pad regions the next layer actually reads
            dst_ref[:, 0:EMB_OFF] = jnp.zeros((CIN, EMB_OFF), f32)
            dst_ref[:, EMB_OFF:EMB_OFF + n] = act
            dst_ref[:, EMB_OFF + n:2 * EMB_OFF + n] = jnp.zeros((CIN, EMB_OFF), f32)
        return act, h_out

    _, h1 = conv_layer(x_ref, pad_a, H_IMG, 0)        # 16 -> 13
    _, h2 = conv_layer(pad_a, pad_b, h1, 1)           # 13 -> 10
    _, h3 = conv_layer(pad_b, pad_a, h2, 2)           # 10 -> 7
    feat, _ = conv_layer(pad_a, None, h3, 3)          # 7  -> 4 : (16, 88)

    # ---- LSTM input projection, hoisted + fused with torch reshape(1,4,320) -
    # conv4's output channels were permuted so feat row 4r+t holds channel 4t+r.
    xw = jnp.dot(feat[0:4, :], wx_ref[0], preferred_element_type=f32)
    for r in range(1, 4):
        xw = xw + jnp.dot(feat[4 * r:4 * (r + 1), :], wx_ref[r],
                          preferred_element_type=f32)
    xw = xw + wrec_ref[H_LSTM:H_LSTM + 1, :]          # + (b_ih + b_hh), (4,128)

    # ---- LSTM recurrence: ONE gate-major matmul per step, lane-slice gates --
    whh = wrec_ref[0:H_LSTM, :]                       # (32, 128) cols = [i|f|g|o]
    h = hc0_ref[:, 0:H_LSTM]
    c = hc0_ref[:, H_LSTM:2 * H_LSTM]
    ys = []
    for t in range(T_LSTM):
        z = xw[t:t + 1, :] + jnp.dot(h, whh, preferred_element_type=f32)  # (1,128)
        i = _sigmoid(z[:, 0:32])
        f = _sigmoid(z[:, 32:64])
        g = jnp.tanh(z[:, 64:96])
        o = _sigmoid(z[:, 96:128])
        c = f * c + i * g
        h = o * jnp.tanh(c)
        ys.append(h)

    # ---- head: Linear(128 -> 12) on the VMEM-resident hidden states ---------
    logits = whead_ref[T_LSTM * H_LSTM:T_LSTM * H_LSTM + 1, :]     # (1, 12) bias
    for t in range(T_LSTM):
        logits = logits + jnp.dot(ys[t],
                                  whead_ref[H_LSTM * t:H_LSTM * (t + 1), :],
                                  preferred_element_type=f32)

    # ---- grouped log-softmax over (3, 4) with per-group maxes ----------------
    pieces = []
    for grp in range(N_GROUPS):
        lg = logits[:, N_ACT * grp:N_ACT * (grp + 1)]              # (1, 4)
        mg = jnp.max(lg, axis=-1, keepdims=True)
        eg = jnp.exp(lg - mg)
        sg = jnp.sum(eg, axis=-1, keepdims=True)
        pieces.append(lg - mg - jnp.log(sg))
    logp12 = jnp.concatenate(pieces, axis=-1)                      # (1, 12)

    # ---- single lane-dense packed output: [logp12 | 0*20 | h_n | c_n | 0*32] -
    out_ref[...] = jnp.concatenate(
        [logp12, jnp.zeros((1, 20), f32), h, c, jnp.zeros((1, 32), f32)], axis=-1)


# ---------------------------------------------------------------------------
# One-time parameter re-layout for the fused kernel
# ---------------------------------------------------------------------------

def prepare_params(p):
    def conv_k(w):                          # (16, Ci, 6, 3) -> (16, 288), Ci padded to 16
        co, ci = w.shape[0], w.shape[1]
        w = jnp.pad(w, ((0, 0), (0, CIN - ci), (0, 0), (0, 0)))
        # w_cat[co, tap*16 + ci] = w[co, ci, kh, kw]   (matches im2col row order)
        return jnp.transpose(w, (0, 2, 3, 1)).reshape(co, K_CONV)

    # conv4: permute output channels so feature row 4r+t holds channel 4t+r,
    # letting the LSTM input projection consume the map without a reshape.
    perm = jnp.array([4 * (n % 4) + n // 4 for n in range(16)], dtype=jnp.int32)

    w_conv = jnp.stack([conv_k(p["conv1_w"]), conv_k(p["conv2_w"]),
                        conv_k(p["conv3_w"]), conv_k(p["conv4_w"][perm])])   # (4,16,288)
    b_conv = jnp.stack([p["conv1_b"].reshape(16, 1), p["conv2_b"].reshape(16, 1),
                        p["conv3_b"].reshape(16, 1),
                        p["conv4_b"][perm].reshape(16, 1)])                   # (4,16,1)

    # LSTM input weight (128, 320) -> (4, 88, 128): [residue r, h*22+w, gate-major]
    wx = p["lstm_w_ih"].T.reshape(4, 4, W_IMG, 4 * H_LSTM)
    wx = jnp.pad(wx, ((0, 0), (0, 0), (0, 2), (0, 0))).reshape(4, 4 * W_PAD, 4 * H_LSTM)

    # recurrent slab: rows 0..31 = W_hh^T (gate-major cols), row 32 = b_ih + b_hh
    w_rec = jnp.concatenate(
        [p["lstm_w_hh"].T,
         (p["lstm_b_ih"] + p["lstm_b_hh"]).reshape(1, 4 * H_LSTM)], axis=0)   # (33,128)

    # head slab: rows 0..127 = lin_w^T (flat index t*32+k), row 128 = bias
    w_head = jnp.concatenate(
        [p["lin_w"].T, p["lin_b"].reshape(1, N_GROUPS * N_ACT)], axis=0)      # (129,12)

    # junk-column lane mask (flat stride-22 layout repeats every 22 lanes)
    row = jnp.concatenate([jnp.ones((W_IMG,), jnp.float32),
                           jnp.zeros((2,), jnp.float32)])
    mask = jnp.tile(row, H_IMG - 3).reshape(1, N1)                            # (1,286)

    return {"w_conv": w_conv, "b_conv": b_conv, "wx": wx,
            "w_rec": w_rec, "w_head": w_head, "mask": mask}


# ---------------------------------------------------------------------------
# Forward pass (one pallas_call + PRNG sampling glue)
# ---------------------------------------------------------------------------

def actor_forward(kp, tensor_cv, h_state, key):
    """Matches Actor.forward: returns (action, log_prob, entropy, (h_n, c_n))."""
    # wrapper-side padded embedding: (4,16,20) -> zero-padded (16, 400) flat map
    x = tensor_cv.astype(jnp.float32)
    xp = jnp.pad(x, ((0, CIN - x.shape[0]), (1, 1), (1, 1)))        # (16, 18, 22)
    x_pad = jnp.pad(xp.reshape(CIN, (H_IMG + 2) * W_PAD),
                    ((0, 0), (0, SRC_COLS - (H_IMG + 2) * W_PAD)))  # (16, 400)
    hc0 = jnp.concatenate([h_state[0].reshape(1, H_LSTM),
                           h_state[1].reshape(1, H_LSTM)],
                          axis=-1).astype(jnp.float32)              # (1, 64)

    out = pl.pallas_call(
        _actor_fused_kernel,
        out_shape=jax.ShapeDtypeStruct((1, 128), jnp.float32),
        scratch_shapes=[pltpu.VMEM((CIN, SRC_COLS), jnp.float32),   # ping
                        pltpu.VMEM((CIN, SRC_COLS), jnp.float32),   # pong
                        pltpu.VMEM((K_CONV, N1), jnp.float32)],     # im2col
    )(x_pad, hc0, kp["mask"], kp["w_conv"], kp["b_conv"],
      kp["wx"], kp["w_rec"], kp["w_head"])

    logp_all = out[0, 0:N_GROUPS * N_ACT].reshape(N_GROUPS, N_ACT)
    # Categorical sampling (stochastic: JAX PRNG instead of torch's global RNG)
    action = jax.random.categorical(key, logp_all, axis=-1)         # (3,) int32
    log_prob = jnp.take_along_axis(logp_all, action[:, None],
                                   axis=-1).reshape(1, N_GROUPS)
    # Matches the module exactly: -exp(log_prob)*log_prob of the SAMPLED action.
    entropy = -jnp.exp(log_prob) * log_prob
    hn = out[:, 32:64].reshape(1, 1, H_LSTM)
    cn = out[:, 64:96].reshape(1, 1, H_LSTM)
    # TODO(synk): PyTorch returns action.double(); TPU has no native float64,
    # so the action is returned as float32.
    return (action.astype(jnp.float32), log_prob, entropy, (hn, cn))


# ---------------------------------------------------------------------------
# Deterministic parameter init (shapes from Actor.__init__)
# ---------------------------------------------------------------------------

def init_params(key):
    ks = jax.random.split(key, 14)

    def u(k, shape, fan_in):
        bound = 1.0 / jnp.sqrt(jnp.float32(fan_in))
        return jax.random.uniform(k, shape, jnp.float32, -bound, bound)

    p = {}
    p["conv1_w"] = u(ks[0], (16, 4, KH, KW), 4 * KH * KW)
    p["conv1_b"] = u(ks[1], (16,), 4 * KH * KW)
    p["conv2_w"] = u(ks[2], (16, 16, KH, KW), 16 * KH * KW)
    p["conv2_b"] = u(ks[3], (16,), 16 * KH * KW)
    p["conv3_w"] = u(ks[4], (16, 16, KH, KW), 16 * KH * KW)
    p["conv3_b"] = u(ks[5], (16,), 16 * KH * KW)
    p["conv4_w"] = u(ks[6], (16, 16, KH, KW), 16 * KH * KW)
    p["conv4_b"] = u(ks[7], (16,), 16 * KH * KW)
    p["lstm_w_ih"] = u(ks[8], (128, 320), 32)
    p["lstm_w_hh"] = u(ks[9], (128, 32), 32)
    p["lstm_b_ih"] = u(ks[10], (128,), 32)
    p["lstm_b_hh"] = u(ks[11], (128,), 32)
    p["lin_w"] = u(ks[12], (12, 128), 128)
    p["lin_b"] = u(ks[13], (12,), 128)
    return p


if __name__ == "__main__":
    key = jax.random.PRNGKey(0)
    pkey, xkey, skey = jax.random.split(key, 3)
    params = init_params(pkey)
    kparams = prepare_params(params)     # one-time weight re-layout

    # Input (C=4, H=16, W=20): four (6,3)/pad=1 convs give (16, 4, 20) = 4*320
    # features, matching the module's hard-coded reshape(1, 4, 320).
    tensor_cv = jax.random.normal(xkey, (4, H_IMG, W_IMG), jnp.float32)
    h_state = (jnp.zeros((1, 1, H_LSTM), jnp.float32),
               jnp.zeros((1, 1, H_LSTM), jnp.float32))

    fwd = jax.jit(functools.partial(actor_forward, kparams))
    action, log_prob, entropy, (hn, cn) = fwd(tensor_cv, h_state, skey)
    jax.block_until_ready((action, log_prob, entropy, hn, cn))

    assert action.shape == (3,)
    assert log_prob.shape == (1, 3)
    assert entropy.shape == (1, 3)
    assert hn.shape == (1, 1, 32) and cn.shape == (1, 1, 32)
    assert bool(jnp.all(jnp.isfinite(log_prob)))
    assert bool(jnp.all(log_prob <= 1e-5))          # log-probs are non-positive
    assert bool(jnp.all(jnp.abs(hn) < 1.0))         # |o * tanh(c)| < 1
    print("KERNEL_OK")
</pallas_src>

<mosaic_0001>
module attributes {stable_mosaic.version = 11 : i64} {
  func.func @_actor_fused_kernel(%arg0: memref<16x400xf32, #tpu.memory_space<vmem>>, %arg1: memref<1x64xf32, #tpu.memory_space<vmem>>, %arg2: memref<1x286xf32, #tpu.memory_space<vmem>>, %arg3: memref<4x16x288xf32, #tpu.memory_space<vmem>>, %arg4: memref<4x16x1xf32, #tpu.memory_space<vmem>>, %arg5: memref<4x88x128xf32, #tpu.memory_space<vmem>>, %arg6: memref<33x128xf32, #tpu.memory_space<vmem>>, %arg7: memref<129x12xf32, #tpu.memory_space<vmem>>, %arg8: memref<1x128xf32, #tpu.memory_space<vmem>>, %arg9: memref<16x400xf32, #tpu.memory_space<vmem>>, %arg10: memref<16x400xf32, #tpu.memory_space<vmem>>, %arg11: memref<288x286xf32, #tpu.memory_space<vmem>>) attributes {dimension_semantics = [], scalar_prefetch = 0 : i64, scratch_operands = 3 : i64, tpu.core_type = #tpu.core_type<tc>} {
    %c0 = arith.constant 0 : index
    %c0_0 = arith.constant 0 : index
    %0 = vector.load %arg0[%c0, %c0_0] : memref<16x400xf32, #tpu.memory_space<vmem>>, vector<16x286xf32>
    %c0_1 = arith.constant 0 : index
    %c0_2 = arith.constant 0 : index
    %1 = vector.load %arg11[%c0_1, %c0_2] : memref<288x286xf32, #tpu.memory_space<vmem>>, vector<16x286xf32>
    tpu.vector_store %arg11[%c0_1, %c0_2], %0 {strides = array<i32>} : memref<288x286xf32, #tpu.memory_space<vmem>>, vector<16x286xf32>,
    %c0_3 = arith.constant 0 : index
    %c1 = arith.constant 1 : index
    %2 = vector.load %arg0[%c0_3, %c1] : memref<16x400xf32, #tpu.memory_space<vmem>>, vector<16x286xf32>
    %c16 = arith.constant 16 : index
    %c0_4 = arith.constant 0 : index
    %3 = vector.load %arg11[%c16, %c0_4] : memref<288x286xf32, #tpu.memory_space<vmem>>, vector<16x286xf32>
    tpu.vector_store %arg11[%c16, %c0_4], %2 {strides = array<i32>} : memref<288x286xf32, #tpu.memory_space<vmem>>, vector<16x286xf32>,
    %c0_5 = arith.constant 0 : index
    %c2 = arith.constant 2 : index
    %4 = vector.load %arg0[%c0_5, %c2] : memref<16x400xf32, #tpu.memory_space<vmem>>, vector<16x286xf32>
    %c32 = arith.constant 32 : index
    %c0_6 = arith.constant 0 : index
    %5 = vector.load %arg11[%c32, %c0_6] : memref<288x286xf32, #tpu.memory_space<vmem>>, vector<16x286xf32>
    tpu.vector_store %arg11[%c32, %c0_6], %4 {strides = array<i32>} : memref<288x286xf32, #tpu.memory_space<vmem>>, vector<16x286xf32>,
    %c0_7 = arith.constant 0 : index
    %c22 = arith.constant 22 : index
    %6 = vector.load %arg0[%c0_7, %c22] : memref<16x400xf32, #tpu.memory_space<vmem>>, vector<16x286xf32>
    %c48 = arith.constant 48 : index
    %c0_8 = arith.constant 0 : index
    %7 = vector.load %arg11[%c48, %c0_8] : memref<288x286xf32, #tpu.memory_space<vmem>>, vector<16x286xf32>
    tpu.vector_store %arg11[%c48, %c0_8], %6 {strides = array<i32>} : memref<288x286xf32, #tpu.memory_space<vmem>>, vector<16x286xf32>,
    %c0_9 = arith.constant 0 : index
    %c23 = arith.constant 23 : index
    %8 = vector.load %arg0[%c0_9, %c23] : memref<16x400xf32, #tpu.memory_space<vmem>>, vector<16x286xf32>
    %c64 = arith.constant 64 : index
    %c0_10 = arith.constant 0 : index
    %9 = vector.load %arg11[%c64, %c0_10] : memref<288x286xf32, #tpu.memory_space<vmem>>, vector<16x286xf32>
    tpu.vector_store %arg11[%c64, %c0_10], %8 {strides = array<i32>} : memref<288x286xf32, #tpu.memory_space<vmem>>, vector<16x286xf32>,
    %c0_11 = arith.constant 0 : index
    %c24 = arith.constant 24 : index
    %10 = vector.load %arg0[%c0_11, %c24] : memref<16x400xf32, #tpu.memory_space<vmem>>, vector<16x286xf32>
    %c80 = arith.constant 80 : index
    %c0_12 = arith.constant 0 : index
    %11 = vector.load %arg11[%c80, %c0_12] : memref<288x286xf32, #tpu.memory_space<vmem>>, vector<16x286xf32>
    tpu.vector_store %arg11[%c80, %c0_12], %10 {strides = array<i32>} : memref<288x286xf32, #tpu.memory_space<vmem>>, vector<16x286xf32>,
    %c0_13 = arith.constant 0 : index
    %c44 = arith.constant 44 : index
    %12 = vector.load %arg0[%c0_13, %c44] : memref<16x400xf32, #tpu.memory_space<vmem>>, vector<16x286xf32>
    %c96 = arith.constant 96 : index
    %c0_14 = arith.constant 0 : index
    %13 = vector.load %arg11[%c96, %c0_14] : memref<288x286xf32, #tpu.memory_space<vmem>>, vector<16x286xf32>
    tpu.vector_store %arg11[%c96, %c0_14], %12 {strides = array<i32>} : memref<288x286xf32, #tpu.memory_space<vmem>>, vector<16x286xf32>,
    %c0_15 = arith.constant 0 : index
    %c45 = arith.constant 45 : index
    %14 = vector.load %arg0[%c0_15, %c45] : memref<16x400xf32, #tpu.memory_space<vmem>>, vector<16x286xf32>
    %c112 = arith.constant 112 : index
    %c0_16 = arith.constant 0 : index
    %15 = vector.load %arg11[%c112, %c0_16] : memref<288x286xf32, #tpu.memory_space<vmem>>, vector<16x286xf32>
    tpu.vector_store %arg11[%c112, %c0_16], %14 {strides = array<i32>} : memref<288x286xf32, #tpu.memory_space<vmem>>, vector<16x286xf32>,
    %c0_17 = arith.constant 0 : index
    %c46 = arith.constant 46 : index
    %16 = vector.load %arg0[%c0_17, %c46] : memref<16x400xf32, #tpu.memory_space<vmem>>, vector<16x286xf32>
    %c128 = arith.constant 128 : index
    %c0_18 = arith.constant 0 : index
    %17 = vector.load %arg11[%c128, %c0_18] : memref<288x286xf32, #tpu.memory_space<vmem>>, vector<16x286xf32>
    tpu.vector_store %arg11[%c128, %c0_18], %16 {strides = array<i32>} : memref<288x286xf32, #tpu.memory_space<vmem>>, vector<16x286xf32>,
    %c0_19 = arith.constant 0 : index
    %c66 = arith.constant 66 : index
    %18 = vector.load %arg0[%c0_19, %c66] : memref<16x400xf32, #tpu.memory_space<vmem>>, vector<16x286xf32>
    %c144 = arith.constant 144 : index
    %c0_20 = arith.constant 0 : index
    %19 = vector.load %arg11[%c144, %c0_20] : memref<288x286xf32, #tpu.memory_space<vmem>>, vector<16x286xf32>
    tpu.vector_store %arg11[%c144, %c0_20], %18 {strides = array<i32>} : memref<288x286xf32, #tpu.memory_space<vmem>>, vector<16x286xf32>,
    %c0_21 = arith.constant 0 : index
    %c67 = arith.constant 67 : index
    %20 = vector.load %arg0[%c0_21, %c67] : memref<16x400xf32, #tpu.memory_space<vmem>>, vector<16x286xf32>
    %c160 = arith.constant 160 : index
    %c0_22 = arith.constant 0 : index
    %21 = vector.load %arg11[%c160, %c0_22] : memref<288x286xf32, #tpu.memory_space<vmem>>, vector<16x286xf32>
    tpu.vector_store %arg11[%c160, %c0_22], %20 {strides = array<i32>} : memref<288x286xf32, #tpu.memory_space<vmem>>, vector<16x286xf32>,
    %c0_23 = arith.constant 0 : index
    %c68 = arith.constant 68 : index
    %22 = vector.load %arg0[%c0_23, %c68] : memref<16x400xf32, #tpu.memory_space<vmem>>, vector<16x286xf32>
    %c176 = arith.constant 176 : index
    %c0_24 = arith.constant 0 : index
    %23 = vector.load %arg11[%c176, %c0_24] : memref<288x286xf32, #tpu.memory_space<vmem>>, vector<16x286xf32>
    tpu.vector_store %arg11[%c176, %c0_24], %22 {strides = array<i32>} : memref<288x286xf32, #tpu.memory_space<vmem>>, vector<16x286xf32>,
    %c0_25 = arith.constant 0 : index
    %c88 = arith.constant 88 : index
    %24 = vector.load %arg0[%c0_25, %c88] : memref<16x400xf32, #tpu.memory_space<vmem>>, vector<16x286xf32>
    %c192 = arith.constant 192 : index
    %c0_26 = arith.constant 0 : index
    %25 = vector.load %arg11[%c192, %c0_26] : memref<288x286xf32, #tpu.memory_space<vmem>>, vector<16x286xf32>
    tpu.vector_store %arg11[%c192, %c0_26], %24 {strides = array<i32>} : memref<288x286xf32, #tpu.memory_space<vmem>>, vector<16x286xf32>,
    %c0_27 = arith.constant 0 : index
    %c89 = arith.constant 89 : index
    %26 = vector.load %arg0[%c0_27, %c89] : memref<16x400xf32, #tpu.memory_space<vmem>>, vector<16x286xf32>
    %c208 = arith.constant 208 : index
    %c0_28 = arith.constant 0 : index
    %27 = vector.load %arg11[%c208, %c0_28] : memref<288x286xf32, #tpu.memory_space<vmem>>, vector<16x286xf32>
    tpu.vector_store %arg11[%c208, %c0_28], %26 {strides = array<i32>} : memref<288x286xf32, #tpu.memory_space<vmem>>, vector<16x286xf32>,
    %c0_29 = arith.constant 0 : index
    %c90 = arith.constant 90 : index
    %28 = vector.load %arg0[%c0_29, %c90] : memref<16x400xf32, #tpu.memory_space<vmem>>, vector<16x286xf32>
    %c224 = arith.constant 224 : index
    %c0_30 = arith.constant 0 : index
    %29 = vector.load %arg11[%c224, %c0_30] : memref<288x286xf32, #tpu.memory_space<vmem>>, vector<16x286xf32>
    tpu.vector_store %arg11[%c224, %c0_30], %28 {strides = array<i32>} : memref<288x286xf32, #tpu.memory_space<vmem>>, vector<16x286xf32>,
    %c0_31 = arith.constant 0 : index
    %c110 = arith.constant 110 : index
    %30 = vector.load %arg0[%c0_31, %c110] : memref<16x400xf32, #tpu.memory_space<vmem>>, vector<16x286xf32>
    %c240 = arith.constant 240 : index
    %c0_32 = arith.constant 0 : index
    %31 = vector.load %arg11[%c240, %c0_32] : memref<288x286xf32, #tpu.memory_space<vmem>>, vector<16x286xf32>
    tpu.vector_store %arg11[%c240, %c0_32], %30 {strides = array<i32>} : memref<288x286xf32, #tpu.memory_space<vmem>>, vector<16x286xf32>,
    %c0_33 = arith.constant 0 : index
    %c111 = arith.constant 111 : index
    %32 = vector.load %arg0[%c0_33, %c111] : memref<16x400xf32, #tpu.memory_space<vmem>>, vector<16x286xf32>
    %c256 = arith.constant 256 : index
    %c0_34 = arith.constant 0 : index
    %33 = vector.load %arg11[%c256, %c0_34] : memref<288x286xf32, #tpu.memory_space<vmem>>, vector<16x286xf32>
    tpu.vector_store %arg11[%c256, %c0_34], %32 {strides = array<i32>} : memref<288x286xf32, #tpu.memory_space<vmem>>, vector<16x286xf32>,
    %c0_35 = arith.constant 0 : index
    %c112_36 = arith.constant 112 : index
    %34 = vector.load %arg0[%c0_35, %c112_36] : memref<16x400xf32, #tpu.memory_space<vmem>>, vector<16x286xf32>
    %c272 = arith.constant 272 : index
    %c0_37 = arith.constant 0 : index
    %35 = vector.load %arg11[%c272, %c0_37] : memref<288x286xf32, #tpu.memory_space<vmem>>, vector<16x286xf32>
    tpu.vector_store %arg11[%c272, %c0_37], %34 {strides = array<i32>} : memref<288x286xf32, #tpu.memory_space<vmem>>, vector<16x286xf32>,
    %c0_38 = arith.constant 0 : index
    %c0_39 = arith.constant 0 : index
    %c0_40 = arith.constant 0 : index
    %36 = vector.load %arg3[%c0_38, %c0_39, %c0_40] : memref<4x16x288xf32, #tpu.memory_space<vmem>>, vector<1x16x288xf32>
    %37 = vector.shape_cast %36 : vector<1x16x288xf32> to vector<16x288xf32>
    %c0_41 = arith.constant 0 : index
    %c0_42 = arith.constant 0 : index
    %38 = vector.load %arg11[%c0_41, %c0_42] : memref<288x286xf32, #tpu.memory_space<vmem>>, vector<288x286xf32>
    %cst = arith.constant dense<0.000000e+00> : vector<16x286xf32>
    %39 = tpu.matmul %37, %38, %cst {dimension_numbers = #tpu.dot_dimension_numbers<[1], [0], [0], [1], [0, 0, 1, 1], [], []>} : vector<16x288xf32>, vector<288x286xf32>, vector<16x286xf32> -> vector<16x286xf32>
    %c0_43 = arith.constant 0 : index
    %c0_44 = arith.constant 0 : index
    %c0_45 = arith.constant 0 : index
    %40 = vector.load %arg4[%c0_43, %c0_44, %c0_45] : memref<4x16x1xf32, #tpu.memory_space<vmem>>, vector<1x16x1xf32>
    %41 = vector.shape_cast %40 : vector<1x16x1xf32> to vector<16x1xf32>
    %42 = vector.broadcast %41 : vector<16x1xf32> to vector<16x286xf32>
    %43 = arith.addf %39, %42 : vector<16x286xf32>
    %cst_46 = arith.constant 0.000000e+00 : f32
    %44 = vector.broadcast %cst_46 : f32 to vector<16x286xf32>
    %45 = arith.maximumf %43, %44 : vector<16x286xf32>
    %c0_47 = arith.constant 0 : index
    %c0_48 = arith.constant 0 : index
    %46 = vector.load %arg2[%c0_47, %c0_48] : memref<1x286xf32, #tpu.memory_space<vmem>>, vector<1x286xf32>
    %47 = vector.broadcast %46 : vector<1x286xf32> to vector<16x286xf32>
    %48 = arith.mulf %45, %47 : vector<16x286xf32>
    %cst_49 = arith.constant 0.000000e+00 : f32
    %49 = vector.broadcast %cst_49 : f32 to vector<16x23xf32>
    %c0_50 = arith.constant 0 : index
    %c0_51 = arith.constant 0 : index
    %50 = vector.load %arg9[%c0_50, %c0_51] : memref<16x400xf32, #tpu.memory_space<vmem>>, vector<16x23xf32>
    tpu.vector_store %arg9[%c0_50, %c0_51], %49 {strides = array<i32>} : memref<16x400xf32, #tpu.memory_space<vmem>>, vector<16x23xf32>,
    %c0_52 = arith.constant 0 : index
    %c23_53 = arith.constant 23 : index
    %51 = vector.load %arg9[%c0_52, %c23_53] : memref<16x400xf32, #tpu.memory_space<vmem>>, vector<16x286xf32>
    tpu.vector_store %arg9[%c0_52, %c23_53], %48 {strides = array<i32>} : memref<16x400xf32, #tpu.memory_space<vmem>>, vector<16x286xf32>,
    %cst_54 = arith.constant 0.000000e+00 : f32
    %52 = vector.broadcast %cst_54 : f32 to vector<16x23xf32>
    %c0_55 = arith.constant 0 : index
    %c309 = arith.constant 309 : index
    %53 = vector.load %arg9[%c0_55, %c309] : memref<16x400xf32, #tpu.memory_space<vmem>>, vector<16x23xf32>
    tpu.vector_store %arg9[%c0_55, %c309], %52 {strides = array<i32>} : memref<16x400xf32, #tpu.memory_space<vmem>>, vector<16x23xf32>,
    %c0_56 = arith.constant 0 : index
    %c0_57 = arith.constant 0 : index
    %54 = vector.load %arg9[%c0_56, %c0_57] : memref<16x400xf32, #tpu.memory_space<vmem>>, vector<16x220xf32>
    %c0_58 = arith.constant 0 : index
    %c0_59 = arith.constant 0 : index
    %55 = vector.load %arg11[%c0_58, %c0_59] : memref<288x286xf32, #tpu.memory_space<vmem>>, vector<16x220xf32>
    tpu.vector_store %arg11[%c0_58, %c0_59], %54 {strides = array<i32>} : memref<288x286xf32, #tpu.memory_space<vmem>>, vector<16x220xf32>,
    %c0_60 = arith.constant 0 : index
    %c1_61 = arith.constant 1 : index
    %56 = vector.load %arg9[%c0_60, %c1_61] : memref<16x400xf32, #tpu.memory_space<vmem>>, vector<16x220xf32>
    %c16_62 = arith.constant 16 : index
    %c0_63 = arith.constant 0 : index
    %57 = vector.load %arg11[%c16_62, %c0_63] : memref<288x286xf32, #tpu.memory_space<vmem>>, vector<16x220xf32>
    tpu.vector_store %arg11[%c16_62, %c0_63], %56 {strides = array<i32>} : memref<288x286xf32, #tpu.memory_space<vmem>>, vector<16x220xf32>,
    %c0_64 = arith.constant 0 : index
    %c2_65 = arith.constant 2 : index
    %58 = vector.load %arg9[%c0_64, %c2_65] : memref<16x400xf32, #tpu.memory_space<vmem>>, vector<16x220xf32>
    %c32_66 = arith.constant 32 : index
    %c0_67 = arith.constant 0 : index
    %59 = vector.load %arg11[%c32_66, %c0_67] : memref<288x286xf32, #tpu.memory_space<vmem>>, vector<16x220xf32>
    tpu.vector_store %arg11[%c32_66, %c0_67], %58 {strides = array<i32>} : memref<288x286xf32, #tpu.memory_space<vmem>>, vector<16x220xf32>,
    %c0_68 = arith.constant 0 : index
    %c22_69 = arith.constant 22 : index
    %60 = vector.load %arg9[%c0_68, %c22_69] : memref<16x400xf32, #tpu.memory_space<vmem>>, vector<16x220xf32>
    %c48_70 = arith.constant 48 : index
    %c0_71 = arith.constant 0 : index
    %61 = vector.load %arg11[%c48_70, %c0_71] : memref<288x286xf32, #tpu.memory_space<vmem>>, vector<16x220xf32>
    tpu.vector_store %arg11[%c48_70, %c0_71], %60 {strides = array<i32>} : memref<288x286xf32, #tpu.memory_space<vmem>>, vector<16x220xf32>,
    %c0_72 = arith.constant 0 : index
    %c23_73 = arith.constant 23 : index
    %62 = vector.load %arg9[%c0_72, %c23_73] : memref<16x400xf32, #tpu.memory_space<vmem>>, vector<16x220xf32>
    %c64_74 = arith.constant 64 : index
    %c0_75 = arith.constant 0 : index
    %63 = vector.load %arg11[%c64_74, %c0_75] : memref<288x286xf32, #tpu.memory_space<vmem>>, vector<16x220xf32>
    tpu.vector_store %arg11[%c64_74, %c0_75], %62 {strides = array<i32>} : memref<288x286xf32, #tpu.memory_space<vmem>>, vector<16x220xf32>,
    %c0_76 = arith.constant 0 : index
    %c24_77 = arith.constant 24 : index
    %64 = vector.load %arg9[%c0_76, %c24_77] : memref<16x400xf32, #tpu.memory_space<vmem>>, vector<16x220xf32>
    %c80_78 = arith.constant 80 : index
    %c0_79 = arith.constant 0 : index
    %65 = vector.load %arg11[%c80_78, %c0_79] : memref<288x286xf32, #tpu.memory_space<vmem>>, vector<16x220xf32>
    tpu.vector_store %arg11[%c80_78, %c0_79], %64 {strides = array<i32>} : memref<288x286xf32, #tpu.memory_space<vmem>>, vector<16x220xf32>,
    %c0_80 = arith.constant 0 : index
    %c44_81 = arith.constant 44 : index
    %66 = vector.load %arg9[%c0_80, %c44_81] : memref<16x400xf32, #tpu.memory_space<vmem>>, vector<16x220xf32>
    %c96_82 = arith.constant 96 : index
    %c0_83 = arith.constant 0 : index
    %67 = vector.load %arg11[%c96_82, %c0_83] : memref<288x286xf32, #tpu.memory_space<vmem>>, vector<16x220xf32>
    tpu.vector_store %arg11[%c96_82, %c0_83], %66 {strides = array<i32>} : memref<288x286xf32, #tpu.memory_space<vmem>>, vector<16x220xf32>,
    %c0_84 = arith.constant 0 : index
    %c45_85 = arith.constant 45 : index
    %68 = vector.load %arg9[%c0_84, %c45_85] : memref<16x400xf32, #tpu.memory_space<vmem>>, vector<16x220xf32>
    %c112_86 = arith.constant 112 : index
    %c0_87 = arith.constant 0 : index
    %69 = vector.load %arg11[%c112_86, %c0_87] : memref<288x286xf32, #tpu.memory_space<vmem>>, vector<16x220xf32>
    tpu.vector_store %arg11[%c112_86, %c0_87], %68 {strides = array<i32>} : memref<288x286xf32, #tpu.memory_space<vmem>>, vector<16x220xf32>,
    %c0_88 = arith.constant 0 : index
    %c46_89 = arith.constant 46 : index
    %70 = vector.load %arg9[%c0_88, %c46_89] : memref<16x400xf32, #tpu.memory_space<vmem>>, vector<16x220xf32>
    %c128_90 = arith.constant 128 : index
    %c0_91 = arith.constant 0 : index
    %71 = vector.load %arg11[%c128_90, %c0_91] : memref<288x286xf32, #tpu.memory_space<vmem>>, vector<16x220xf32>
    tpu.vector_store %arg11[%c128_90, %c0_91], %70 {strides = array<i32>} : memref<288x286xf32, #tpu.memory_space<vmem>>, vector<16x220xf32>,
    %c0_92 = arith.constant 0 : index
    %c66_93 = arith.constant 66 : index
    %72 = vector.load %arg9[%c0_92, %c66_93] : memref<16x400xf32, #tpu.memory_space<vmem>>, vector<16x220xf32>
    %c144_94 = arith.constant 144 : index
    %c0_95 = arith.constant 0 : index
    %73 = vector.load %arg11[%c144_94, %c0_95] : memref<288x286xf32, #tpu.memory_space<vmem>>, vector<16x220xf32>
    tpu.vector_store %arg11[%c144_94, %c0_95], %72 {strides = array<i32>} : memref<288x286xf32, #tpu.memory_space<vmem>>, vector<16x220xf32>,
    %c0_96 = arith.constant 0 : index
    %c67_97 = arith.constant 67 : index
    %74 = vector.load %arg9[%c0_96, %c67_97] : memref<16x400xf32, #tpu.memory_space<vmem>>, vector<16x220xf32>
    %c160_98 = arith.constant 160 : index
    %c0_99 = arith.constant 0 : index
    %75 = vector.load %arg11[%c160_98, %c0_99] : memref<288x286xf32, #tpu.memory_space<vmem>>, vector<16x220xf32>
    tpu.vector_store %arg11[%c160_98, %c0_99], %74 {strides = array<i32>} : memref<288x286xf32, #tpu.memory_space<vmem>>, vector<16x220xf32>,
    %c0_100 = arith.constant 0 : index
    %c68_101 = arith.constant 68 : index
    %76 = vector.load %arg9[%c0_100, %c68_101] : memref<16x400xf32, #tpu.memory_space<vmem>>, vector<16x220xf32>
    %c176_102 = arith.constant 176 : index
    %c0_103 = arith.constant 0 : index
    %77 = vector.load %arg11[%c176_102, %c0_103] : memref<288x286xf32, #tpu.memory_space<vmem>>, vector<16x220xf32>
    tpu.vector_store %arg11[%c176_102, %c0_103], %76 {strides = array<i32>} : memref<288x286xf32, #tpu.memory_space<vmem>>, vector<16x220xf32>,
    %c0_104 = arith.constant 0 : index
    %c88_105 = arith.constant 88 : index
    %78 = vector.load %arg9[%c0_104, %c88_105] : memref<16x400xf32, #tpu.memory_space<vmem>>, vector<16x220xf32>
    %c192_106 = arith.constant 192 : index
    %c0_107 = arith.constant 0 : index
    %79 = vector.load %arg11[%c192_106, %c0_107] : memref<288x286xf32, #tpu.memory_space<vmem>>, vector<16x220xf32>
    tpu.vector_store %arg11[%c192_106, %c0_107], %78 {strides = array<i32>} : memref<288x286xf32, #tpu.memory_space<vmem>>, vector<16x220xf32>,
    %c0_108 = arith.constant 0 : index
    %c89_109 = arith.constant 89 : index
    %80 = vector.load %arg9[%c0_108, %c89_109] : memref<16x400xf32, #tpu.memory_space<vmem>>, vector<16x220xf32>
    %c208_110 = arith.constant 208 : index
    %c0_111 = arith.constant 0 : index
    %81 = vector.load %arg11[%c208_110, %c0_111] : memref<288x286xf32, #tpu.memory_space<vmem>>, vector<16x220xf32>
    tpu.vector_store %arg11[%c208_110, %c0_111], %80 {strides = array<i32>} : memref<288x286xf32, #tpu.memory_space<vmem>>, vector<16x220xf32>,
    %c0_112 = arith.constant 0 : index
    %c90_113 = arith.constant 90 : index
    %82 = vector.load %arg9[%c0_112, %c90_113] : memref<16x400xf32, #tpu.memory_space<vmem>>, vector<16x220xf32>
    %c224_114 = arith.constant 224 : index
    %c0_115 = arith.constant 0 : index
    %83 = vector.load %arg11[%c224_114, %c0_115] : memref<288x286xf32, #tpu.memory_space<vmem>>, vector<16x220xf32>
    tpu.vector_store %arg11[%c224_114, %c0_115], %82 {strides = array<i32>} : memref<288x286xf32, #tpu.memory_space<vmem>>, vector<16x220xf32>,
    %c0_116 = arith.constant 0 : index
    %c110_117 = arith.constant 110 : index
    %84 = vector.load %arg9[%c0_116, %c110_117] : memref<16x400xf32, #tpu.memory_space<vmem>>, vector<16x220xf32>
    %c240_118 = arith.constant 240 : index
    %c0_119 = arith.constant 0 : index
    %85 = vector.load %arg11[%c240_118, %c0_119] : memref<288x286xf32, #tpu.memory_space<vmem>>, vector<16x220xf32>
    tpu.vector_store %arg11[%c240_118, %c0_119], %84 {strides = array<i32>} : memref<288x286xf32, #tpu.memory_space<vmem>>, vector<16x220xf32>,
    %c0_120 = arith.constant 0 : index
    %c111_121 = arith.constant 111 : index
    %86 = vector.load %arg9[%c0_120, %c111_121] : memref<16x400xf32, #tpu.memory_space<vmem>>, vector<16x220xf32>
    %c256_122 = arith.constant 256 : index
    %c0_123 = arith.constant 0 : index
    %87 = vector.load %arg11[%c256_122, %c0_123] : memref<288x286xf32, #tpu.memory_space<vmem>>, vector<16x220xf32>
    tpu.vector_store %arg11[%c256_122, %c0_123], %86 {strides = array<i32>} : memref<288x286xf32, #tpu.memory_space<vmem>>, vector<16x220xf32>,
    %c0_124 = arith.constant 0 : index
    %c112_125 = arith.constant 112 : index
    %88 = vector.load %arg9[%c0_124, %c112_125] : memref<16x400xf32, #tpu.memory_space<vmem>>, vector<16x220xf32>
    %c272_126 = arith.constant 272 : index
    %c0_127 = arith.constant 0 : index
    %89 = vector.load %arg11[%c272_126, %c0_127] : memref<288x286xf32, #tpu.memory_space<vmem>>, vector<16x220xf32>
    tpu.vector_store %arg11[%c272_126, %c0_127], %88 {strides = array<i32>} : memref<288x286xf32, #tpu.memory_space<vmem>>, vector<16x220xf32>,
    %c1_128 = arith.constant 1 : index
    %c0_129 = arith.constant 0 : index
    %c0_130 = arith.constant 0 : index
    %90 = vector.load %arg3[%c1_128, %c0_129, %c0_130] : memref<4x16x288xf32, #tpu.memory_space<vmem>>, vector<1x16x288xf32>
    %91 = vector.shape_cast %90 : vector<1x16x288xf32> to vector<16x288xf32>
    %c0_131 = arith.constant 0 : index
    %c0_132 = arith.constant 0 : index
    %92 = vector.load %arg11[%c0_131, %c0_132] : memref<288x286xf32, #tpu.memory_space<vmem>>, vector<288x220xf32>
    %cst_133 = arith.constant dense<0.000000e+00> : vector<16x220xf32>
    %93 = tpu.matmul %91, %92, %cst_133 {dimension_numbers = #tpu.dot_dimension_numbers<[1], [0], [0], [1], [0, 0, 1, 1], [], []>} : vector<16x288xf32>, vector<288x220xf32>, vector<16x220xf32> -> vector<16x220xf32>
    %c1_134 = arith.constant 1 : index
    %c0_135 = arith.constant 0 : index
    %c0_136 = arith.constant 0 : index
    %94 = vector.load %arg4[%c1_134, %c0_135, %c0_136] : memref<4x16x1xf32, #tpu.memory_space<vmem>>, vector<1x16x1xf32>
    %95 = vector.shape_cast %94 : vector<1x16x1xf32> to vector<16x1xf32>
    %96 = vector.broadcast %95 : vector<16x1xf32> to vector<16x220xf32>
    %97 = arith.addf %93, %96 : vector<16x220xf32>
    %cst_137 = arith.constant 0.000000e+00 : f32
    %98 = vector.broadcast %cst_137 : f32 to vector<16x220xf32>
    %99 = arith.maximumf %97, %98 : vector<16x220xf32>
    %c0_138 = arith.constant 0 : index
    %c0_139 = arith.constant 0 : index
    %100 = vector.load %arg2[%c0_138, %c0_139] : memref<1x286xf32, #tpu.memory_space<vmem>>, vector<1x220xf32>
    %101 = vector.broadcast %100 : vector<1x220xf32> to vector<16x220xf32>
    %102 = arith.mulf %99, %101 : vector<16x220xf32>
    %cst_140 = arith.constant 0.000000e+00 : f32
    %103 = vector.broadcast %cst_140 : f32 to vector<16x23xf32>
    %c0_141 = arith.constant 0 : index
    %c0_142 = arith.constant 0 : index
    %104 = vector.load %arg10[%c0_141, %c0_142] : memref<16x400xf32, #tpu.memory_space<vmem>>, vector<16x23xf32>
    tpu.vector_store %arg10[%c0_141, %c0_142], %103 {strides = array<i32>} : memref<16x400xf32, #tpu.memory_space<vmem>>, vector<16x23xf32>,
    %c0_143 = arith.constant 0 : index
    %c23_144 = arith.constant 23 : index
    %105 = vector.load %arg10[%c0_143, %c23_144] : memref<16x400xf32, #tpu.memory_space<vmem>>, vector<16x220xf32>
    tpu.vector_store %arg10[%c0_143, %c23_144], %102 {strides = array<i32>} : memref<16x400xf32, #tpu.memory_space<vmem>>, vector<16x220xf32>,
    %cst_145 = arith.constant 0.000000e+00 : f32
    %106 = vector.broadcast %cst_145 : f32 to vector<16x23xf32>
    %c0_146 = arith.constant 0 : index
    %c243 = arith.constant 243 : index
    %107 = vector.load %arg10[%c0_146, %c243] : memref<16x400xf32, #tpu.memory_space<vmem>>, vector<16x23xf32>
    tpu.vector_store %arg10[%c0_146, %c243], %106 {strides = array<i32>} : memref<16x400xf32, #tpu.memory_space<vmem>>, vector<16x23xf32>,
    %c0_147 = arith.constant 0 : index
    %c0_148 = arith.constant 0 : index
    %108 = vector.load %arg10[%c0_147, %c0_148] : memref<16x400xf32, #tpu.memory_space<vmem>>, vector<16x154xf32>
    %c0_149 = arith.constant 0 : index
    %c0_150 = arith.constant 0 : index
    %109 = vector.load %arg11[%c0_149, %c0_150] : memref<288x286xf32, #tpu.memory_space<vmem>>, vector<16x154xf32>
    tpu.vector_store %arg11[%c0_149, %c0_150], %108 {strides = array<i32>} : memref<288x286xf32, #tpu.memory_space<vmem>>, vector<16x154xf32>,
    %c0_151 = arith.constant 0 : index
    %c1_152 = arith.constant 1 : index
    %110 = vector.load %arg10[%c0_151, %c1_152] : memref<16x400xf32, #tpu.memory_space<vmem>>, vector<16x154xf32>
    %c16_153 = arith.constant 16 : index
    %c0_154 = arith.constant 0 : index
    %111 = vector.load %arg11[%c16_153, %c0_154] : memref<288x286xf32, #tpu.memory_space<vmem>>, vector<16x154xf32>
    tpu.vector_store %arg11[%c16_153, %c0_154], %110 {strides = array<i32>} : memref<288x286xf32, #tpu.memory_space<vmem>>, vector<16x154xf32>,
    %c0_155 = arith.constant 0 : index
    %c2_156 = arith.constant 2 : index
    %112 = vector.load %arg10[%c0_155, %c2_156] : memref<16x400xf32, #tpu.memory_space<vmem>>, vector<16x154xf32>
    %c32_157 = arith.constant 32 : index
    %c0_158 = arith.constant 0 : index
    %113 = vector.load %arg11[%c32_157, %c0_158] : memref<288x286xf32, #tpu.memory_space<vmem>>, vector<16x154xf32>
    tpu.vector_store %arg11[%c32_157, %c0_158], %112 {strides = array<i32>} : memref<288x286xf32, #tpu.memory_space<vmem>>, vector<16x154xf32>,
    %c0_159 = arith.constant 0 : index
    %c22_160 = arith.constant 22 : index
    %114 = vector.load %arg10[%c0_159, %c22_160] : memref<16x400xf32, #tpu.memory_space<vmem>>, vector<16x154xf32>
    %c48_161 = arith.constant 48 : index
    %c0_162 = arith.constant 0 : index
    %115 = vector.load %arg11[%c48_161, %c0_162] : memref<288x286xf32, #tpu.memory_space<vmem>>, vector<16x154xf32>
    tpu.vector_store %arg11[%c48_161, %c0_162], %114 {strides = array<i32>} : memref<288x286xf32, #tpu.memory_space<vmem>>, vector<16x154xf32>,
    %c0_163 = arith.constant 0 : index
    %c23_164 = arith.constant 23 : index
    %116 = vector.load %arg10[%c0_163, %c23_164] : memref<16x400xf32, #tpu.memory_space<vmem>>, vector<16x154xf32>
    %c64_165 = arith.constant 64 : index
    %c0_166 = arith.constant 0 : index
    %117 = vector.load %arg11[%c64_165, %c0_166] : memref<288x286xf32, #tpu.memory_space<vmem>>, vector<16x154xf32>
    tpu.vector_store %arg11[%c64_165, %c0_166], %116 {strides = array<i32>} : memref<288x286xf32, #tpu.memory_space<vmem>>, vector<16x154xf32>,
    %c0_167 = arith.constant 0 : index
    %c24_168 = arith.constant 24 : index
    %118 = vector.load %arg10[%c0_167, %c24_168] : memref<16x400xf32, #tpu.memory_space<vmem>>, vector<16x154xf32>
    %c80_169 = arith.constant 80 : index
    %c0_170 = arith.constant 0 : index
    %119 = vector.load %arg11[%c80_169, %c0_170] : memref<288x286xf32, #tpu.memory_space<vmem>>, vector<16x154xf32>
    tpu.vector_store %arg11[%c80_169, %c0_170], %118 {strides = array<i32>} : memref<288x286xf32, #tpu.memory_space<vmem>>, vector<16x154xf32>,
    %c0_171 = arith.constant 0 : index
    %c44_172 = arith.constant 44 : index
    %120 = vector.load %arg10[%c0_171, %c44_172] : memref<16x400xf32, #tpu.memory_space<vmem>>, vector<16x154xf32>
    %c96_173 = arith.constant 96 : index
    %c0_174 = arith.constant 0 : index
    %121 = vector.load %arg11[%c96_173, %c0_174] : memref<288x286xf32, #tpu.memory_space<vmem>>, vector<16x154xf32>
    tpu.vector_store %arg11[%c96_173, %c0_174], %120 {strides = array<i32>} : memref<288x286xf32, #tpu.memory_space<vmem>>, vector<16x154xf32>,
    %c0_175 = arith.constant 0 : index
    %c45_176 = arith.constant 45 : index
    %122 = vector.load %arg10[%c0_175, %c45_176] : memref<16x400xf32, #tpu.memory_space<vmem>>, vector<16x154xf32>
    %c112_177 = arith.constant 112 : index
    %c0_178 = arith.constant 0 : index
    %123 = vector.load %arg11[%c112_177, %c0_178] : memref<288x286xf32, #tpu.memory_space<vmem>>, vector<16x154xf32>
    tpu.vector_store %arg11[%c112_177, %c0_178], %122 {strides = array<i32>} : memref<288x286xf32, #tpu.memory_space<vmem>>, vector<16x154xf32>,
    %c0_179 = arith.constant 0 : index
    %c46_180 = arith.constant 46 : index
    %124 = vector.load %arg10[%c0_179, %c46_180] : memref<16x400xf32, #tpu.memory_space<vmem>>, vector<16x154xf32>
    %c128_181 = arith.constant 128 : index
    %c0_182 = arith.constant 0 : index
    %125 = vector.load %arg11[%c128_181, %c0_182] : memref<288x286xf32, #tpu.memory_space<vmem>>, vector<16x154xf32>
    tpu.vector_store %arg11[%c128_181, %c0_182], %124 {strides = array<i32>} : memref<288x286xf32, #tpu.memory_space<vmem>>, vector<16x154xf32>,
    %c0_183 = arith.constant 0 : index
    %c66_184 = arith.constant 66 : index
    %126 = vector.load %arg10[%c0_183, %c66_184] : memref<16x400xf32, #tpu.memory_space<vmem>>, vector<16x154xf32>
    %c144_185 = arith.constant 144 : index
    %c0_186 = arith.constant 0 : index
    %127 = vector.load %arg11[%c144_185, %c0_186] : memref<288x286xf32, #tpu.memory_space<vmem>>, vector<16x154xf32>
    tpu.vector_store %arg11[%c144_185, %c0_186], %126 {strides = array<i32>} : memref<288x286xf32, #tpu.memory_space<vmem>>, vector<16x154xf32>,
    %c0_187 = arith.constant 0 : index
    %c67_188 = arith.constant 67 : index
    %128 = vector.load %arg10[%c0_187, %c67_188] : memref<16x400xf32, #tpu.memory_space<vmem>>, vector<16x154xf32>
    %c160_189 = arith.constant 160 : index
    %c0_190 = arith.constant 0 : index
    %129 = vector.load %arg11[%c160_189, %c0_190] : memref<288x286xf32, #tpu.memory_space<vmem>>, vector<16x154xf32>
    tpu.vector_store %arg11[%c160_189, %c0_190], %128 {strides = array<i32>} : memref<288x286xf32, #tpu.memory_space<vmem>>, vector<16x154xf32>,
    %c0_191 = arith.constant 0 : index
    %c68_192 = arith.constant 68 : index
    %130 = vector.load %arg10[%c0_191, %c68_192] : memref<16x400xf32, #tpu.memory_space<vmem>>, vector<16x154xf32>
    %c176_193 = arith.constant 176 : index
    %c0_194 = arith.constant 0 : index
    %131 = vector.load %arg11[%c176_193, %c0_194] : memref<288x286xf32, #tpu.memory_space<vmem>>, vector<16x154xf32>
    tpu.vector_store %arg11[%c176_193, %c0_194], %130 {strides = array<i32>} : memref<288x286xf32, #tpu.memory_space<vmem>>, vector<16x154xf32>,
    %c0_195 = arith.constant 0 : index
    %c88_196 = arith.constant 88 : index
    %132 = vector.load %arg10[%c0_195, %c88_196] : memref<16x400xf32, #tpu.memory_space<vmem>>, vector<16x154xf32>
    %c192_197 = arith.constant 192 : index
    %c0_198 = arith.constant 0 : index
    %133 = vector.load %arg11[%c192_197, %c0_198] : memref<288x286xf32, #tpu.memory_space<vmem>>, vector<16x154xf32>
    tpu.vector_store %arg11[%c192_197, %c0_198], %132 {strides = array<i32>} : memref<288x286xf32, #tpu.memory_space<vmem>>, vector<16x154xf32>,
    %c0_199 = arith.constant 0 : index
    %c89_200 = arith.constant 89 : index
    %134 = vector.load %arg10[%c0_199, %c89_200] : memref<16x400xf32, #tpu.memory_space<vmem>>, vector<16x154xf32>
    %c208_201 = arith.constant 208 : index
    %c0_202 = arith.constant 0 : index
    %135 = vector.load %arg11[%c208_201, %c0_202] : memref<288x286xf32, #tpu.memory_space<vmem>>, vector<16x154xf32>
    tpu.vector_store %arg11[%c208_201, %c0_202], %134 {strides = array<i32>} : memref<288x286xf32, #tpu.memory_space<vmem>>, vector<16x154xf32>,
    %c0_203 = arith.constant 0 : index
    %c90_204 = arith.constant 90 : index
    %136 = vector.load %arg10[%c0_203, %c90_204] : memref<16x400xf32, #tpu.memory_space<vmem>>, vector<16x154xf32>
    %c224_205 = arith.constant 224 : index
    %c0_206 = arith.constant 0 : index
    %137 = vector.load %arg11[%c224_205, %c0_206] : memref<288x286xf32, #tpu.memory_space<vmem>>, vector<16x154xf32>
    tpu.vector_store %arg11[%c224_205, %c0_206], %136 {strides = array<i32>} : memref<288x286xf32, #tpu.memory_space<vmem>>, vector<16x154xf32>,
    %c0_207 = arith.constant 0 : index
    %c110_208 = arith.constant 110 : index
    %138 = vector.load %arg10[%c0_207, %c110_208] : memref<16x400xf32, #tpu.memory_space<vmem>>, vector<16x154xf32>
    %c240_209 = arith.constant 240 : index
    %c0_210 = arith.constant 0 : index
    %139 = vector.load %arg11[%c240_209, %c0_210] : memref<288x286xf32, #tpu.memory_space<vmem>>, vector<16x154xf32>
    tpu.vector_store %arg11[%c240_209, %c0_210], %138 {strides = array<i32>} : memref<288x286xf32, #tpu.memory_space<vmem>>, vector<16x154xf32>,
    %c0_211 = arith.constant 0 : index
    %c111_212 = arith.constant 111 : index
    %140 = vector.load %arg10[%c0_211, %c111_212] : memref<16x400xf32, #tpu.memory_space<vmem>>, vector<16x154xf32>
    %c256_213 = arith.constant 256 : index
    %c0_214 = arith.constant 0 : index
    %141 = vector.load %arg11[%c256_213, %c0_214] : memref<288x286xf32, #tpu.memory_space<vmem>>, vector<16x154xf32>
    tpu.vector_store %arg11[%c256_213, %c0_214], %140 {strides = array<i32>} : memref<288x286xf32, #tpu.memory_space<vmem>>, vector<16x154xf32>,
    %c0_215 = arith.constant 0 : index
    %c112_216 = arith.constant 112 : index
    %142 = vector.load %arg10[%c0_215, %c112_216] : memref<16x400xf32, #tpu.memory_space<vmem>>, vector<16x154xf32>
    %c272_217 = arith.constant 272 : index
    %c0_218 = arith.constant 0 : index
    %143 = vector.load %arg11[%c272_217, %c0_218] : memref<288x286xf32, #tpu.memory_space<vmem>>, vector<16x154xf32>
    tpu.vector_store %arg11[%c272_217, %c0_218], %142 {strides = array<i32>} : memref<288x286xf32, #tpu.memory_space<vmem>>, vector<16x154xf32>,
    %c2_219 = arith.constant 2 : index
    %c0_220 = arith.constant 0 : index
    %c0_221 = arith.constant 0 : index
    %144 = vector.load %arg3[%c2_219, %c0_220, %c0_221] : memref<4x16x288xf32, #tpu.memory_space<vmem>>, vector<1x16x288xf32>
    %145 = vector.shape_cast %144 : vector<1x16x288xf32> to vector<16x288xf32>
    %c0_222 = arith.constant 0 : index
    %c0_223 = arith.constant 0 : index
    %146 = vector.load %arg11[%c0_222, %c0_223] : memref<288x286xf32, #tpu.memory_space<vmem>>, vector<288x154xf32>
    %cst_224 = arith.constant dense<0.000000e+00> : vector<16x154xf32>
    %147 = tpu.matmul %145, %146, %cst_224 {dimension_numbers = #tpu.dot_dimension_numbers<[1], [0], [0], [1], [0, 0, 1, 1], [], []>} : vector<16x288xf32>, vector<288x154xf32>, vector<16x154xf32> -> vector<16x154xf32>
    %c2_225 = arith.constant 2 : index
    %c0_226 = arith.constant 0 : index
    %c0_227 = arith.constant 0 : index
    %148 = vector.load %arg4[%c2_225, %c0_226, %c0_227] : memref<4x16x1xf32, #tpu.memory_space<vmem>>, vector<1x16x1xf32>
    %149 = vector.shape_cast %148 : vector<1x16x1xf32> to vector<16x1xf32>
    %150 = vector.broadcast %149 : vector<16x1xf32> to vector<16x154xf32>
    %151 = arith.addf %147, %150 : vector<16x154xf32>
    %cst_228 = arith.constant 0.000000e+00 : f32
    %152 = vector.broadcast %cst_228 : f32 to vector<16x154xf32>
    %153 = arith.maximumf %151, %152 : vector<16x154xf32>
    %c0_229 = arith.constant 0 : index
    %c0_230 = arith.constant 0 : index
    %154 = vector.load %arg2[%c0_229, %c0_230] : memref<1x286xf32, #tpu.memory_space<vmem>>, vector<1x154xf32>
    %155 = vector.broadcast %154 : vector<1x154xf32> to vector<16x154xf32>
    %156 = arith.mulf %153, %155 : vector<16x154xf32>
    %cst_231 = arith.constant 0.000000e+00 : f32
    %157 = vector.broadcast %cst_231 : f32 to vector<16x23xf32>
    %c0_232 = arith.constant 0 : index
    %c0_233 = arith.constant 0 : index
    %158 = vector.load %arg9[%c0_232, %c0_233] : memref<16x400xf32, #tpu.memory_space<vmem>>, vector<16x23xf32>
    tpu.vector_store %arg9[%c0_232, %c0_233], %157 {strides = array<i32>} : memref<16x400xf32, #tpu.memory_space<vmem>>, vector<16x23xf32>,
    %c0_234 = arith.constant 0 : index
    %c23_235 = arith.constant 23 : index
    %159 = vector.load %arg9[%c0_234, %c23_235] : memref<16x400xf32, #tpu.memory_space<vmem>>, vector<16x154xf32>
    tpu.vector_store %arg9[%c0_234, %c23_235], %156 {strides = array<i32>} : memref<16x400xf32, #tpu.memory_space<vmem>>, vector<16x154xf32>,
    %cst_236 = arith.constant 0.000000e+00 : f32
    %160 = vector.broadcast %cst_236 : f32 to vector<16x23xf32>
    %c0_237 = arith.constant 0 : index
    %c177 = arith.constant 177 : index
    %161 = vector.load %arg9[%c0_237, %c177] : memref<16x400xf32, #tpu.memory_space<vmem>>, vector<16x23xf32>
    tpu.vector_store %arg9[%c0_237, %c177], %160 {strides = array<i32>} : memref<16x400xf32, #tpu.memory_space<vmem>>, vector<16x23xf32>,
    %c0_238 = arith.constant 0 : index
    %c0_239 = arith.constant 0 : index
    %162 = vector.load %arg9[%c0_238, %c0_239] : memref<16x400xf32, #tpu.memory_space<vmem>>, vector<16x88xf32>
    %c0_240 = arith.constant 0 : index
    %c0_241 = arith.constant 0 : index
    %163 = vector.load %arg11[%c0_240, %c0_241] : memref<288x286xf32, #tpu.memory_space<vmem>>, vector<16x88xf32>
    tpu.vector_store %arg11[%c0_240, %c0_241], %162 {strides = array<i32>} : memref<288x286xf32, #tpu.memory_space<vmem>>, vector<16x88xf32>,
    %c0_242 = arith.constant 0 : index
    %c1_243 = arith.constant 1 : index
    %164 = vector.load %arg9[%c0_242, %c1_243] : memref<16x400xf32, #tpu.memory_space<vmem>>, vector<16x88xf32>
    %c16_244 = arith.constant 16 : index
    %c0_245 = arith.constant 0 : index
    %165 = vector.load %arg11[%c16_244, %c0_245] : memref<288x286xf32, #tpu.memory_space<vmem>>, vector<16x88xf32>
    tpu.vector_store %arg11[%c16_244, %c0_245], %164 {strides = array<i32>} : memref<288x286xf32, #tpu.memory_space<vmem>>, vector<16x88xf32>,
    %c0_246 = arith.constant 0 : index
    %c2_247 = arith.constant 2 : index
    %166 = vector.load %arg9[%c0_246, %c2_247] : memref<16x400xf32, #tpu.memory_space<vmem>>, vector<16x88xf32>
    %c32_248 = arith.constant 32 : index
    %c0_249 = arith.constant 0 : index
    %167 = vector.load %arg11[%c32_248, %c0_249] : memref<288x286xf32, #tpu.memory_space<vmem>>, vector<16x88xf32>
    tpu.vector_store %arg11[%c32_248, %c0_249], %166 {strides = array<i32>} : memref<288x286xf32, #tpu.memory_space<vmem>>, vector<16x88xf32>,
    %c0_250 = arith.constant 0 : index
    %c22_251 = arith.constant 22 : index
    %168 = vector.load %arg9[%c0_250, %c22_251] : memref<16x400xf32, #tpu.memory_space<vmem>>, vector<16x88xf32>
    %c48_252 = arith.constant 48 : index
    %c0_253 = arith.constant 0 : index
    %169 = vector.load %arg11[%c48_252, %c0_253] : memref<288x286xf32, #tpu.memory_space<vmem>>, vector<16x88xf32>
    tpu.vector_store %arg11[%c48_252, %c0_253], %168 {strides = array<i32>} : memref<288x286xf32, #tpu.memory_space<vmem>>, vector<16x88xf32>,
    %c0_254 = arith.constant 0 : index
    %c23_255 = arith.constant 23 : index
    %170 = vector.load %arg9[%c0_254, %c23_255] : memref<16x400xf32, #tpu.memory_space<vmem>>, vector<16x88xf32>
    %c64_256 = arith.constant 64 : index
    %c0_257 = arith.constant 0 : index
    %171 = vector.load %arg11[%c64_256, %c0_257] : memref<288x286xf32, #tpu.memory_space<vmem>>, vector<16x88xf32>
    tpu.vector_store %arg11[%c64_256, %c0_257], %170 {strides = array<i32>} : memref<288x286xf32, #tpu.memory_space<vmem>>, vector<16x88xf32>,
    %c0_258 = arith.constant 0 : index
    %c24_259 = arith.constant 24 : index
    %172 = vector.load %arg9[%c0_258, %c24_259] : memref<16x400xf32, #tpu.memory_space<vmem>>, vector<16x88xf32>
    %c80_260 = arith.constant 80 : index
    %c0_261 = arith.constant 0 : index
    %173 = vector.load %arg11[%c80_260, %c0_261] : memref<288x286xf32, #tpu.memory_space<vmem>>, vector<16x88xf32>
    tpu.vector_store %arg11[%c80_260, %c0_261], %172 {strides = array<i32>} : memref<288x286xf32, #tpu.memory_space<vmem>>, vector<16x88xf32>,
    %c0_262 = arith.constant 0 : index
    %c44_263 = arith.constant 44 : index
    %174 = vector.load %arg9[%c0_262, %c44_263] : memref<16x400xf32, #tpu.memory_space<vmem>>, vector<16x88xf32>
    %c96_264 = arith.constant 96 : index
    %c0_265 = arith.constant 0 : index
    %175 = vector.load %arg11[%c96_264, %c0_265] : memref<288x286xf32, #tpu.memory_space<vmem>>, vector<16x88xf32>
    tpu.vector_store %arg11[%c96_264, %c0_265], %174 {strides = array<i32>} : memref<288x286xf32, #tpu.memory_space<vmem>>, vector<16x88xf32>,
    %c0_266 = arith.constant 0 : index
    %c45_267 = arith.constant 45 : index
    %176 = vector.load %arg9[%c0_266, %c45_267] : memref<16x400xf32, #tpu.memory_space<vmem>>, vector<16x88xf32>
    %c112_268 = arith.constant 112 : index
    %c0_269 = arith.constant 0 : index
    %177 = vector.load %arg11[%c112_268, %c0_269] : memref<288x286xf32, #tpu.memory_space<vmem>>, vector<16x88xf32>
    tpu.vector_store %arg11[%c112_268, %c0_269], %176 {strides = array<i32>} : memref<288x286xf32, #tpu.memory_space<vmem>>, vector<16x88xf32>,
    %c0_270 = arith.constant 0 : index
    %c46_271 = arith.constant 46 : index
    %178 = vector.load %arg9[%c0_270, %c46_271] : memref<16x400xf32, #tpu.memory_space<vmem>>, vector<16x88xf32>
    %c128_272 = arith.constant 128 : index
    %c0_273 = arith.constant 0 : index
    %179 = vector.load %arg11[%c128_272, %c0_273] : memref<288x286xf32, #tpu.memory_space<vmem>>, vector<16x88xf32>
    tpu.vector_store %arg11[%c128_272, %c0_273], %178 {strides = array<i32>} : memref<288x286xf32, #tpu.memory_space<vmem>>, vector<16x88xf32>,
    %c0_274 = arith.constant 0 : index
    %c66_275 = arith.constant 66 : index
    %180 = vector.load %arg9[%c0_274, %c66_275] : memref<16x400xf32, #tpu.memory_space<vmem>>, vector<16x88xf32>
    %c144_276 = arith.constant 144 : index
    %c0_277 = arith.constant 0 : index
    %181 = vector.load %arg11[%c144_276, %c0_277] : memref<288x286xf32, #tpu.memory_space<vmem>>, vector<16x88xf32>
    tpu.vector_store %arg11[%c144_276, %c0_277], %180 {strides = array<i32>} : memref<288x286xf32, #tpu.memory_space<vmem>>, vector<16x88xf32>,
    %c0_278 = arith.constant 0 : index
    %c67_279 = arith.constant 67 : index
    %182 = vector.load %arg9[%c0_278, %c67_279] : memref<16x400xf32, #tpu.memory_space<vmem>>, vector<16x88xf32>
    %c160_280 = arith.constant 160 : index
    %c0_281 = arith.constant 0 : index
    %183 = vector.load %arg11[%c160_280, %c0_281] : memref<288x286xf32, #tpu.memory_space<vmem>>, vector<16x88xf32>
    tpu.vector_store %arg11[%c160_280, %c0_281], %182 {strides = array<i32>} : memref<288x286xf32, #tpu.memory_space<vmem>>, vector<16x88xf32>,
    %c0_282 = arith.constant 0 : index
    %c68_283 = arith.constant 68 : index
    %184 = vector.load %arg9[%c0_282, %c68_283] : memref<16x400xf32, #tpu.memory_space<vmem>>, vector<16x88xf32>
    %c176_284 = arith.constant 176 : index
    %c0_285 = arith.constant 0 : index
    %185 = vector.load %arg11[%c176_284, %c0_285] : memref<288x286xf32, #tpu.memory_space<vmem>>, vector<16x88xf32>
    tpu.vector_store %arg11[%c176_284, %c0_285], %184 {strides = array<i32>} : memref<288x286xf32, #tpu.memory_space<vmem>>, vector<16x88xf32>,
    %c0_286 = arith.constant 0 : index
    %c88_287 = arith.constant 88 : index
    %186 = vector.load %arg9[%c0_286, %c88_287] : memref<16x400xf32, #tpu.memory_space<vmem>>, vector<16x88xf32>
    %c192_288 = arith.constant 192 : index
    %c0_289 = arith.constant 0 : index
    %187 = vector.load %arg11[%c192_288, %c0_289] : memref<288x286xf32, #tpu.memory_space<vmem>>, vector<16x88xf32>
    tpu.vector_store %arg11[%c192_288, %c0_289], %186 {strides = array<i32>} : memref<288x286xf32, #tpu.memory_space<vmem>>, vector<16x88xf32>,
    %c0_290 = arith.constant 0 : index
    %c89_291 = arith.constant 89 : index
    %188 = vector.load %arg9[%c0_290, %c89_291] : memref<16x400xf32, #tpu.memory_space<vmem>>, vector<16x88xf32>
    %c208_292 = arith.constant 208 : index
    %c0_293 = arith.constant 0 : index
    %189 = vector.load %arg11[%c208_292, %c0_293] : memref<288x286xf32, #tpu.memory_space<vmem>>, vector<16x88xf32>
    tpu.vector_store %arg11[%c208_292, %c0_293], %188 {strides = array<i32>} : memref<288x286xf32, #tpu.memory_space<vmem>>, vector<16x88xf32>,
    %c0_294 = arith.constant 0 : index
    %c90_295 = arith.constant 90 : index
    %190 = vector.load %arg9[%c0_294, %c90_295] : memref<16x400xf32, #tpu.memory_space<vmem>>, vector<16x88xf32>
    %c224_296 = arith.constant 224 : index
    %c0_297 = arith.constant 0 : index
    %191 = vector.load %arg11[%c224_296, %c0_297] : memref<288x286xf32, #tpu.memory_space<vmem>>, vector<16x88xf32>
    tpu.vector_store %arg11[%c224_296, %c0_297], %190 {strides = array<i32>} : memref<288x286xf32, #tpu.memory_space<vmem>>, vector<16x88xf32>,
    %c0_298 = arith.constant 0 : index
    %c110_299 = arith.constant 110 : index
    %192 = vector.load %arg9[%c0_298, %c110_299] : memref<16x400xf32, #tpu.memory_space<vmem>>, vector<16x88xf32>
    %c240_300 = arith.constant 240 : index
    %c0_301 = arith.constant 0 : index
    %193 = vector.load %arg11[%c240_300, %c0_301] : memref<288x286xf32, #tpu.memory_space<vmem>>, vector<16x88xf32>
    tpu.vector_store %arg11[%c240_300, %c0_301], %192 {strides = array<i32>} : memref<288x286xf32, #tpu.memory_space<vmem>>, vector<16x88xf32>,
    %c0_302 = arith.constant 0 : index
    %c111_303 = arith.constant 111 : index
    %194 = vector.load %arg9[%c0_302, %c111_303] : memref<16x400xf32, #tpu.memory_space<vmem>>, vector<16x88xf32>
    %c256_304 = arith.constant 256 : index
    %c0_305 = arith.constant 0 : index
    %195 = vector.load %arg11[%c256_304, %c0_305] : memref<288x286xf32, #tpu.memory_space<vmem>>, vector<16x88xf32>
    tpu.vector_store %arg11[%c256_304, %c0_305], %194 {strides = array<i32>} : memref<288x286xf32, #tpu.memory_space<vmem>>, vector<16x88xf32>,
    %c0_306 = arith.constant 0 : index
    %c112_307 = arith.constant 112 : index
    %196 = vector.load %arg9[%c0_306, %c112_307] : memref<16x400xf32, #tpu.memory_space<vmem>>, vector<16x88xf32>
    %c272_308 = arith.constant 272 : index
    %c0_309 = arith.constant 0 : index
    %197 = vector.load %arg11[%c272_308, %c0_309] : memref<288x286xf32, #tpu.memory_space<vmem>>, vector<16x88xf32>
    tpu.vector_store %arg11[%c272_308, %c0_309], %196 {strides = array<i32>} : memref<288x286xf32, #tpu.memory_space<vmem>>, vector<16x88xf32>,
    %c3 = arith.constant 3 : index
    %c0_310 = arith.constant 0 : index
    %c0_311 = arith.constant 0 : index
    %198 = vector.load %arg3[%c3, %c0_310, %c0_311] : memref<4x16x288xf32, #tpu.memory_space<vmem>>, vector<1x16x288xf32>
    %199 = vector.shape_cast %198 : vector<1x16x288xf32> to vector<16x288xf32>
    %c0_312 = arith.constant 0 : index
    %c0_313 = arith.constant 0 : index
    %200 = vector.load %arg11[%c0_312, %c0_313] : memref<288x286xf32, #tpu.memory_space<vmem>>, vector<288x88xf32>
    %cst_314 = arith.constant dense<0.000000e+00> : vector<16x88xf32>
    %201 = tpu.matmul %199, %200, %cst_314 {dimension_numbers = #tpu.dot_dimension_numbers<[1], [0], [0], [1], [0, 0, 1, 1], [], []>} : vector<16x288xf32>, vector<288x88xf32>, vector<16x88xf32> -> vector<16x88xf32>
    %c3_315 = arith.constant 3 : index
    %c0_316 = arith.constant 0 : index
    %c0_317 = arith.constant 0 : index
    %202 = vector.load %arg4[%c3_315, %c0_316, %c0_317] : memref<4x16x1xf32, #tpu.memory_space<vmem>>, vector<1x16x1xf32>
    %203 = vector.shape_cast %202 : vector<1x16x1xf32> to vector<16x1xf32>
    %204 = vector.broadcast %203 : vector<16x1xf32> to vector<16x88xf32>
    %205 = arith.addf %201, %204 : vector<16x88xf32>
    %cst_318 = arith.constant 0.000000e+00 : f32
    %206 = vector.broadcast %cst_318 : f32 to vector<16x88xf32>
    %207 = arith.maximumf %205, %206 : vector<16x88xf32>
    %c0_319 = arith.constant 0 : index
    %c0_320 = arith.constant 0 : index
    %208 = vector.load %arg2[%c0_319, %c0_320] : memref<1x286xf32, #tpu.memory_space<vmem>>, vector<1x88xf32>
    %209 = vector.broadcast %208 : vector<1x88xf32> to vector<16x88xf32>
    %210 = arith.mulf %207, %209 : vector<16x88xf32>
    %211 = vector.extract_strided_slice %210 {offsets = [0, 0], sizes = [4, 88], strides = [1, 1]} : vector<16x88xf32> to vector<4x88xf32>
    %c0_321 = arith.constant 0 : index
    %c0_322 = arith.constant 0 : index
    %c0_323 = arith.constant 0 : index
    %212 = vector.load %arg5[%c0_321, %c0_322, %c0_323] : memref<4x88x128xf32, #tpu.memory_space<vmem>>, vector<1x88x128xf32>
    %213 = vector.shape_cast %212 : vector<1x88x128xf32> to vector<88x128xf32>
    %cst_324 = arith.constant dense<0.000000e+00> : vector<4x128xf32>
    %214 = tpu.matmul %211, %213, %cst_324 {dimension_numbers = #tpu.dot_dimension_numbers<[1], [0], [0], [1], [0, 0, 1, 1], [], []>} : vector<4x88xf32>, vector<88x128xf32>, vector<4x128xf32> -> vector<4x128xf32>
    %215 = vector.extract_strided_slice %210 {offsets = [4, 0], sizes = [4, 88], strides = [1, 1]} : vector<16x88xf32> to vector<4x88xf32>
    %c1_325 = arith.constant 1 : index
    %c0_326 = arith.constant 0 : index
    %c0_327 = arith.constant 0 : index
    %216 = vector.load %arg5[%c1_325, %c0_326, %c0_327] : memref<4x88x128xf32, #tpu.memory_space<vmem>>, vector<1x88x128xf32>
    %217 = vector.shape_cast %216 : vector<1x88x128xf32> to vector<88x128xf32>
    %cst_328 = arith.constant dense<0.000000e+00> : vector<4x128xf32>
    %218 = tpu.matmul %215, %217, %cst_328 {dimension_numbers = #tpu.dot_dimension_numbers<[1], [0], [0], [1], [0, 0, 1, 1], [], []>} : vector<4x88xf32>, vector<88x128xf32>, vector<4x128xf32> -> vector<4x128xf32>
    %219 = arith.addf %214, %218 : vector<4x128xf32>
    %220 = vector.extract_strided_slice %210 {offsets = [8, 0], sizes = [4, 88], strides = [1, 1]} : vector<16x88xf32> to vector<4x88xf32>
    %c2_329 = arith.constant 2 : index
    %c0_330 = arith.constant 0 : index
    %c0_331 = arith.constant 0 : index
    %221 = vector.load %arg5[%c2_329, %c0_330, %c0_331] : memref<4x88x128xf32, #tpu.memory_space<vmem>>, vector<1x88x128xf32>
    %222 = vector.shape_cast %221 : vector<1x88x128xf32> to vector<88x128xf32>
    %cst_332 = arith.constant dense<0.000000e+00> : vector<4x128xf32>
    %223 = tpu.matmul %220, %222, %cst_332 {dimension_numbers = #tpu.dot_dimension_numbers<[1], [0], [0], [1], [0, 0, 1, 1], [], []>} : vector<4x88xf32>, vector<88x128xf32>, vector<4x128xf32> -> vector<4x128xf32>
    %224 = arith.addf %219, %223 : vector<4x128xf32>
    %225 = vector.extract_strided_slice %210 {offsets = [12, 0], sizes = [4, 88], strides = [1, 1]} : vector<16x88xf32> to vector<4x88xf32>
    %c3_333 = arith.constant 3 : index
    %c0_334 = arith.constant 0 : index
    %c0_335 = arith.constant 0 : index
    %226 = vector.load %arg5[%c3_333, %c0_334, %c0_335] : memref<4x88x128xf32, #tpu.memory_space<vmem>>, vector<1x88x128xf32>
    %227 = vector.shape_cast %226 : vector<1x88x128xf32> to vector<88x128xf32>
    %cst_336 = arith.constant dense<0.000000e+00> : vector<4x128xf32>
    %228 = tpu.matmul %225, %227, %cst_336 {dimension_numbers = #tpu.dot_dimension_numbers<[1], [0], [0], [1], [0, 0, 1, 1], [], []>} : vector<4x88xf32>, vector<88x128xf32>, vector<4x128xf32> -> vector<4x128xf32>
    %229 = arith.addf %224, %228 : vector<4x128xf32>
    %c32_337 = arith.constant 32 : index
    %c0_338 = arith.constant 0 : index
    %230 = vector.load %arg6[%c32_337, %c0_338] : memref<33x128xf32, #tpu.memory_space<vmem>>, vector<1x128xf32>
    %231 = vector.broadcast %230 : vector<1x128xf32> to vector<4x128xf32>
    %232 = arith.addf %229, %231 : vector<4x128xf32>
    %c0_339 = arith.constant 0 : index
    %c0_340 = arith.constant 0 : index
    %233 = vector.load %arg6[%c0_339, %c0_340] : memref<33x128xf32, #tpu.memory_space<vmem>>, vector<32x128xf32>
    %c0_341 = arith.constant 0 : index
    %c0_342 = arith.constant 0 : index
    %234 = vector.load %arg1[%c0_341, %c0_342] : memref<1x64xf32, #tpu.memory_space<vmem>>, vector<1x32xf32>
    %c0_343 = arith.constant 0 : index
    %c32_344 = arith.constant 32 : index
    %235 = vector.load %arg1[%c0_343, %c32_344] : memref<1x64xf32, #tpu.memory_space<vmem>>, vector<1x32xf32>
    %236 = vector.extract_strided_slice %232 {offsets = [0, 0], sizes = [1, 128], strides = [1, 1]} : vector<4x128xf32> to vector<1x128xf32>
    %cst_345 = arith.constant dense<0.000000e+00> : vector<1x128xf32>
    %237 = tpu.matmul %234, %233, %cst_345 {dimension_numbers = #tpu.dot_dimension_numbers<[1], [0], [0], [1], [0, 0, 1, 1], [], []>} : vector<1x32xf32>, vector<32x128xf32>, vector<1x128xf32> -> vector<1x128xf32>
    %238 = arith.addf %236, %237 : vector<1x128xf32>
    %239 = vector.extract_strided_slice %238 {offsets = [0, 0], sizes = [1, 32], strides = [1, 1]} : vector<1x128xf32> to vector<1x32xf32>
    %cst_346 = arith.constant 5.000000e-01 : f32
    %240 = vector.broadcast %cst_346 : f32 to vector<1x32xf32>
    %241 = arith.mulf %240, %239 : vector<1x32xf32>
    %242 = math.tanh %241 : vector<1x32xf32>
    %cst_347 = arith.constant 5.000000e-01 : f32
    %243 = vector.broadcast %cst_347 : f32 to vector<1x32xf32>
    %244 = arith.mulf %243, %242 : vector<1x32xf32>
    %cst_348 = arith.constant 5.000000e-01 : f32
    %245 = vector.broadcast %cst_348 : f32 to vector<1x32xf32>
    %246 = arith.addf %244, %245 : vector<1x32xf32>
    %247 = vector.extract_strided_slice %238 {offsets = [0, 32], sizes = [1, 32], strides = [1, 1]} : vector<1x128xf32> to vector<1x32xf32>
    %cst_349 = arith.constant 5.000000e-01 : f32
    %248 = vector.broadcast %cst_349 : f32 to vector<1x32xf32>
    %249 = arith.mulf %248, %247 : vector<1x32xf32>
    %250 = math.tanh %249 : vector<1x32xf32>
    %cst_350 = arith.constant 5.000000e-01 : f32
    %251 = vector.broadcast %cst_350 : f32 to vector<1x32xf32>
    %252 = arith.mulf %251, %250 : vector<1x32xf32>
    %cst_351 = arith.constant 5.000000e-01 : f32
    %253 = vector.broadcast %cst_351 : f32 to vector<1x32xf32>
    %254 = arith.addf %252, %253 : vector<1x32xf32>
    %255 = vector.extract_strided_slice %238 {offsets = [0, 64], sizes = [1, 32], strides = [1, 1]} : vector<1x128xf32> to vector<1x32xf32>
    %256 = math.tanh %255 : vector<1x32xf32>
    %257 = vector.extract_strided_slice %238 {offsets = [0, 96], sizes = [1, 32], strides = [1, 1]} : vector<1x128xf32> to vector<1x32xf32>
    %cst_352 = arith.constant 5.000000e-01 : f32
    %258 = vector.broadcast %cst_352 : f32 to vector<1x32xf32>
    %259 = arith.mulf %258, %257 : vector<1x32xf32>
    %260 = math.tanh %259 : vector<1x32xf32>
    %cst_353 = arith.constant 5.000000e-01 : f32
    %261 = vector.broadcast %cst_353 : f32 to vector<1x32xf32>
    %262 = arith.mulf %261, %260 : vector<1x32xf32>
    %cst_354 = arith.constant 5.000000e-01 : f32
    %263 = vector.broadcast %cst_354 : f32 to vector<1x32xf32>
    %264 = arith.addf %262, %263 : vector<1x32xf32>
    %265 = arith.mulf %254, %235 : vector<1x32xf32>
    %266 = arith.mulf %246, %256 : vector<1x32xf32>
    %267 = arith.addf %265, %266 : vector<1x32xf32>
    %268 = math.tanh %267 : vector<1x32xf32>
    %269 = arith.mulf %264, %268 : vector<1x32xf32>
    %270 = vector.extract_strided_slice %232 {offsets = [1, 0], sizes = [1, 128], strides = [1, 1]} : vector<4x128xf32> to vector<1x128xf32>
    %cst_355 = arith.constant dense<0.000000e+00> : vector<1x128xf32>
    %271 = tpu.matmul %269, %233, %cst_355 {dimension_numbers = #tpu.dot_dimension_numbers<[1], [0], [0], [1], [0, 0, 1, 1], [], []>} : vector<1x32xf32>, vector<32x128xf32>, vector<1x128xf32> -> vector<1x128xf32>
    %272 = arith.addf %270, %271 : vector<1x128xf32>
    %273 = vector.extract_strided_slice %272 {offsets = [0, 0], sizes = [1, 32], strides = [1, 1]} : vector<1x128xf32> to vector<1x32xf32>
    %cst_356 = arith.constant 5.000000e-01 : f32
    %274 = vector.broadcast %cst_356 : f32 to vector<1x32xf32>
    %275 = arith.mulf %274, %273 : vector<1x32xf32>
    %276 = math.tanh %275 : vector<1x32xf32>
    %cst_357 = arith.constant 5.000000e-01 : f32
    %277 = vector.broadcast %cst_357 : f32 to vector<1x32xf32>
    %278 = arith.mulf %277, %276 : vector<1x32xf32>
    %cst_358 = arith.constant 5.000000e-01 : f32
    %279 = vector.broadcast %cst_358 : f32 to vector<1x32xf32>
    %280 = arith.addf %278, %279 : vector<1x32xf32>
    %281 = vector.extract_strided_slice %272 {offsets = [0, 32], sizes = [1, 32], strides = [1, 1]} : vector<1x128xf32> to vector<1x32xf32>
    %cst_359 = arith.constant 5.000000e-01 : f32
    %282 = vector.broadcast %cst_359 : f32 to vector<1x32xf32>
    %283 = arith.mulf %282, %281 : vector<1x32xf32>
    %284 = math.tanh %283 : vector<1x32xf32>
    %cst_360 = arith.constant 5.000000e-01 : f32
    %285 = vector.broadcast %cst_360 : f32 to vector<1x32xf32>
    %286 = arith.mulf %285, %284 : vector<1x32xf32>
    %cst_361 = arith.constant 5.000000e-01 : f32
    %287 = vector.broadcast %cst_361 : f32 to vector<1x32xf32>
    %288 = arith.addf %286, %287 : vector<1x32xf32>
    %289 = vector.extract_strided_slice %272 {offsets = [0, 64], sizes = [1, 32], strides = [1, 1]} : vector<1x128xf32> to vector<1x32xf32>
    %290 = math.tanh %289 : vector<1x32xf32>
    %291 = vector.extract_strided_slice %272 {offsets = [0, 96], sizes = [1, 32], strides = [1, 1]} : vector<1x128xf32> to vector<1x32xf32>
    %cst_362 = arith.constant 5.000000e-01 : f32
    %292 = vector.broadcast %cst_362 : f32 to vector<1x32xf32>
    %293 = arith.mulf %292, %291 : vector<1x32xf32>
    %294 = math.tanh %293 : vector<1x32xf32>
    %cst_363 = arith.constant 5.000000e-01 : f32
    %295 = vector.broadcast %cst_363 : f32 to vector<1x32xf32>
    %296 = arith.mulf %295, %294 : vector<1x32xf32>
    %cst_364 = arith.constant 5.000000e-01 : f32
    %297 = vector.broadcast %cst_364 : f32 to vector<1x32xf32>
    %298 = arith.addf %296, %297 : vector<1x32xf32>
    %299 = arith.mulf %288, %267 : vector<1x32xf32>
    %300 = arith.mulf %280, %290 : vector<1x32xf32>
    %301 = arith.addf %299, %300 : vector<1x32xf32>
    %302 = math.tanh %301 : vector<1x32xf32>
    %303 = arith.mulf %298, %302 : vector<1x32xf32>
    %304 = vector.extract_strided_slice %232 {offsets = [2, 0], sizes = [1, 128], strides = [1, 1]} : vector<4x128xf32> to vector<1x128xf32>
    %cst_365 = arith.constant dense<0.000000e+00> : vector<1x128xf32>
    %305 = tpu.matmul %303, %233, %cst_365 {dimension_numbers = #tpu.dot_dimension_numbers<[1], [0], [0], [1], [0, 0, 1, 1], [], []>} : vector<1x32xf32>, vector<32x128xf32>, vector<1x128xf32> -> vector<1x128xf32>
    %306 = arith.addf %304, %305 : vector<1x128xf32>
    %307 = vector.extract_strided_slice %306 {offsets = [0, 0], sizes = [1, 32], strides = [1, 1]} : vector<1x128xf32> to vector<1x32xf32>
    %cst_366 = arith.constant 5.000000e-01 : f32
    %308 = vector.broadcast %cst_366 : f32 to vector<1x32xf32>
    %309 = arith.mulf %308, %307 : vector<1x32xf32>
    %310 = math.tanh %309 : vector<1x32xf32>
    %cst_367 = arith.constant 5.000000e-01 : f32
    %311 = vector.broadcast %cst_367 : f32 to vector<1x32xf32>
    %312 = arith.mulf %311, %310 : vector<1x32xf32>
    %cst_368 = arith.constant 5.000000e-01 : f32
    %313 = vector.broadcast %cst_368 : f32 to vector<1x32xf32>
    %314 = arith.addf %312, %313 : vector<1x32xf32>
    %315 = vector.extract_strided_slice %306 {offsets = [0, 32], sizes = [1, 32], strides = [1, 1]} : vector<1x128xf32> to vector<1x32xf32>
    %cst_369 = arith.constant 5.000000e-01 : f32
    %316 = vector.broadcast %cst_369 : f32 to vector<1x32xf32>
    %317 = arith.mulf %316, %315 : vector<1x32xf32>
    %318 = math.tanh %317 : vector<1x32xf32>
    %cst_370 = arith.constant 5.000000e-01 : f32
    %319 = vector.broadcast %cst_370 : f32 to vector<1x32xf32>
    %320 = arith.mulf %319, %318 : vector<1x32xf32>
    %cst_371 = arith.constant 5.000000e-01 : f32
    %321 = vector.broadcast %cst_371 : f32 to vector<1x32xf32>
    %322 = arith.addf %320, %321 : vector<1x32xf32>
    %323 = vector.extract_strided_slice %306 {offsets = [0, 64], sizes = [1, 32], strides = [1, 1]} : vector<1x128xf32> to vector<1x32xf32>
    %324 = math.tanh %323 : vector<1x32xf32>
    %325 = vector.extract_strided_slice %306 {offsets = [0, 96], sizes = [1, 32], strides = [1, 1]} : vector<1x128xf32> to vector<1x32xf32>
    %cst_372 = arith.constant 5.000000e-01 : f32
    %326 = vector.broadcast %cst_372 : f32 to vector<1x32xf32>
    %327 = arith.mulf %326, %325 : vector<1x32xf32>
    %328 = math.tanh %327 : vector<1x32xf32>
    %cst_373 = arith.constant 5.000000e-01 : f32
    %329 = vector.broadcast %cst_373 : f32 to vector<1x32xf32>
    %330 = arith.mulf %329, %328 : vector<1x32xf32>
    %cst_374 = arith.constant 5.000000e-01 : f32
    %331 = vector.broadcast %cst_374 : f32 to vector<1x32xf32>
    %332 = arith.addf %330, %331 : vector<1x32xf32>
    %333 = arith.mulf %322, %301 : vector<1x32xf32>
    %334 = arith.mulf %314, %324 : vector<1x32xf32>
    %335 = arith.addf %333, %334 : vector<1x32xf32>
    %336 = math.tanh %335 : vector<1x32xf32>
    %337 = arith.mulf %332, %336 : vector<1x32xf32>
    %338 = vector.extract_strided_slice %232 {offsets = [3, 0], sizes = [1, 128], strides = [1, 1]} : vector<4x128xf32> to vector<1x128xf32>
    %cst_375 = arith.constant dense<0.000000e+00> : vector<1x128xf32>
    %339 = tpu.matmul %337, %233, %cst_375 {dimension_numbers = #tpu.dot_dimension_numbers<[1], [0], [0], [1], [0, 0, 1, 1], [], []>} : vector<1x32xf32>, vector<32x128xf32>, vector<1x128xf32> -> vector<1x128xf32>
    %340 = arith.addf %338, %339 : vector<1x128xf32>
    %341 = vector.extract_strided_slice %340 {offsets = [0, 0], sizes = [1, 32], strides = [1, 1]} : vector<1x128xf32> to vector<1x32xf32>
    %cst_376 = arith.constant 5.000000e-01 : f32
    %342 = vector.broadcast %cst_376 : f32 to vector<1x32xf32>
    %343 = arith.mulf %342, %341 : vector<1x32xf32>
    %344 = math.tanh %343 : vector<1x32xf32>
    %cst_377 = arith.constant 5.000000e-01 : f32
    %345 = vector.broadcast %cst_377 : f32 to vector<1x32xf32>
    %346 = arith.mulf %345, %344 : vector<1x32xf32>
    %cst_378 = arith.constant 5.000000e-01 : f32
    %347 = vector.broadcast %cst_378 : f32 to vector<1x32xf32>
    %348 = arith.addf %346, %347 : vector<1x32xf32>
    %349 = vector.extract_strided_slice %340 {offsets = [0, 32], sizes = [1, 32], strides = [1, 1]} : vector<1x128xf32> to vector<1x32xf32>
    %cst_379 = arith.constant 5.000000e-01 : f32
    %350 = vector.broadcast %cst_379 : f32 to vector<1x32xf32>
    %351 = arith.mulf %350, %349 : vector<1x32xf32>
    %352 = math.tanh %351 : vector<1x32xf32>
    %cst_380 = arith.constant 5.000000e-01 : f32
    %353 = vector.broadcast %cst_380 : f32 to vector<1x32xf32>
    %354 = arith.mulf %353, %352 : vector<1x32xf32>
    %cst_381 = arith.constant 5.000000e-01 : f32
    %355 = vector.broadcast %cst_381 : f32 to vector<1x32xf32>
    %356 = arith.addf %354, %355 : vector<1x32xf32>
    %357 = vector.extract_strided_slice %340 {offsets = [0, 64], sizes = [1, 32], strides = [1, 1]} : vector<1x128xf32> to vector<1x32xf32>
    %358 = math.tanh %357 : vector<1x32xf32>
    %359 = vector.extract_strided_slice %340 {offsets = [0, 96], sizes = [1, 32], strides = [1, 1]} : vector<1x128xf32> to vector<1x32xf32>
    %cst_382 = arith.constant 5.000000e-01 : f32
    %360 = vector.broadcast %cst_382 : f32 to vector<1x32xf32>
    %361 = arith.mulf %360, %359 : vector<1x32xf32>
    %362 = math.tanh %361 : vector<1x32xf32>
    %cst_383 = arith.constant 5.000000e-01 : f32
    %363 = vector.broadcast %cst_383 : f32 to vector<1x32xf32>
    %364 = arith.mulf %363, %362 : vector<1x32xf32>
    %cst_384 = arith.constant 5.000000e-01 : f32
    %365 = vector.broadcast %cst_384 : f32 to vector<1x32xf32>
    %366 = arith.addf %364, %365 : vector<1x32xf32>
    %367 = arith.mulf %356, %335 : vector<1x32xf32>
    %368 = arith.mulf %348, %358 : vector<1x32xf32>
    %369 = arith.addf %367, %368 : vector<1x32xf32>
    %370 = math.tanh %369 : vector<1x32xf32>
    %371 = arith.mulf %366, %370 : vector<1x32xf32>
    %c128_385 = arith.constant 128 : index
    %c0_386 = arith.constant 0 : index
    %372 = vector.load %arg7[%c128_385, %c0_386] : memref<129x12xf32, #tpu.memory_space<vmem>>, vector<1x12xf32>
    %c0_387 = arith.constant 0 : index
    %c0_388 = arith.constant 0 : index
    %373 = vector.load %arg7[%c0_387, %c0_388] : memref<129x12xf32, #tpu.memory_space<vmem>>, vector<32x12xf32>
    %cst_389 = arith.constant dense<0.000000e+00> : vector<1x12xf32>
    %374 = tpu.matmul %269, %373, %cst_389 {dimension_numbers = #tpu.dot_dimension_numbers<[1], [0], [0], [1], [0, 0, 1, 1], [], []>} : vector<1x32xf32>, vector<32x12xf32>, vector<1x12xf32> -> vector<1x12xf32>
    %375 = arith.addf %372, %374 : vector<1x12xf32>
    %c32_390 = arith.constant 32 : index
    %c0_391 = arith.constant 0 : index
    %376 = vector.load %arg7[%c32_390, %c0_391] : memref<129x12xf32, #tpu.memory_space<vmem>>, vector<32x12xf32>
    %cst_392 = arith.constant dense<0.000000e+00> : vector<1x12xf32>
    %377 = tpu.matmul %303, %376, %cst_392 {dimension_numbers = #tpu.dot_dimension_numbers<[1], [0], [0], [1], [0, 0, 1, 1], [], []>} : vector<1x32xf32>, vector<32x12xf32>, vector<1x12xf32> -> vector<1x12xf32>
    %378 = arith.addf %375, %377 : vector<1x12xf32>
    %c64_393 = arith.constant 64 : index
    %c0_394 = arith.constant 0 : index
    %379 = vector.load %arg7[%c64_393, %c0_394] : memref<129x12xf32, #tpu.memory_space<vmem>>, vector<32x12xf32>
    %cst_395 = arith.constant dense<0.000000e+00> : vector<1x12xf32>
    %380 = tpu.matmul %337, %379, %cst_395 {dimension_numbers = #tpu.dot_dimension_numbers<[1], [0], [0], [1], [0, 0, 1, 1], [], []>} : vector<1x32xf32>, vector<32x12xf32>, vector<1x12xf32> -> vector<1x12xf32>
    %381 = arith.addf %378, %380 : vector<1x12xf32>
    %c96_396 = arith.constant 96 : index
    %c0_397 = arith.constant 0 : index
    %382 = vector.load %arg7[%c96_396, %c0_397] : memref<129x12xf32, #tpu.memory_space<vmem>>, vector<32x12xf32>
    %cst_398 = arith.constant dense<0.000000e+00> : vector<1x12xf32>
    %383 = tpu.matmul %371, %382, %cst_398 {dimension_numbers = #tpu.dot_dimension_numbers<[1], [0], [0], [1], [0, 0, 1, 1], [], []>} : vector<1x32xf32>, vector<32x12xf32>, vector<1x12xf32> -> vector<1x12xf32>
    %384 = arith.addf %381, %383 : vector<1x12xf32>
    %385 = vector.extract_strided_slice %384 {offsets = [0, 0], sizes = [1, 4], strides = [1, 1]} : vector<1x12xf32> to vector<1x4xf32>
    %cst_399 = arith.constant dense<0xFF800000> : vector<1xf32>
    %386 = vector.multi_reduction <maximumf>, %385, %cst_399 [1] : vector<1x4xf32> to vector<1xf32>
    %387 = vector.shape_cast %386 : vector<1xf32> to vector<1x1xf32>
    %388 = vector.broadcast %387 : vector<1x1xf32> to vector<1x4xf32>
    %389 = arith.subf %385, %388 : vector<1x4xf32>
    %390 = math.exp %389 : vector<1x4xf32>
    %cst_400 = arith.constant dense<0.000000e+00> : vector<1xf32>
    %391 = vector.multi_reduction <add>, %390, %cst_400 [1] : vector<1x4xf32> to vector<1xf32>
    %392 = vector.shape_cast %391 : vector<1xf32> to vector<1x1xf32>
    %393 = vector.broadcast %387 : vector<1x1xf32> to vector<1x4xf32>
    %394 = arith.subf %385, %393 : vector<1x4xf32>
    %395 = math.log %392 : vector<1x1xf32>
    %396 = vector.broadcast %395 : vector<1x1xf32> to vector<1x4xf32>
    %397 = arith.subf %394, %396 : vector<1x4xf32>
    %398 = vector.extract_strided_slice %384 {offsets = [0, 4], sizes = [1, 4], strides = [1, 1]} : vector<1x12xf32> to vector<1x4xf32>
    %cst_401 = arith.constant dense<0xFF800000> : vector<1xf32>
    %399 = vector.multi_reduction <maximumf>, %398, %cst_401 [1] : vector<1x4xf32> to vector<1xf32>
    %400 = vector.shape_cast %399 : vector<1xf32> to vector<1x1xf32>
    %401 = vector.broadcast %400 : vector<1x1xf32> to vector<1x4xf32>
    %402 = arith.subf %398, %401 : vector<1x4xf32>
    %403 = math.exp %402 : vector<1x4xf32>
    %cst_402 = arith.constant dense<0.000000e+00> : vector<1xf32>
    %404 = vector.multi_reduction <add>, %403, %cst_402 [1] : vector<1x4xf32> to vector<1xf32>
    %405 = vector.shape_cast %404 : vector<1xf32> to vector<1x1xf32>
    %406 = vector.broadcast %400 : vector<1x1xf32> to vector<1x4xf32>
    %407 = arith.subf %398, %406 : vector<1x4xf32>
    %408 = math.log %405 : vector<1x1xf32>
    %409 = vector.broadcast %408 : vector<1x1xf32> to vector<1x4xf32>
    %410 = arith.subf %407, %409 : vector<1x4xf32>
    %411 = vector.extract_strided_slice %384 {offsets = [0, 8], sizes = [1, 4], strides = [1, 1]} : vector<1x12xf32> to vector<1x4xf32>
    %cst_403 = arith.constant dense<0xFF800000> : vector<1xf32>
    %412 = vector.multi_reduction <maximumf>, %411, %cst_403 [1] : vector<1x4xf32> to vector<1xf32>
    %413 = vector.shape_cast %412 : vector<1xf32> to vector<1x1xf32>
    %414 = vector.broadcast %413 : vector<1x1xf32> to vector<1x4xf32>
    %415 = arith.subf %411, %414 : vector<1x4xf32>
    %416 = math.exp %415 : vector<1x4xf32>
    %cst_404 = arith.constant dense<0.000000e+00> : vector<1xf32>
    %417 = vector.multi_reduction <add>, %416, %cst_404 [1] : vector<1x4xf32> to vector<1xf32>
    %418 = vector.shape_cast %417 : vector<1xf32> to vector<1x1xf32>
    %419 = vector.broadcast %413 : vector<1x1xf32> to vector<1x4xf32>
    %420 = arith.subf %411, %419 : vector<1x4xf32>
    %421 = math.log %418 : vector<1x1xf32>
    %422 = vector.broadcast %421 : vector<1x1xf32> to vector<1x4xf32>
    %423 = arith.subf %420, %422 : vector<1x4xf32>
    %424 = tpu.concatenate %397, %410, %423 in 1 : vector<1x4xf32>, vector<1x4xf32>, vector<1x4xf32> -> vector<1x12xf32>
    %cst_405 = arith.constant 0.000000e+00 : f32
    %425 = vector.broadcast %cst_405 : f32 to vector<1x20xf32>
    %cst_406 = arith.constant 0.000000e+00 : f32
    %426 = vector.broadcast %cst_406 : f32 to vector<1x32xf32>
    %427 = tpu.concatenate %424, %425, %371, %369, %426 in 1 : vector<1x12xf32>, vector<1x20xf32>, vector<1x32xf32>, vector<1x32xf32>, vector<1x32xf32> -> vector<1x128xf32>
    %c0_407 = arith.constant 0 : index
    %c0_408 = arith.constant 0 : index
    %428 = vector.load %arg8[%c0_407, %c0_408] : memref<1x128xf32, #tpu.memory_space<vmem>>, vector<1x128xf32>
    tpu.vector_store %arg8[%c0_407, %c0_408], %427 {strides = array<i32>} : memref<1x128xf32, #tpu.memory_space<vmem>>, vector<1x128xf32>,
    return
  }
}

</mosaic_0001>

<llo_original>
// kernel: squeeze.5
$region0: #{squeeze.5}
  %s0 = inlined_call_operand.vmem [shape: f32[12], index: 0, kind: input, shape index: {}]
  %s1 = inlined_call_operand.vmem [shape: f32[3,4], index: 1, kind: output, shape index: {}]
  $region1: #{squeeze.5} parent=0
    #allocation0 [shape = 'u8[4096]{0}', space=vmem, size = 0x1000, scoped, tag = 'scoped mem for output reshape']
    #allocation1 [shape = 'u8[4096]{0}', space=vmem, size = 0x1000, scoped, tag = 'scoped mem for input reshape']
    %s3 = sshll.u32 1, 1
    %s4 = ssub.s32 %s3, 1
    %v5 = vld [vmem:[%s0] sm:%s4]
    %6 = vst [vmem:[#allocation1] sm:%s4] %v5
    %v7 = vld [vmem:[#allocation1] sm:$0x1]
    %vm8 = vcmask 31744
    %9 = vst.msk [vmem:[#allocation0] sm:$0x1] %vm8, %v7
    %v10 = vld [vmem:[#allocation1] sm:$0x1]
    %11 = vrot.lane.b32.xlu0 %v10, 124
    %v12 = vpop.permute.xlu0 %11
    %vm13 = vcmask 31744
    %s14 = scalar_lea.vmem [#allocation0], 1
    %15 = vst.msk [vmem:[%s14] sm:$0x1] %vm13, %v12
    %v16 = vld [vmem:[#allocation1] sm:$0x1]
    %17 = vrot.lane.b32.xlu0 %v16, 120
    %v18 = vpop.permute.xlu0 %17
    %vm19 = vcmask 31744
    %s20 = scalar_lea.vmem [#allocation0], 2
    %21 = vst.msk [vmem:[%s20] sm:$0x1] %vm19, %v18
    %s23 = sshll.u32 1, 4
    %s24 = ssub.s32 %s23, 1
    %v26 = vld [vmem:[#allocation0] sm:%s24]
    %s27 = sshll.u32 1, 4
    %s28 = ssub.s32 %s27, 1
    %29 = vst [vmem:[%s1] sm:%s28] %v26

// kernel: actor_forward.1
$region0: #{actor_forward.1}
  #allocation0 [shape = 'u32[]', space=smem, size = 0x4, offset = 0x4, fixed_abs, tag = 'smem constant byte address 0x4 - core index']
  #allocation1 [shape = 'u32[144,128]{1,0:T(1,128)}', space=vmem, size = 0x12000, scoped, tag = 'internal scratch']
  #allocation2 [shape = 'f32[16,400]{1,0:T(8,128)}', space=vmem, size = 0x8000, scoped, tag = 'scratch operand']
  #allocation3 [shape = 'f32[16,400]{1,0:T(8,128)}', space=vmem, size = 0x8000, scoped, tag = 'scratch operand']
  #allocation4 [shape = 'f32[288,286]{1,0:T(8,128)}', space=vmem, size = 0x6c000, scoped, tag = 'scratch operand']
  %s0 = inlined_call_operand.vmem [shape: f32[16,400], index: 0, kind: input, shape index: {}]
  %s1 = inlined_call_operand.vmem [shape: f32[1,64], index: 1, kind: input, shape index: {}]
  %s2 = inlined_call_operand.vmem [shape: f32[1,286], index: 2, kind: input, shape index: {}]
  %s3 = inlined_call_operand.vmem [shape: f32[4,16,288], index: 3, kind: input, shape index: {}]
  %s4 = inlined_call_operand.vmem [shape: f32[4,16,1], index: 4, kind: input, shape index: {}]
  %s5 = inlined_call_operand.vmem [shape: f32[4,88,128], index: 5, kind: input, shape index: {}]
  %s6 = inlined_call_operand.vmem [shape: f32[33,128], index: 6, kind: input, shape index: {}]
  %s7 = inlined_call_operand.vmem [shape: f32[129,12], index: 7, kind: input, shape index: {}]
  %s8 = inlined_call_operand.vmem [shape: f32[1,128], index: 8, kind: output, shape index: {}]
  %s9 = sld [smem:[#allocation0]]
  $region42: #{actor_forward.1} parent=0
    _
  %s11 = ssub.s32 1, %s9
  %s12 = scalar_select 0, %s11, %s9
  // Predicated region
  $region2: #{actor_forward.1} parent=0 // pred_check
    _
  $region3: #{actor_forward.1} parent=0 // pred_check_branch
    %14 = sbr.rel (0) target = $region5
  $region4: #{actor_forward.1} parent=0 // pred_region
    _
  $region5: #{actor_forward.1} parent=0 // pred_fallthru
    _
  // Predicated region
  $region6: #{actor_forward.1} parent=0 // pred_check
    _
  $region7: #{actor_forward.1} parent=0 // pred_check_branch
    %16 = sbr.rel (0) target = $region9
  $region8: #{actor_forward.1} parent=0 // pred_region
    _
  $region9: #{actor_forward.1} parent=0 // pred_fallthru
    _
  // Predicated region
  $region10: #{actor_forward.1} parent=0 // pred_check
    _
  $region11: #{actor_forward.1} parent=0 // pred_check_branch
    %18 = sbr.rel (0) target = $region13
  $region12: #{actor_forward.1} parent=0 // pred_region
    _
  $region13: #{actor_forward.1} parent=0 // pred_fallthru
    _
  // Predicated region
  $region14: #{actor_forward.1} parent=0 // pred_check
    _
  $region15: #{actor_forward.1} parent=0 // pred_check_branch
    %20 = sbr.rel (0) target = $region17
  $region16: #{actor_forward.1} parent=0 // pred_region
    _
  $region17: #{actor_forward.1} parent=0 // pred_fallthru
    _
  // Predicated region
  $region18: #{actor_forward.1} parent=0 // pred_check
    _
  $region19: #{actor_forward.1} parent=0 // pred_check_branch
    %22 = sbr.rel (0) target = $region21
  $region20: #{actor_forward.1} parent=0 // pred_region
    _
  $region21: #{actor_forward.1} parent=0 // pred_fallthru
    _
  // Predicated region
  $region22: #{actor_forward.1} parent=0 // pred_check
    _
  $region23: #{actor_forward.1} parent=0 // pred_check_branch
    %24 = sbr.rel (0) target = $region25
  $region24: #{actor_forward.1} parent=0 // pred_region
    _
  $region25: #{actor_forward.1} parent=0 // pred_fallthru
    _
  // Predicated region
  $region26: #{actor_forward.1} parent=0 // pred_check
    _
  $region27: #{actor_forward.1} parent=0 // pred_check_branch
    %26 = sbr.rel (0) target = $region29
  $region28: #{actor_forward.1} parent=0 // pred_region
    _
  $region29: #{actor_forward.1} parent=0 // pred_fallthru
    _
  // Predicated region
  $region30: #{actor_forward.1} parent=0 // pred_check
    _
  $region31: #{actor_forward.1} parent=0 // pred_check_branch
    %28 = sbr.rel (0) target = $region33
  $region32: #{actor_forward.1} parent=0 // pred_region
    _
  $region33: #{actor_forward.1} parent=0 // pred_fallthru
    _
  %v29 = vld [vmem:[%s0] sm:$0xff]
  %v30 = vld [vmem:[%s0 + $0x8] sm:$0xff]
  %v31 = vld [vmem:[%s0 + $0x10] sm:$0xff]
  %v32 = vld [vmem:[%s0 + $0x20] sm:$0xff]
  %v33 = vld [vmem:[%s0 + $0x28] sm:$0xff]
  %v34 = vld [vmem:[%s0 + $0x30] sm:$0xff]
  %35 = vst [vmem:[#allocation4] sm:$0xff] %v29
  %36 = vst [vmem:[#allocation4 + $0x8] sm:$0xff] %v30
  %vm37 = vcmask 244736
  %38 = vst.msk [vmem:[#allocation4 + $0x10] sm:$0xff] %vm37, %v31
  %39 = vst [vmem:[#allocation4 + $0x18] sm:$0xff] %v32
  %40 = vst [vmem:[#allocation4 + $0x20] sm:$0xff] %v33
  %41 = vst.msk [vmem:[#allocation4 + $0x28] sm:$0xff] %vm37, %v34
  %v42 = vld [vmem:[%s0] sm:$0xff]
  %v43 = vld [vmem:[%s0 + $0x8] sm:$0xff]
  %v44 = vld [vmem:[%s0 + $0x10] sm:$0xff]
  %v45 = vld [vmem:[%s0 + $0x20] sm:$0xff]
  %v46 = vld [vmem:[%s0 + $0x28] sm:$0xff]
  %v47 = vld [vmem:[%s0 + $0x30] sm:$0xff]
  %54 = vrot.lane.b32.xlu0 %v42, 127
  %v55 = vpop.permute.xlu0 %54
  %56 = vrot.lane.b32.xlu0 %v43, 127
  %v57 = vpop.permute.xlu0 %56
  %58 = vrot.lane.b32.xlu0 %v44, 127
  %v59 = vpop.permute.xlu0 %58
  %60 = vrot.lane.b32.xlu0 %v45, 127
  %v61 = vpop.permute.xlu0 %60
  %62 = vrot.lane.b32.xlu0 %v46, 127
  %v63 = vpop.permute.xlu0 %62
  %64 = vrot.lane.b32.xlu0 %v47, 127
  %v65 = vpop.permute.xlu0 %64
  %vm66 = vcmask 1039360
  %v67 = vsel %vm66, %v55, %v57
  %v68 = vsel %vm66, %v57, %v59
  %v69 = vsel %vm66, %v61, %v63
  %v70 = vsel %vm66, %v63, %v65
  %77 = vst [vmem:[#allocation4 + $0x30] sm:$0xff] %v67
  %78 = vst [vmem:[#allocation4 + $0x38] sm:$0xff] %v68
  %79 = vst.msk [vmem:[#allocation4 + $0x40] sm:$0xff] %vm37, %v59
  %80 = vst [vmem:[#allocation4 + $0x48] sm:$0xff] %v69
  %81 = vst [vmem:[#allocation4 + $0x50] sm:$0xff] %v70
  %82 = vst.msk [vmem:[#allocation4 + $0x58] sm:$0xff] %vm37, %v65
  %v83 = vld [vmem:[%s0] sm:$0xff]
  %v84 = vld [vmem:[%s0 + $0x8] sm:$0xff]
  %v85 = vld [vmem:[%s0 + $0x10] sm:$0xff]
  %v86 = vld [vmem:[%s0 + $0x20] sm:$0xff]
  %v87 = vld [vmem:[%s0 + $0x28] sm:$0xff]
  %v88 = vld [vmem:[%s0 + $0x30] sm:$0xff]
  %95 = vrot.lane.b32.xlu0 %v83, 126
  %v96 = vpop.permute.xlu0 %95
  %97 = vrot.lane.b32.xlu0 %v84, 126
  %v98 = vpop.permute.xlu0 %97
  %99 = vrot.lane.b32.xlu0 %v85, 126
  %v100 = vpop.permute.xlu0 %99
  %101 = vrot.lane.b32.xlu0 %v86, 126
  %v102 = vpop.permute.xlu0 %101
  %103 = vrot.lane.b32.xlu0 %v87, 126
  %v104 = vpop.permute.xlu0 %103
  %105 = vrot.lane.b32.xlu0 %v88, 126
  %v106 = vpop.permute.xlu0 %105
  %vm107 = vcmask 1031168
  %v108 = vsel %vm107, %v96, %v98
  %v109 = vsel %vm107, %v98, %v100
  %v110 = vsel %vm107, %v102, %v104
  %v111 = vsel %vm107, %v104, %v106
  %118 = vst [vmem:[#allocation4 + $0x60] sm:$0xff] %v108
  %119 = vst [vmem:[#allocation4 + $0x68] sm:$0xff] %v109
  %120 = vst.msk [vmem:[#allocation4 + $0x70] sm:$0xff] %vm37, %v100
  %121 = vst [vmem:[#allocation4 + $0x78] sm:$0xff] %v110
  %122 = vst [vmem:[#allocation4 + $0x80] sm:$0xff] %v111
  %123 = vst.msk [vmem:[#allocation4 + $0x88] sm:$0xff] %vm37, %v106
  %v124 = vld [vmem:[%s0] sm:$0xff]
  %v125 = vld [vmem:[%s0 + $0x8] sm:$0xff]
  %v126 = vld [vmem:[%s0 + $0x10] sm:$0xff]
  %v127 = vld [vmem:[%s0 + $0x20] sm:$0xff]
  %v128 = vld [vmem:[%s0 + $0x28] sm:$0xff]
  %v129 = vld [vmem:[%s0 + $0x30] sm:$0xff]
  %136 = vrot.lane.b32.xlu0 %v124, 106
  %v137 = vpop.permute.xlu0 %136
  %138 = vrot.lane.b32.xlu0 %v125, 106
  %v139 = vpop.permute.xlu0 %138
  %140 = vrot.lane.b32.xlu0 %v126, 106
  %v141 = vpop.permute.xlu0 %140
  %142 = vrot.lane.b32.xlu0 %v127, 106
  %v143 = vpop.permute.xlu0 %142
  %144 = vrot.lane.b32.xlu0 %v128, 106
  %v145 = vpop.permute.xlu0 %144
  %146 = vrot.lane.b32.xlu0 %v129, 106
  %v147 = vpop.permute.xlu0 %146
  %vm148 = vcmask 867328
  %v149 = vsel %vm148, %v137, %v139
  %v150 = vsel %vm148, %v139, %v141
  %v151 = vsel %vm148, %v143, %v145
  %v152 = vsel %vm148, %v145, %v147
  %159 = vst [vmem:[#allocation4 + $0x90] sm:$0xff] %v149
  %160 = vst [vmem:[#allocation4 + $0x98] sm:$0xff] %v150
  %161 = vst.msk [vmem:[#allocation4 + $0xa0] sm:$0xff] %vm37, %v141
  %162 = vst [vmem:[#allocation4 + $0xa8] sm:$0xff] %v151
  %163 = vst [vmem:[#allocation4 + $0xb0] sm:$0xff] %v152
  %164 = vst.msk [vmem:[#allocation4 + $0xb8] sm:$0xff] %vm37, %v147
  %v165 = vld [vmem:[%s0] sm:$0xff]
  %v166 = vld [vmem:[%s0 + $0x8] sm:$0xff]
  %v167 = vld [vmem:[%s0 + $0x10] sm:$0xff]
  %v168 = vld [vmem:[%s0 + $0x20] sm:$0xff]
  %v169 = vld [vmem:[%s0 + $0x28] sm:$0xff]
  %v170 = vld [vmem:[%s0 + $0x30] sm:$0xff]
  %177 = vrot.lane.b32.xlu0 %v165, 105
  %v178 = vpop.permute.xlu0 %177
  %179 = vrot.lane.b32.xlu0 %v166, 105
  %v180 = vpop.permute.xlu0 %179
  %181 = vrot.lane.b32.xlu0 %v167, 105
  %v182 = vpop.permute.xlu0 %181
  %183 = vrot.lane.b32.xlu0 %v168, 105
  %v184 = vpop.permute.xlu0 %183
  %185 = vrot.lane.b32.xlu0 %v169, 105
  %v186 = vpop.permute.xlu0 %185
  %187 = vrot.lane.b32.xlu0 %v170, 105
  %v188 = vpop.permute.xlu0 %187
  %vm189 = vcmask 859136
  %v190 = vsel %vm189, %v178, %v180
  %v191 = vsel %vm189, %v180, %v182
  %v192 = vsel %vm189, %v184, %v186
  %v193 = vsel %vm189, %v186, %v188
  %200 = vst [vmem:[#allocation4 + $0xc0] sm:$0xff] %v190
  %201 = vst [vmem:[#allocation4 + $0xc8] sm:$0xff] %v191
  %202 = vst.msk [vmem:[#allocation4 + $0xd0] sm:$0xff] %vm37, %v182
  %203 = vst [vmem:[#allocation4 + $0xd8] sm:$0xff] %v192
  %204 = vst [vmem:[#allocation4 + $0xe0] sm:$0xff] %v193
  %205 = vst.msk [vmem:[#allocation4 + $0xe8] sm:$0xff] %vm37, %v188
  %v206 = vld [vmem:[%s0] sm:$0xff]
  %v207 = vld [vmem:[%s0 + $0x8] sm:$0xff]
  %v208 = vld [vmem:[%s0 + $0x10] sm:$0xff]
  %v209 = vld [vmem:[%s0 + $0x20] sm:$0xff]
  %v210 = vld [vmem:[%s0 + $0x28] sm:$0xff]
  %v211 = vld [vmem:[%s0 + $0x30] sm:$0xff]
  %218 = vrot.lane.b32.xlu0 %v206, 104
  %v219 = vpop.permute.xlu0 %218
  %220 = vrot.lane.b32.xlu0 %v207, 104
  %v221 = vpop.permute.xlu0 %220
  %222 = vrot.lane.b32.xlu0 %v208, 104
  %v223 = vpop.permute.xlu0 %222
  %224 = vrot.lane.b32.xlu0 %v209, 104
  %v225 = vpop.permute.xlu0 %224
  %226 = vrot.lane.b32.xlu0 %v210, 104
  %v227 = vpop.permute.xlu0 %226
  %228 = vrot.lane.b32.xlu0 %v211, 104
  %v229 = vpop.permute.xlu0 %228
  %vm230 = vcmask 850944
  %v231 = vsel %vm230, %v219, %v221
  %v232 = vsel %vm230, %v221, %v223
  %v233 = vsel %vm230, %v225, %v227
  %v234 = vsel %vm230, %v227, %v229
  %241 = vst [vmem:[#allocation4 + $0xf0] sm:$0xff] %v231
  %242 = vst [vmem:[#allocation4 + $0xf8] sm:$0xff] %v232
  %243 = vst.msk [vmem:[#allocation4 + $0x100] sm:$0xff] %vm37, %v223
  %244 = vst [vmem:[#allocation4 + $0x108] sm:$0xff] %v233
  %245 = vst [vmem:[#allocation4 + $0x110] sm:$0xff] %v234
  %246 = vst.msk [vmem:[#allocation4 + $0x118] sm:$0xff] %vm37, %v229
  %v247 = vld [vmem:[%s0] sm:$0xff]
  %v248 = vld [vmem:[%s0 + $0x8] sm:$0xff]
  %v249 = vld [vmem:[%s0 + $0x10] sm:$0xff]
  %v250 = vld [vmem:[%s0 + $0x20] sm:$0xff]
  %v251 = vld [vmem:[%s0 + $0x28] sm:$0xff]
  %v252 = vld [vmem:[%s0 + $0x30] sm:$0xff]
  %259 = vrot.lane.b32.xlu0 %v247, 84
  %v260 = vpop.permute.xlu0 %259
  %261 = vrot.lane.b32.xlu0 %v248, 84
  %v262 = vpop.permute.xlu0 %261
  %263 = vrot.lane.b32.xlu0 %v249, 84
  %v264 = vpop.permute.xlu0 %263
  %265 = vrot.lane.b32.xlu0 %v250, 84
  %v266 = vpop.permute.xlu0 %265
  %267 = vrot.lane.b32.xlu0 %v251, 84
  %v268 = vpop.permute.xlu0 %267
  %269 = vrot.lane.b32.xlu0 %v252, 84
  %v270 = vpop.permute.xlu0 %269
  %vm271 = vcmask 687104
  %v272 = vsel %vm271, %v260, %v262
  %v273 = vsel %vm271, %v262, %v264
  %v274 = vsel %vm271, %v266, %v268
  %v275 = vsel %vm271, %v268, %v270
  %282 = vst [vmem:[#allocation4 + $0x120] sm:$0xff] %v272
  %283 = vst [vmem:[#allocation4 + $0x128] sm:$0xff] %v273
  %284 = vst.msk [vmem:[#allocation4 + $0x130] sm:$0xff] %vm37, %v264
  %285 = vst [vmem:[#allocation4 + $0x138] sm:$0xff] %v274
  %286 = vst [vmem:[#allocation4 + $0x140] sm:$0xff] %v275
  %287 = vst.msk [vmem:[#allocation4 + $0x148] sm:$0xff] %vm37, %v270
  %v288 = vld [vmem:[%s0] sm:$0xff]
  %v289 = vld [vmem:[%s0 + $0x8] sm:$0xff]
  %v290 = vld [vmem:[%s0 + $0x10] sm:$0xff]
  %v291 = vld [vmem:[%s0 + $0x20] sm:$0xff]
  %v292 = vld [vmem:[%s0 + $0x28] sm:$0xff]
  %v293 = vld [vmem:[%s0 + $0x30] sm:$0xff]
  %300 = vrot.lane.b32.xlu0 %v288, 83
  %v301 = vpop.permute.xlu0 %300
  %302 = vrot.lane.b32.xlu0 %v289, 83
  %v303 = vpop.permute.xlu0 %302
  %304 = vrot.lane.b32.xlu0 %v290, 83
  %v305 = vpop.permute.xlu0 %304
  %306 = vrot.lane.b32.xlu0 %v291, 83
  %v307 = vpop.permute.xlu0 %306
  %308 = vrot.lane.b32.xlu0 %v292, 83
  %v309 = vpop.permute.xlu0 %308
  %310 = vrot.lane.b32.xlu0 %v293, 83
  %v311 = vpop.permute.xlu0 %310
  %vm312 = vcmask 678912
  %v313 = vsel %vm312, %v301, %v303
  %v314 = vsel %vm312, %v303, %v305
  %v315 = vsel %vm312, %v307, %v309
  %v316 = vsel %vm312, %v309, %v311
  %323 = vst [vmem:[#allocation4 + $0x150] sm:$0xff] %v313
  %324 = vst [vmem:[#allocation4 + $0x158] sm:$0xff] %v314
  %325 = vst.msk [vmem:[#allocation4 + $0x160] sm:$0xff] %vm37, %v305
  %326 = vst [vmem:[#allocation4 + $0x168] sm:$0xff] %v315
  %327 = vst [vmem:[#allocation4 + $0x170] sm:$0xff] %v316
  %328 = vst.msk [vmem:[#allocation4 + $0x178] sm:$0xff] %vm37, %v311
  %v329 = vld [vmem:[%s0] sm:$0xff]
  %v330 = vld [vmem:[%s0 + $0x8] sm:$0xff]
  %v331 = vld [vmem:[%s0 + $0x10] sm:$0xff]
  %v332 = vld [vmem:[%s0 + $0x20] sm:$0xff]
  %v333 = vld [vmem:[%s0 + $0x28] sm:$0xff]
  %v334 = vld [vmem:[%s0 + $0x30] sm:$0xff]
  %341 = vrot.lane.b32.xlu0 %v329, 82
  %v342 = vpop.permute.xlu0 %341
  %343 = vrot.lane.b32.xlu0 %v330, 82
  %v344 = vpop.permute.xlu0 %343
  %345 = vrot.lane.b32.xlu0 %v331, 82
  %v346 = vpop.permute.xlu0 %345
  %347 = vrot.lane.b32.xlu0 %v332, 82
  %v348 = vpop.permute.xlu0 %347
  %349 = vrot.lane.b32.xlu0 %v333, 82
  %v350 = vpop.permute.xlu0 %349
  %351 = vrot.lane.b32.xlu0 %v334, 82
  %v352 = vpop.permute.xlu0 %351
  %vm353 = vcmask 670720
  %v354 = vsel %vm353, %v342, %v344
  %v355 = vsel %vm353, %v344, %v346
  %v356 = vsel %vm353, %v348, %v350
  %v357 = vsel %vm353, %v350, %v352
  %364 = vst [vmem:[#allocation4 + $0x180] sm:$0xff] %v354
  %365 = vst [vmem:[#allocation4 + $0x188] sm:$0xff] %v355
  %366 = vst.msk [vmem:[#allocation4 + $0x190] sm:$0xff] %vm37, %v346
  %367 = vst [vmem:[#allocation4 + $0x198] sm:$0xff] %v356
  %368 = vst [vmem:[#allocation4 + $0x1a0] sm:$0xff] %v357
  %369 = vst.msk [vmem:[#allocation4 + $0x1a8] sm:$0xff] %vm37, %v352
  %v370 = vld [vmem:[%s0] sm:$0xff]
  %v371 = vld [vmem:[%s0 + $0x8] sm:$0xff]
  %v372 = vld [vmem:[%s0 + $0x10] sm:$0xff]
  %v373 = vld [vmem:[%s0 + $0x20] sm:$0xff]
  %v374 = vld [vmem:[%s0 + $0x28] sm:$0xff]
  %v375 = vld [vmem:[%s0 + $0x30] sm:$0xff]
  %382 = vrot.lane.b32.xlu0 %v370, 62
  %v383 = vpop.permute.xlu0 %382
  %384 = vrot.lane.b32.xlu0 %v371, 62
  %v385 = vpop.permute.xlu0 %384
  %386 = vrot.lane.b32.xlu0 %v372, 62
  %v387 = vpop.permute.xlu0 %386
  %388 = vrot.lane.b32.xlu0 %v373, 62
  %v389 = vpop.permute.xlu0 %388
  %390 = vrot.lane.b32.xlu0 %v374, 62
  %v391 = vpop.permute.xlu0 %390
  %392 = vrot.lane.b32.xlu0 %v375, 62
  %v393 = vpop.permute.xlu0 %392
  %vm394 = vcmask 506880
  %v395 = vsel %vm394, %v383, %v385
  %v396 = vsel %vm394, %v385, %v387
  %v397 = vsel %vm394, %v389, %v391
  %v398 = vsel %vm394, %v391, %v393
  %405 = vst [vmem:[#allocation4 + $0x1b0] sm:$0xff] %v395
  %406 = vst [vmem:[#allocation4 + $0x1b8] sm:$0xff] %v396
  %407 = vst.msk [vmem:[#allocation4 + $0x1c0] sm:$0xff] %vm37, %v387
  %408 = vst [vmem:[#allocation4 + $0x1c8] sm:$0xff] %v397
  %409 = vst [vmem:[#allocation4 + $0x1d0] sm:$0xff] %v398
  %410 = vst.msk [vmem:[#allocation4 + $0x1d8] sm:$0xff] %vm37, %v393
  %v411 = vld [vmem:[%s0] sm:$0xff]
  %v412 = vld [vmem:[%s0 + $0x8] sm:$0xff]
  %v413 = vld [vmem:[%s0 + $0x10] sm:$0xff]
  %v414 = vld [vmem:[%s0 + $0x20] sm:$0xff]
  %v415 = vld [vmem:[%s0 + $0x28] sm:$0xff]
  %v416 = vld [vmem:[%s0 + $0x30] sm:$0xff]
  %423 = vrot.lane.b32.xlu0 %v411, 61
  %v424 = vpop.permute.xlu0 %423
  %425 = vrot.lane.b32.xlu0 %v412, 61
  %v426 = vpop.permute.xlu0 %425
  %427 = vrot.lane.b32.xlu0 %v413, 61
  %v428 = vpop.permute.xlu0 %427
  %429 = vrot.lane.b32.xlu0 %v414, 61
  %v430 = vpop.permute.xlu0 %429
  %431 = vrot.lane.b32.xlu0 %v415, 61
  %v432 = vpop.permute.xlu0 %431
  %433 = vrot.lane.b32.xlu0 %v416, 61
  %v434 = vpop.permute.xlu0 %433
  %vm435 = vcmask 498688
  %v436 = vsel %vm435, %v424, %v426
  %v437 = vsel %vm435, %v426, %v428
  %v438 = vsel %vm435, %v430, %v432
  %v439 = vsel %vm435, %v432, %v434
  %446 = vst [vmem:[#allocation4 + $0x1e0] sm:$0xff] %v436
  %447 = vst [vmem:[#allocation4 + $0x1e8] sm:$0xff] %v437
  %448 = vst.msk [vmem:[#allocation4 + $0x1f0] sm:$0xff] %vm37, %v428
  %449 = vst [vmem:[#allocation4 + $0x1f8] sm:$0xff] %v438
  %450 = vst [vmem:[#allocation4 + $0x200] sm:$0xff] %v439
  %451 = vst.msk [vmem:[#allocation4 + $0x208] sm:$0xff] %vm37, %v434
  %v452 = vld [vmem:[%s0] sm:$0xff]
  %v453 = vld [vmem:[%s0 + $0x8] sm:$0xff]
  %v454 = vld [vmem:[%s0 + $0x10] sm:$0xff]
  %v455 = vld [vmem:[%s0 + $0x20] sm:$0xff]
  %v456 = vld [vmem:[%s0 + $0x28] sm:$0xff]
  %v457 = vld [vmem:[%s0 + $0x30] sm:$0xff]
  %464 = vrot.lane.b32.xlu0 %v452, 60
  %v465 = vpop.permute.xlu0 %464
  %466 = vrot.lane.b32.xlu0 %v453, 60
  %v467 = vpop.permute.xlu0 %466
  %468 = vrot.lane.b32.xlu0 %v454, 60
  %v469 = vpop.permute.xlu0 %468
  %470 = vrot.lane.b32.xlu0 %v455, 60
  %v471 = vpop.permute.xlu0 %470
  %472 = vrot.lane.b32.xlu0 %v456, 60
  %v473 = vpop.permute.xlu0 %472
  %474 = vrot.lane.b32.xlu0 %v457, 60
  %v475 = vpop.permute.xlu0 %474
  %vm476 = vcmask 490496
  %v477 = vsel %vm476, %v465, %v467
  %v478 = vsel %vm476, %v467, %v469
  %v479 = vsel %vm476, %v471, %v473
  %v480 = vsel %vm476, %v473, %v475
  %487 = vst [vmem:[#allocation4 + $0x210] sm:$0xff] %v477
  %488 = vst [vmem:[#allocation4 + $0x218] sm:$0xff] %v478
  %489 = vst.msk [vmem:[#allocation4 + $0x220] sm:$0xff] %vm37, %v469
  %490 = vst [vmem:[#allocation4 + $0x228] sm:$0xff] %v479
  %491 = vst [vmem:[#allocation4 + $0x230] sm:$0xff] %v480
  %492 = vst.msk [vmem:[#allocation4 + $0x238] sm:$0xff] %vm37, %v475
  %v493 = vld [vmem:[%s0] sm:$0xff]
  %v494 = vld [vmem:[%s0 + $0x8] sm:$0xff]
  %v495 = vld [vmem:[%s0 + $0x10] sm:$0xff]
  %v496 = vld [vmem:[%s0 + $0x20] sm:$0xff]
  %v497 = vld [vmem:[%s0 + $0x28] sm:$0xff]
  %v498 = vld [vmem:[%s0 + $0x30] sm:$0xff]
  %505 = vrot.lane.b32.xlu0 %v493, 40
  %v506 = vpop.permute.xlu0 %505
  %507 = vrot.lane.b32.xlu0 %v494, 40
  %v508 = vpop.permute.xlu0 %507
  %509 = vrot.lane.b32.xlu0 %v495, 40
  %v510 = vpop.permute.xlu0 %509
  %511 = vrot.lane.b32.xlu0 %v496, 40
  %v512 = vpop.permute.xlu0 %511
  %513 = vrot.lane.b32.xlu0 %v497, 40
  %v514 = vpop.permute.xlu0 %513
  %515 = vrot.lane.b32.xlu0 %v498, 40
  %v516 = vpop.permute.xlu0 %515
  %vm517 = vcmask 326656
  %v518 = vsel %vm517, %v506, %v508
  %v519 = vsel %vm517, %v508, %v510
  %v520 = vsel %vm517, %v512, %v514
  %v521 = vsel %vm517, %v514, %v516
  %528 = vst [vmem:[#allocation4 + $0x240] sm:$0xff] %v518
  %529 = vst [vmem:[#allocation4 + $0x248] sm:$0xff] %v519
  %530 = vst.msk [vmem:[#allocation4 + $0x250] sm:$0xff] %vm37, %v510
  %531 = vst [vmem:[#allocation4 + $0x258] sm:$0xff] %v520
  %532 = vst [vmem:[#allocation4 + $0x260] sm:$0xff] %v521
  %533 = vst.msk [vmem:[#allocation4 + $0x268] sm:$0xff] %vm37, %v516
  %v534 = vld [vmem:[%s0] sm:$0xff]
  %v535 = vld [vmem:[%s0 + $0x8] sm:$0xff]
  %v536 = vld [vmem:[%s0 + $0x10] sm:$0xff]
  %v537 = vld [vmem:[%s0 + $0x20] sm:$0xff]
  %v538 = vld [vmem:[%s0 + $0x28] sm:$0xff]
  %v539 = vld [vmem:[%s0 + $0x30] sm:$0xff]
  %546 = vrot.lane.b32.xlu0 %v534, 39
  %v547 = vpop.permute.xlu0 %546
  %548 = vrot.lane.b32.xlu0 %v535, 39
  %v549 = vpop.permute.xlu0 %548
  %550 = vrot.lane.b32.xlu0 %v536, 39
  %v551 = vpop.permute.xlu0 %550
  %552 = vrot.lane.b32.xlu0 %v537, 39
  %v553 = vpop.permute.xlu0 %552
  %554 = vrot.lane.b32.xlu0 %v538, 39
  %v555 = vpop.permute.xlu0 %554
  %556 = vrot.lane.b32.xlu0 %v539, 39
  %v557 = vpop.permute.xlu0 %556
  %vm558 = vcmask 318464
  %v559 = vsel %vm558, %v547, %v549
  %v560 = vsel %vm558, %v549, %v551
  %v561 = vsel %vm558, %v553, %v555
  %v562 = vsel %vm558, %v555, %v557
  %569 = vst [vmem:[#allocation4 + $0x270] sm:$0xff] %v559
  %570 = vst [vmem:[#allocation4 + $0x278] sm:$0xff] %v560
  %571 = vst.msk [vmem:[#allocation4 + $0x280] sm:$0xff] %vm37, %v551
  %572 = vst [vmem:[#allocation4 + $0x288] sm:$0xff] %v561
  %573 = vst [vmem:[#allocation4 + $0x290] sm:$0xff] %v562
  %574 = vst.msk [vmem:[#allocation4 + $0x298] sm:$0xff] %vm37, %v557
  %v575 = vld [vmem:[%s0] sm:$0xff]
  %v576 = vld [vmem:[%s0 + $0x8] sm:$0xff]
  %v577 = vld [vmem:[%s0 + $0x10] sm:$0xff]
  %v578 = vld [vmem:[%s0 + $0x20] sm:$0xff]
  %v579 = vld [vmem:[%s0 + $0x28] sm:$0xff]
  %v580 = vld [vmem:[%s0 + $0x30] sm:$0xff]
  %587 = vrot.lane.b32.xlu0 %v575, 38
  %v588 = vpop.permute.xlu0 %587
  %589 = vrot.lane.b32.xlu0 %v576, 38
  %v590 = vpop.permute.xlu0 %589
  %591 = vrot.lane.b32.xlu0 %v577, 38
  %v592 = vpop.permute.xlu0 %591
  %593 = vrot.lane.b32.xlu0 %v578, 38
  %v594 = vpop.permute.xlu0 %593
  %595 = vrot.lane.b32.xlu0 %v579, 38
  %v596 = vpop.permute.xlu0 %595
  %597 = vrot.lane.b32.xlu0 %v580, 38
  %v598 = vpop.permute.xlu0 %597
  %vm599 = vcmask 310272
  %v600 = vsel %vm599, %v588, %v590
  %v601 = vsel %vm599, %v590, %v592
  %v602 = vsel %vm599, %v594, %v596
  %v603 = vsel %vm599, %v596, %v598
  %610 = vst [vmem:[#allocation4 + $0x2a0] sm:$0xff] %v600
  %611 = vst [vmem:[#allocation4 + $0x2a8] sm:$0xff] %v601
  %612 = vst.msk [vmem:[#allocation4 + $0x2b0] sm:$0xff] %vm37, %v592
  %613 = vst [vmem:[#allocation4 + $0x2b8] sm:$0xff] %v602
  %614 = vst [vmem:[#allocation4 + $0x2c0] sm:$0xff] %v603
  %615 = vst.msk [vmem:[#allocation4 + $0x2c8] sm:$0xff] %vm37, %v598
  %v616 = vld [vmem:[%s0] sm:$0xff]
  %v617 = vld [vmem:[%s0 + $0x8] sm:$0xff]
  %v618 = vld [vmem:[%s0 + $0x10] sm:$0xff]
  %v619 = vld [vmem:[%s0 + $0x18] sm:$0xff]
  %v620 = vld [vmem:[%s0 + $0x20] sm:$0xff]
  %v621 = vld [vmem:[%s0 + $0x28] sm:$0xff]
  %v622 = vld [vmem:[%s0 + $0x30] sm:$0xff]
  %v623 = vld [vmem:[%s0 + $0x38] sm:$0xff]
  %632 = vrot.lane.b32.xlu0 %v616, 18
  %v633 = vpop.permute.xlu0 %632
  %634 = vrot.lane.b32.xlu0 %v617, 18
  %v635 = vpop.permute.xlu0 %634
  %636 = vrot.lane.b32.xlu0 %v618, 18
  %v637 = vpop.permute.xlu0 %636
  %638 = vrot.lane.b32.xlu0 %v619, 18
  %v639 = vpop.permute.xlu0 %638
  %640 = vrot.lane.b32.xlu0 %v620, 18
  %v641 = vpop.permute.xlu0 %640
  %642 = vrot.lane.b32.xlu0 %v621, 18
  %v643 = vpop.permute.xlu0 %642
  %644 = vrot.lane.b32.xlu0 %v622, 18
  %v645 = vpop.permute.xlu0 %644
  %646 = vrot.lane.b32.xlu0 %v623, 18
  %v647 = vpop.permute.xlu0 %646
  %vm648 = vcmask 146432
  %v649 = vsel %vm648, %v633, %v635
  %v650 = vsel %vm648, %v635, %v637
  %v651 = vsel %vm648, %v637, %v639
  %v652 = vsel %vm648, %v641, %v643
  %v653 = vsel %vm648, %v643, %v645
  %v654 = vsel %vm648, %v645, %v647
  %661 = vst [vmem:[#allocation4 + $0x2d0] sm:$0xff] %v649
  %662 = vst [vmem:[#allocation4 + $0x2d8] sm:$0xff] %v650
  %663 = vst.msk [vmem:[#allocation4 + $0x2e0] sm:$0xff] %vm37, %v651
  %664 = vst [vmem:[#allocation4 + $0x2e8] sm:$0xff] %v652
  %665 = vst [vmem:[#allocation4 + $0x2f0] sm:$0xff] %v653
  %666 = vst.msk [vmem:[#allocation4 + $0x2f8] sm:$0xff] %vm37, %v654
  %v667 = vld [vmem:[%s0] sm:$0xff]
  %v668 = vld [vmem:[%s0 + $0x8] sm:$0xff]
  %v669 = vld [vmem:[%s0 + $0x10] sm:$0xff]
  %v670 = vld [vmem:[%s0 + $0x18] sm:$0xff]
  %v671 = vld [vmem:[%s0 + $0x20] sm:$0xff]
  %v672 = vld [vmem:[%s0 + $0x28] sm:$0xff]
  %v673 = vld [vmem:[%s0 + $0x30] sm:$0xff]
  %v674 = vld [vmem:[%s0 + $0x38] sm:$0xff]
  %683 = vrot.lane.b32.xlu0 %v667, 17
  %v684 = vpop.permute.xlu0 %683
  %685 = vrot.lane.b32.xlu0 %v668, 17
  %v686 = vpop.permute.xlu0 %685
  %687 = vrot.lane.b32.xlu0 %v669, 17
  %v688 = vpop.permute.xlu0 %687
  %689 = vrot.lane.b32.xlu0 %v670, 17
  %v690 = vpop.permute.xlu0 %689
  %691 = vrot.lane.b32.xlu0 %v671, 17
  %v692 = vpop.permute.xlu0 %691
  %693 = vrot.lane.b32.xlu0 %v672, 17
  %v694 = vpop.permute.xlu0 %693
  %695 = vrot.lane.b32.xlu0 %v673, 17
  %v696 = vpop.permute.xlu0 %695
  %697 = vrot.lane.b32.xlu0 %v674, 17
  %v698 = vpop.permute.xlu0 %697
  %vm699 = vcmask 138240
  %v700 = vsel %vm699, %v684, %v686
  %v701 = vsel %vm699, %v686, %v688
  %v702 = vsel %vm699, %v688, %v690
  %v703 = vsel %vm699, %v692, %v694
  %v704 = vsel %vm699, %v694, %v696
  %v705 = vsel %vm699, %v696, %v698
  %712 = vst [vmem:[#allocation4 + $0x300] sm:$0xff] %v700
  %713 = vst [vmem:[#allocation4 + $0x308] sm:$0xff] %v701
  %714 = vst.msk [vmem:[#allocation4 + $0x310] sm:$0xff] %vm37, %v702
  %715 = vst [vmem:[#allocation4 + $0x318] sm:$0xff] %v703
  %716 = vst [vmem:[#allocation4 + $0x320] sm:$0xff] %v704
  %717 = vst.msk [vmem:[#allocation4 + $0x328] sm:$0xff] %vm37, %v705
  %v718 = vld [vmem:[%s0] sm:$0xff]
  %v719 = vld [vmem:[%s0 + $0x8] sm:$0xff]
  %v720 = vld [vmem:[%s0 + $0x10] sm:$0xff]
  %v721 = vld [vmem:[%s0 + $0x18] sm:$0xff]
  %v722 = vld [vmem:[%s0 + $0x20] sm:$0xff]
  %v723 = vld [vmem:[%s0 + $0x28] sm:$0xff]
  %v724 = vld [vmem:[%s0 + $0x30] sm:$0xff]
  %v725 = vld [vmem:[%s0 + $0x38] sm:$0xff]
  %734 = vrot.lane.b32.xlu0 %v718, 16
  %v735 = vpop.permute.xlu0 %734
  %736 = vrot.lane.b32.xlu0 %v719, 16
  %v737 = vpop.permute.xlu0 %736
  %738 = vrot.lane.b32.xlu0 %v720, 16
  %v739 = vpop.permute.xlu0 %738
  %740 = vrot.lane.b32.xlu0 %v721, 16
  %v741 = vpop.permute.xlu0 %740
  %742 = vrot.lane.b32.xlu0 %v722, 16
  %v743 = vpop.permute.xlu0 %742
  %744 = vrot.lane.b32.xlu0 %v723, 16
  %v745 = vpop.permute.xlu0 %744
  %746 = vrot.lane.b32.xlu0 %v724, 16
  %v747 = vpop.permute.xlu0 %746
  %748 = vrot.lane.b32.xlu0 %v725, 16
  %v749 = vpop.permute.xlu0 %748
  %vm750 = vcmask 130048
  %v751 = vsel %vm750, %v735, %v737
  %v752 = vsel %vm750, %v737, %v739
  %v753 = vsel %vm750, %v739, %v741
  %v754 = vsel %vm750, %v743, %v745
  %v755 = vsel %vm750, %v745, %v747
  %v756 = vsel %vm750, %v747, %v749
  %763 = vst [vmem:[#allocation4 + $0x330] sm:$0xff] %v751
  %764 = vst [vmem:[#allocation4 + $0x338] sm:$0xff] %v752
  %765 = vst.msk [vmem:[#allocation4 + $0x340] sm:$0xff] %vm37, %v753
  %766 = vst [vmem:[#allocation4 + $0x348] sm:$0xff] %v754
  %767 = vst [vmem:[#allocation4 + $0x350] sm:$0xff] %v755
  %768 = vst.msk [vmem:[#allocation4 + $0x358] sm:$0xff] %vm37, %v756
  %v769 = vld [vmem:[%s3] sm:$0xff]
  %v770 = vld [vmem:[%s3 + $0x8] sm:$0xff]
  %v771 = vld [vmem:[%s3 + $0x10] sm:$0xff]
  %v772 = vld [vmem:[%s3 + $0x18] sm:$0xff]
  %v773 = vld [vmem:[%s3 + $0x20] sm:$0xff]
  %v774 = vld [vmem:[%s3 + $0x28] sm:$0xff]
  %v775 = vld [vmem:[#allocation4] sm:$0xff]
  %v776 = vld [vmem:[#allocation4 + $0x8] sm:$0xff]
  %v777 = vld [vmem:[#allocation4 + $0x10] sm:$0xff]
  %v778 = vld [vmem:[#allocation4 + $0x18] sm:$0xff]
  %v779 = vld [vmem:[#allocation4 + $0x20] sm:$0xff]
  %v780 = vld [vmem:[#allocation4 + $0x28] sm:$0xff]
  %v781 = vld [vmem:[#allocation4 + $0x30] sm:$0xff]
  %v782 = vld [vmem:[#allocation4 + $0x38] sm:$0xff]
  %v783 = vld [vmem:[#allocation4 + $0x40] sm:$0xff]
  %v784 = vld [vmem:[#allocation4 + $0x48] sm:$0xff]
  %v785 = vld [vmem:[#allocation4 + $0x50] sm:$0xff]
  %v786 = vld [vmem:[#allocation4 + $0x58] sm:$0xff]
  %v787 = vld [vmem:[#allocation4 + $0x60] sm:$0xff]
  %v788 = vld [vmem:[#allocation4 + $0x68] sm:$0xff]
  %v789 = vld [vmem:[#allocation4 + $0x70] sm:$0xff]
  %v790 = vld [vmem:[#allocation4 + $0x78] sm:$0xff]
  %v791 = vld [vmem:[#allocation4 + $0x80] sm:$0xff]
  %v792 = vld [vmem:[#allocation4 + $0x88] sm:$0xff]
  %v793 = vld [vmem:[#allocation4 + $0x90] sm:$0xff]
  %v794 = vld [vmem:[#allocation4 + $0x98] sm:$0xff]
  %v795 = vld [vmem:[#allocation4 + $0xa0] sm:$0xff]
  %v796 = vld [vmem:[#allocation4 + $0xa8] sm:$0xff]
  %v797 = vld [vmem:[#allocation4 + $0xb0] sm:$0xff]
  %v798 = vld [vmem:[#allocation4 + $0xb8] sm:$0xff]
  %v799 = vld [vmem:[#allocation4 + $0xc0] sm:$0xff]
  %v800 = vld [vmem:[#allocation4 + $0xc8] sm:$0xff]
  %v801 = vld [vmem:[#allocation4 + $0xd0] sm:$0xff]
  %v802 = vld [vmem:[#allocation4 + $0xd8] sm:$0xff]
  %v803 = vld [vmem:[#allocation4 + $0xe0] sm:$0xff]
  %v804 = vld [vmem:[#allocation4 + $0xe8] sm:$0xff]
  %v805 = vld [vmem:[#allocation4 + $0xf0] sm:$0xff]
  %v806 = vld [vmem:[#allocation4 + $0xf8] sm:$0xff]
  %v807 = vld [vmem:[#allocation4 + $0x100] sm:$0xff]
  %v808 = vld [vmem:[#allocation4 + $0x108] sm:$0xff]
  %v809 = vld [vmem:[#allocation4 + $0x110] sm:$0xff]
  %v810 = vld [vmem:[#allocation4 + $0x118] sm:$0xff]
  %v811 = vld [vmem:[#allocation4 + $0x120] sm:$0xff]
  %v812 = vld [vmem:[#allocation4 + $0x128] sm:$0xff]
  %v813 = vld [vmem:[#allocation4 + $0x130] sm:$0xff]
  %v814 = vld [vmem:[#allocation4 + $0x138] sm:$0xff]
  %v815 = vld [vmem:[#allocation4 + $0x140] sm:$0xff]
  %v816 = vld [vmem:[#allocation4 + $0x148] sm:$0xff]
  %v817 = vld [vmem:[#allocation4 + $0x150] sm:$0xff]
  %v818 = vld [vmem:[#allocation4 + $0x158] sm:$0xff]
  %v819 = vld [vmem:[#allocation4 + $0x160] sm:$0xff]
  %v820 = vld [vmem:[#allocation4 + $0x168] sm:$0xff]
  %v821 = vld [vmem:[#allocation4 + $0x170] sm:$0xff]
  %v822 = vld [vmem:[#allocation4 + $0x178] sm:$0xff]
  %v823 = vld [vmem:[#allocation4 + $0x180] sm:$0xff]
  %v824 = vld [vmem:[#allocation4 + $0x188] sm:$0xff]
  %v825 = vld [vmem:[#allocation4 + $0x190] sm:$0xff]
  %v826 = vld [vmem:[#allocation4 + $0x198] sm:$0xff]
  %v827 = vld [vmem:[#allocation4 + $0x1a0] sm:$0xff]
  %v828 = vld [vmem:[#allocation4 + $0x1a8] sm:$0xff]
  %v829 = vld [vmem:[#allocation4 + $0x1b0] sm:$0xff]
  %v830 = vld [vmem:[#allocation4 + $0x1b8] sm:$0xff]
  %v831 = vld [vmem:[#allocation4 + $0x1c0] sm:$0xff]
  %v832 = vld [vmem:[#allocation4 + $0x1c8] sm:$0xff]
  %v833 = vld [vmem:[#allocation4 + $0x1d0] sm:$0xff]
  %v834 = vld [vmem:[#allocation4 + $0x1d8] sm:$0xff]
  %v835 = vld [vmem:[#allocation4 + $0x1e0] sm:$0xff]
  %v836 = vld [vmem:[#allocation4 + $0x1e8] sm:$0xff]
  %v837 = vld [vmem:[#allocation4 + $0x1f0] sm:$0xff]
  %v838 = vld [vmem:[#allocation4 + $0x1f8] sm:$0xff]
  %v839 = vld [vmem:[#allocation4 + $0x200] sm:$0xff]
  %v840 = vld [vmem:[#allocation4 + $0x208] sm:$0xff]
  %v841 = vld [vmem:[#allocation4 + $0x210] sm:$0xff]
  %v842 = vld [vmem:[#allocation4 + $0x218] sm:$0xff]
  %v843 = vld [vmem:[#allocation4 + $0x220] sm:$0xff]
  %v844 = vld [vmem:[#allocation4 + $0x228] sm:$0xff]
  %v845 = vld [vmem:[#allocation4 + $0x230] sm:$0xff]
  %v846 = vld [vmem:[#allocation4 + $0x238] sm:$0xff]
  %v847 = vld [vmem:[#allocation4 + $0x240] sm:$0xff]
  %v848 = vld [vmem:[#allocation4 + $0x248] sm:$0xff]
  %v849 = vld [vmem:[#allocation4 + $0x250] sm:$0xff]
  %v850 = vld [vmem:[#allocation4 + $0x258] sm:$0xff]
  %v851 = vld [vmem:[#allocation4 + $0x260] sm:$0xff]
  %v852 = vld [vmem:[#allocation4 + $0x268] sm:$0xff]
  %v853 = vld [vmem:[#allocation4 + $0x270] sm:$0xff]
  %v854 = vld [vmem:[#allocation4 + $0x278] sm:$0xff]
  %v855 = vld [vmem:[#allocation4 + $0x280] sm:$0xff]
  %v856 = vld [vmem:[#allocation4 + $0x288] sm:$0xff]
  %v857 = vld [vmem:[#allocation4 + $0x290] sm:$0xff]
  %v858 = vld [vmem:[#allocation4 + $0x298] sm:$0xff]
  %v859 = vld [vmem:[#allocation4 + $0x2a0] sm:$0xff]
  %v860 = vld [vmem:[#allocation4 + $0x2a8] sm:$0xff]
  %v861 = vld [vmem:[#allocation4 + $0x2b0] sm:$0xff]
  %v862 = vld [vmem:[#allocation4 + $0x2b8] sm:$0xff]
  %v863 = vld [vmem:[#allocation4 + $0x2c0] sm:$0xff]
  %v864 = vld [vmem:[#allocation4 + $0x2c8] sm:$0xff]
  %v865 = vld [vmem:[#allocation4 + $0x2d0] sm:$0xff]
  %v866 = vld [vmem:[#allocation4 + $0x2d8] sm:$0xff]
  %v867 = vld [vmem:[#allocation4 + $0x2e0] sm:$0xff]
  %v868 = vld [vmem:[#allocation4 + $0x2e8] sm:$0xff]
  %v869 = vld [vmem:[#allocation4 + $0x2f0] sm:$0xff]
  %v870 = vld [vmem:[#allocation4 + $0x2f8] sm:$0xff]
  %v871 = vld [vmem:[#allocation4 + $0x300] sm:$0xff]
  %v872 = vld [vmem:[#allocation4 + $0x308] sm:$0xff]
  %v873 = vld [vmem:[#allocation4 + $0x310] sm:$0xff]
  %v874 = vld [vmem:[#allocation4 + $0x318] sm:$0xff]
  %v875 = vld [vmem:[#allocation4 + $0x320] sm:$0xff]
  %v876 = vld [vmem:[#allocation4 + $0x328] sm:$0xff]
  %v877 = vld [vmem:[#allocation4 + $0x330] sm:$0xff]
  %v878 = vld [vmem:[#allocation4 + $0x338] sm:$0xff]
  %v879 = vld [vmem:[#allocation4 + $0x340] sm:$0xff]
  %v880 = vld [vmem:[#allocation4 + $0x348] sm:$0xff]
  %v881 = vld [vmem:[#allocation4 + $0x350] sm:$0xff]
  %v882 = vld [vmem:[#allocation4 + $0x358] sm:$0xff]
  %v883 = vld [vmem:[%s4] sm:$0xff]
  %v884 = vld [vmem:[%s4 + $0x8] sm:$0xff]
  %886 = vset.pattern.permute.xlu0 0
  %887 = vperm.xlu0 %886, %v883
  %v888 = vpop.permute.xlu0 %887
  %891 = vset.pattern.permute.xlu0 0
  %892 = vperm.xlu0 %891, %v884
  %v893 = vpop.permute.xlu0 %892
  %vm895 = vcmask 261120
  %v897 = vsel %vm895, %v771, 0
  %v900 = vsel %vm895, %v774, 0
  %902 = vmatprep.subr.mxu0 %v821
  %903 = vmatpush1.msra.mxu0 %v820
  %904 = vmatprep.subr.mxu0 %v818
  %905 = vmatpush1.msra.mxu0 %v817
  %906 = vmatprep.subr.mxu0 %v815
  %907 = vmatpush1.msra.mxu0 %v814
  %908 = vmatprep.subr.mxu0 %v812
  %909 = vmatpush1.msra.mxu0 %v811
  %910 = vmatprep.subr.mxu0 %v809
  %911 = vmatpush1.msra.mxu0 %v808
  %912 = vmatprep.subr.mxu0 %v806
  %913 = vmatpush1.msra.mxu0 %v805
  %914 = vmatprep.subr.mxu0 %v803
  %915 = vmatpush1.msra.mxu0 %v802
  %916 = vmatprep.subr.mxu0 %v800
  %917 = vmatpush1.msra.mxu0 %v799
  %918 = vmatprep.subr.mxu0 %v797
  %919 = vmatpush1.msra.mxu0 %v796
  %920 = vmatprep.subr.mxu0 %v794
  %921 = vmatpush1.msra.mxu0 %v793
  %922 = vmatprep.subr.mxu0 %v791
  %923 = vmatpush1.msra.mxu0 %v790
  %924 = vmatprep.subr.mxu0 %v788
  %925 = vmatpush1.msra.mxu0 %v787
  %926 = vmatprep.subr.mxu0 %v785
  %927 = vmatpush1.msra.mxu0 %v784
  %928 = vmatprep.subr.mxu0 %v782
  %929 = vmatpush1.msra.mxu0 %v781
  %930 = vmatprep.subr.mxu0 %v779
  %931 = vmatpush1.msra.mxu0 %v778
  %932 = vmatprep.subr.mxu0 %v776
  %933 = vmatpush1.msra.mxu0 %v775
  %934 = vmatprep.subr.mxu0 %v869
  %935 = vmatpush2.msra.mxu0 %v868
  %936 = vmatprep.subr.mxu0 %v866
  %937 = vmatpush2.msra.mxu0 %v865
  %938 = vmatprep.subr.mxu0 %v863
  %939 = vmatpush2.msra.mxu0 %v862
  %940 = vmatprep.subr.mxu0 %v860
  %941 = vmatpush2.msra.mxu0 %v859
  %942 = vmatprep.subr.mxu0 %v857
  %943 = vmatpush2.msra.mxu0 %v856
  %944 = vmatprep.subr.mxu0 %v854
  %945 = vmatpush2.msra.mxu0 %v853
  %946 = vmatprep.subr.mxu0 %v851
  %947 = vmatpush2.msra.mxu0 %v850
  %948 = vmatprep.subr.mxu0 %v848
  %949 = vmatpush2.msra.mxu0 %v847
  %950 = vmatprep.subr.mxu0 %v845
  %951 = vmatpush2.msra.mxu0 %v844
  %952 = vmatprep.subr.mxu0 %v842
  %953 = vmatpush2.msra.mxu0 %v841
  %954 = vmatprep.subr.mxu0 %v839
  %955 = vmatpush2.msra.mxu0 %v838
  %956 = vmatprep.subr.mxu0 %v836
  %957 = vmatpush2.msra.mxu0 %v835
  %958 = vmatprep.subr.mxu0 %v833
  %959 = vmatpush2.msra.mxu0 %v832
  %960 = vmatprep.subr.mxu0 %v830
  %961 = vmatpush2.msra.mxu0 %v829
  %962 = vmatprep.subr.mxu0 %v827
  %963 = vmatpush2.msra.mxu0 %v826
  %964 = vmatprep.subr.mxu0 %v824
  %965 = vmatpush2.msra.mxu0 %v823
  %966 = vmatprep.mubr.f32.mxu0 %v770
  %967 = vmatmul.mubr.f32.gmra.mxu0 %v769
  %v968 = vpop.f32.mrf.mxu0
  %v969 = vadd.f32 %v888, %v968
  %v970 = vpop.f32.mrf.mxu0
  %v971 = vadd.f32 %v888, %v970
  %972 = vmatprep.mubr.f32.mxu0 %v773
  %973 = vmatmul.mubr.f32.gmra.mxu0 %v772
  %v974 = vpop.f32.mrf.mxu0
  %v975 = vadd.f32 %v893, %v974
  %v976 = vpop.f32.mrf.mxu0
  %v977 = vadd.f32 %v893, %v976
  %978 = vdwg.mxu0
  %979 = vmatprep.subr.mxu0 0.0
  %980 = vmatpush1.msra.mxu0 0.0
  %981 = vmatprep.subr.mxu0 0.0
  %982 = vmatpush1.msra.mxu0 0.0
  %983 = vmatprep.subr.mxu0 0.0
  %984 = vmatpush1.msra.mxu0 0.0
  %985 = vmatprep.subr.mxu0 0.0
  %986 = vmatpush1.msra.mxu0 0.0
  %987 = vmatprep.subr.mxu0 0.0
  %988 = vmatpush1.msra.mxu0 0.0
  %989 = vmatprep.subr.mxu0 0.0
  %990 = vmatpush1.msra.mxu0 0.0
  %991 = vmatprep.subr.mxu0 0.0
  %992 = vmatpush1.msra.mxu0 0.0
  %993 = vmatprep.subr.mxu0 0.0
  %994 = vmatpush1.msra.mxu0 0.0
  %995 = vmatprep.subr.mxu0 0.0
  %996 = vmatpush1.msra.mxu0 0.0
  %997 = vmatprep.subr.mxu0 0.0
  %998 = vmatpush1.msra.mxu0 0.0
  %999 = vmatprep.subr.mxu0 0.0
  %1000 = vmatpush1.msra.mxu0 0.0
  %1001 = vmatprep.subr.mxu0 0.0
  %1002 = vmatpush1.msra.mxu0 0.0
  %1003 = vmatprep.subr.mxu0 %v881
  %1004 = vmatpush1.msra.mxu0 %v880
  %1005 = vmatprep.subr.mxu0 %v878
  %1006 = vmatpush1.msra.mxu0 %v877
  %1007 = vmatprep.subr.mxu0 %v875
  %1008 = vmatpush1.msra.mxu0 %v874
  %1009 = vmatprep.subr.mxu0 %v872
  %1010 = vmatpush1.msra.mxu0 %v871
  %1011 = vmatprep.subr.mxu0 0.0
  %1012 = vmatpush2.msra.mxu0 0.0
  %1013 = vmatprep.subr.mxu0 0.0
  %1014 = vmatpush2.msra.mxu0 0.0
  %1015 = vmatprep.subr.mxu0 0.0
  %1016 = vmatpush2.msra.mxu0 0.0
  %1017 = vmatprep.subr.mxu0 0.0
  %1018 = vmatpush2.msra.mxu0 0.0
  %1019 = vmatprep.subr.mxu0 0.0
  %1020 = vmatpush2.msra.mxu0 0.0
  %1021 = vmatprep.subr.mxu0 0.0
  %1022 = vmatpush2.msra.mxu0 0.0
  %1023 = vmatprep.subr.mxu0 0.0
  %1024 = vmatpush2.msra.mxu0 0.0
  %1025 = vmatprep.subr.mxu0 0.0
  %1026 = vmatpush2.msra.mxu0 0.0
  %1027 = vmatprep.subr.mxu0 0.0
  %1028 = vmatpush2.msra.mxu0 0.0
  %1029 = vmatprep.subr.mxu0 0.0
  %1030 = vmatpush2.msra.mxu0 0.0
  %1031 = vmatprep.subr.mxu0 0.0
  %1032 = vmatpush2.msra.mxu0 0.0
  %1033 = vmatprep.subr.mxu0 0.0
  %1034 = vmatpush2.msra.mxu0 0.0
  %1035 = vmatprep.subr.mxu0 0.0
  %1036 = vmatpush2.msra.mxu0 0.0
  %1037 = vmatprep.subr.mxu0 0.0
  %1038 = vmatpush2.msra.mxu0 0.0
  %1039 = vmatprep.subr.mxu0 0.0
  %1040 = vmatpush2.msra.mxu0 0.0
  %1041 = vmatprep.subr.mxu0 0.0
  %1042 = vmatpush2.msra.mxu0 0.0
  %1043 = vmatprep.mubr.f32.mxu0 0.0
  %1044 = vmatmul.mubr.f32.gmra.mxu0 %v897
  %v1045 = vpop.f32.mrf.mxu0
  %v1046 = vadd.f32 %v969, %v1045
  %v1047 = vpop.f32.mrf.mxu0
  %v1048 = vadd.f32 %v971, %v1047
  %1049 = vmatprep.mubr.f32.mxu0 0.0
  %1050 = vmatmul.mubr.f32.gmra.mxu0 %v900
  %v1051 = vpop.f32.mrf.mxu0
  %v1052 = vadd.f32 %v975, %v1051
  %v1053 = vpop.f32.mrf.mxu0
  %v1054 = vadd.f32 %v977, %v1053
  %1055 = vdwg.mxu0
  %1056 = vmatprep.subr.mxu0 0.0
  %1057 = vmatpush1.msra.mxu0 %v822
  %1058 = vmatprep.subr.mxu0 0.0
  %1059 = vmatpush1.msra.mxu0 %v819
  %1060 = vmatprep.subr.mxu0 0.0
  %1061 = vmatpush1.msra.mxu0 %v816
  %1062 = vmatprep.subr.mxu0 0.0
  %1063 = vmatpush1.msra.mxu0 %v813
  %1064 = vmatprep.subr.mxu0 0.0
  %1065 = vmatpush1.msra.mxu0 %v810
  %1066 = vmatprep.subr.mxu0 0.0
  %1067 = vmatpush1.msra.mxu0 %v807
  %1068 = vmatprep.subr.mxu0 0.0
  %1069 = vmatpush1.msra.mxu0 %v804
  %1070 = vmatprep.subr.mxu0 0.0
  %1071 = vmatpush1.msra.mxu0 %v801
  %1072 = vmatprep.subr.mxu0 0.0
  %1073 = vmatpush1.msra.mxu0 %v798
  %1074 = vmatprep.subr.mxu0 0.0
  %1075 = vmatpush1.msra.mxu0 %v795
  %1076 = vmatprep.subr.mxu0 0.0
  %1077 = vmatpush1.msra.mxu0 %v792
  %1078 = vmatprep.subr.mxu0 0.0
  %1079 = vmatpush1.msra.mxu0 %v789
  %1080 = vmatprep.subr.mxu0 0.0
  %1081 = vmatpush1.msra.mxu0 %v786
  %1082 = vmatprep.subr.mxu0 0.0
  %1083 = vmatpush1.msra.mxu0 %v783
  %1084 = vmatprep.subr.mxu0 0.0
  %1085 = vmatpush1.msra.mxu0 %v780
  %1086 = vmatprep.subr.mxu0 0.0
  %1087 = vmatpush1.msra.mxu0 %v777
  %1088 = vmatprep.subr.mxu0 0.0
  %1089 = vmatpush2.msra.mxu0 %v870
  %1090 = vmatprep.subr.mxu0 0.0
  %1091 = vmatpush2.msra.mxu0 %v867
  %1092 = vmatprep.subr.mxu0 0.0
  %1093 = vmatpush2.msra.mxu0 %v864
  %1094 = vmatprep.subr.mxu0 0.0
  %1095 = vmatpush2.msra.mxu0 %v861
  %1096 = vmatprep.subr.mxu0 0.0
  %1097 = vmatpush2.msra.mxu0 %v858
  %1098 = vmatprep.subr.mxu0 0.0
  %1099 = vmatpush2.msra.mxu0 %v855
  %1100 = vmatprep.subr.mxu0 0.0
  %1101 = vmatpush2.msra.mxu0 %v852
  %1102 = vmatprep.subr.mxu0 0.0
  %1103 = vmatpush2.msra.mxu0 %v849
  %1104 = vmatprep.subr.mxu0 0.0
  %1105 = vmatpush2.msra.mxu0 %v846
  %1106 = vmatprep.subr.mxu0 0.0
  %1107 = vmatpush2.msra.mxu0 %v843
  %1108 = vmatprep.subr.mxu0 0.0
  %1109 = vmatpush2.msra.mxu0 %v840
  %1110 = vmatprep.subr.mxu0 0.0
  %1111 = vmatpush2.msra.mxu0 %v837
  %1112 = vmatprep.subr.mxu0 0.0
  %1113 = vmatpush2.msra.mxu0 %v834
  %1114 = vmatprep.subr.mxu0 0.0
  %1115 = vmatpush2.msra.mxu0 %v831
  %1116 = vmatprep.subr.mxu0 0.0
  %1117 = vmatpush2.msra.mxu0 %v828
  %1118 = vmatprep.subr.mxu0 0.0
  %1119 = vmatpush2.msra.mxu0 %v825
  %1120 = vmatprep.mubr.f32.mxu0 %v770
  %1121 = vmatmul.mubr.f32.gmra.mxu0 %v769
  %v1122 = vpop.f32.mrf.mxu0
  %v1123 = vadd.f32 %v888, %v1122
  %v1124 = vpop.f32.mrf.mxu0
  %1125 = vmatprep.mubr.f32.mxu0 %v773
  %1126 = vmatmul.mubr.f32.gmra.mxu0 %v772
  %v1127 = vpop.f32.mrf.mxu0
  %v1128 = vadd.f32 %v893, %v1127
  %v1129 = vpop.f32.mrf.mxu0
  %1130 = vdwg.mxu0
  %1131 = vmatprep.subr.mxu0 0.0
  %1132 = vmatpush1.msra.mxu0 0.0
  %1133 = vmatprep.subr.mxu0 0.0
  %1134 = vmatpush1.msra.mxu0 0.0
  %1135 = vmatprep.subr.mxu0 0.0
  %1136 = vmatpush1.msra.mxu0 0.0
  %1137 = vmatprep.subr.mxu0 0.0
  %1138 = vmatpush1.msra.mxu0 0.0
  %1139 = vmatprep.subr.mxu0 0.0
  %1140 = vmatpush1.msra.mxu0 0.0
  %1141 = vmatprep.subr.mxu0 0.0
  %1142 = vmatpush1.msra.mxu0 0.0
  %1143 = vmatprep.subr.mxu0 0.0
  %1144 = vmatpush1.msra.mxu0 0.0
  %1145 = vmatprep.subr.mxu0 0.0
  %1146 = vmatpush1.msra.mxu0 0.0
  %1147 = vmatprep.subr.mxu0 0.0
  %1148 = vmatpush1.msra.mxu0 0.0
  %1149 = vmatprep.subr.mxu0 0.0
  %1150 = vmatpush1.msra.mxu0 0.0
  %1151 = vmatprep.subr.mxu0 0.0
  %1152 = vmatpush1.msra.mxu0 0.0
  %1153 = vmatprep.subr.mxu0 0.0
  %1154 = vmatpush1.msra.mxu0 0.0
  %1155 = vmatprep.subr.mxu0 0.0
  %1156 = vmatpush1.msra.mxu0 %v882
  %1157 = vmatprep.subr.mxu0 0.0
  %1158 = vmatpush1.msra.mxu0 %v879
  %1159 = vmatprep.subr.mxu0 0.0
  %1160 = vmatpush1.msra.mxu0 %v876
  %1161 = vmatprep.subr.mxu0 0.0
  %1162 = vmatpush1.msra.mxu0 %v873
  %1163 = vmatprep.subr.mxu0 0.0
  %1164 = vmatpush2.msra.mxu0 0.0
  %1165 = vmatprep.subr.mxu0 0.0
  %1166 = vmatpush2.msra.mxu0 0.0
  %1167 = vmatprep.subr.mxu0 0.0
  %1168 = vmatpush2.msra.mxu0 0.0
  %1169 = vmatprep.subr.mxu0 0.0
  %1170 = vmatpush2.msra.mxu0 0.0
  %1171 = vmatprep.subr.mxu0 0.0
  %1172 = vmatpush2.msra.mxu0 0.0
  %1173 = vmatprep.subr.mxu0 0.0
  %1174 = vmatpush2.msra.mxu0 0.0
  %1175 = vmatprep.subr.mxu0 0.0
  %1176 = vmatpush2.msra.mxu0 0.0
  %1177 = vmatprep.subr.mxu0 0.0
  %1178 = vmatpush2.msra.mxu0 0.0
  %1179 = vmatprep.subr.mxu0 0.0
  %1180 = vmatpush2.msra.mxu0 0.0
  %1181 = vmatprep.subr.mxu0 0.0
  %1182 = vmatpush2.msra.mxu0 0.0
  %1183 = vmatprep.subr.mxu0 0.0
  %1184 = vmatpush2.msra.mxu0 0.0
  %1185 = vmatprep.subr.mxu0 0.0
  %1186 = vmatpush2.msra.mxu0 0.0
  %1187 = vmatprep.subr.mxu0 0.0
  %1188 = vmatpush2.msra.mxu0 0.0
  %1189 = vmatprep.subr.mxu0 0.0
  %1190 = vmatpush2.msra.mxu0 0.0
  %1191 = vmatprep.subr.mxu0 0.0
  %1192 = vmatpush2.msra.mxu0 0.0
  %1193 = vmatprep.subr.mxu0 0.0
  %1194 = vmatpush2.msra.mxu0 0.0
  %1195 = vmatprep.mubr.f32.mxu0 0.0
  %1196 = vmatmul.mubr.f32.gmra.mxu0 %v897
  %v1197 = vpop.f32.mrf.mxu0
  %v1198 = vadd.f32 %v1123, %v1197
  %v1199 = vpop.f32.mrf.mxu0
  %1200 = vmatprep.mubr.f32.mxu0 0.0
  %1201 = vmatmul.mubr.f32.gmra.mxu0 %v900
  %v1202 = vpop.f32.mrf.mxu0
  %v1203 = vadd.f32 %v1128, %v1202
  %v1204 = vpop.f32.mrf.mxu0
  %1205 = vdwg.mxu0
  %v1206 = vmax.f32 %v1046, 0.0
  %v1207 = vmax.f32 %v1048, 0.0
  %v1208 = vmax.f32 %v1198, 0.0
  %v1209 = vmax.f32 %v1052, 0.0
  %v1210 = vmax.f32 %v1054, 0.0
  %v1211 = vmax.f32 %v1203, 0.0
  %v1212 = vld [vmem:[%s2] sm:$0x7]
  %v1214 = vlaneseq
  %v1215 = vshrl.u32 %v1214, 7
  %v1216 = vsub.s32 0, %v1215
  %v1217 = vrot.slane %v1212, %v1216
  %v1218 = vlaneseq
  %v1219 = vshrl.u32 %v1218, 7
  %v1220 = vsub.s32 1, %v1219
  %v1221 = vrot.slane %v1212, %v1220
  %v1222 = vlaneseq
  %v1223 = vshrl.u32 %v1222, 7
  %v1224 = vsub.s32 2, %v1223
  %v1225 = vrot.slane %v1212, %v1224
  %v1229 = vmul.f32 %v1206, %v1217
  %v1230 = vmul.f32 %v1207, %v1221
  %v1231 = vmul.f32 %v1208, %v1225
  %v1232 = vmul.f32 %v1209, %v1217
  %v1233 = vmul.f32 %v1210, %v1221
  %v1234 = vmul.f32 %v1211, %v1225
  %vm1235 = vcmask 187392
  %1236 = vst.msk [vmem:[#allocation2] sm:$0xff] %vm1235, 0.0
  %1237 = vst.msk [vmem:[#allocation2 + $0x20] sm:$0xff] %vm1235, 0.0
  %1244 = vrot.lane.b32.xlu0 %v1229, 23
  %v1245 = vpop.permute.xlu0 %1244
  %1246 = vrot.lane.b32.xlu0 %v1230, 23
  %v1247 = vpop.permute.xlu0 %1246
  %1248 = vrot.lane.b32.xlu0 %v1231, 23
  %v1249 = vpop.permute.xlu0 %1248
  %1250 = vrot.lane.b32.xlu0 %v1232, 23
  %v1251 = vpop.permute.xlu0 %1250
  %1252 = vrot.lane.b32.xlu0 %v1233, 23
  %v1253 = vpop.permute.xlu0 %1252
  %1254 = vrot.lane.b32.xlu0 %v1234, 23
  %v1255 = vpop.permute.xlu0 %1254
  %v1256 = vsel %vm1235, %v1245, %v1247
  %v1257 = vsel %vm1235, %v1247, %v1249
  %v1258 = vsel %vm1235, %v1251, %v1253
  %v1259 = vsel %vm1235, %v1253, %v1255
  %vm1266 = vcmask 1047736
  %1267 = vst.msk [vmem:[#allocation2] sm:$0xff] %vm1266, %v1245
  %1268 = vst [vmem:[#allocation2 + $0x8] sm:$0xff] %v1256
  %vm1269 = vcmask 433152
  %1270 = vst.msk [vmem:[#allocation2 + $0x10] sm:$0xff] %vm1269, %v1257
  %1271 = vst.msk [vmem:[#allocation2 + $0x20] sm:$0xff] %vm1266, %v1251
  %1272 = vst [vmem:[#allocation2 + $0x28] sm:$0xff] %v1258
  %1273 = vst.msk [vmem:[#allocation2 + $0x30] sm:$0xff] %vm1269, %v1259
  %vm1274 = vcmask 621992
  %1275 = vst.msk [vmem:[#allocation2 + $0x10] sm:$0xff] %vm1274, 0.0
  %1276 = vst.msk [vmem:[#allocation2 + $0x30] sm:$0xff] %vm1274, 0.0
  %v1277 = vld [vmem:[#allocation2] sm:$0xff]
  %v1278 = vld [vmem:[#allocation2 + $0x8] sm:$0xff]
  %v1279 = vld [vmem:[#allocation2 + $0x20] sm:$0xff]
  %v1280 = vld [vmem:[#allocation2 + $0x28] sm:$0xff]
  %1281 = vst [vmem:[#allocation4] sm:$0xff] %v1277
  %vm1282 = vcmask 752640
  %1283 = vst.msk [vmem:[#allocation4 + $0x8] sm:$0xff] %vm1282, %v1278
  %1284 = vst [vmem:[#allocation4 + $0x18] sm:$0xff] %v1279
  %1285 = vst.msk [vmem:[#allocation4 + $0x20] sm:$0xff] %vm1282, %v1280
  %v1286 = vld [vmem:[#allocation2] sm:$0xff]
  %v1287 = vld [vmem:[#allocation2 + $0x8] sm:$0xff]
  %v1288 = vld [vmem:[#allocation2 + $0x20] sm:$0xff]
  %v1289 = vld [vmem:[#allocation2 + $0x28] sm:$0xff]
  %1294 = vrot.lane.b32.xlu0 %v1286, 127
  %v1295 = vpop.permute.xlu0 %1294
  %1296 = vrot.lane.b32.xlu0 %v1287, 127
  %v1297 = vpop.permute.xlu0 %1296
  %1298 = vrot.lane.b32.xlu0 %v1288, 127
  %v1299 = vpop.permute.xlu0 %1298
  %1300 = vrot.lane.b32.xlu0 %v1289, 127
  %v1301 = vpop.permute.xlu0 %1300
  %v1302 = vsel %vm66, %v1295, %v1297
  %v1303 = vsel %vm66, %v1299, %v1301
  %1308 = vst [vmem:[#allocation4 + $0x30] sm:$0xff] %v1302
  %1309 = vst.msk [vmem:[#allocation4 + $0x38] sm:$0xff] %vm1282, %v1297
  %1310 = vst [vmem:[#allocation4 + $0x48] sm:$0xff] %v1303
  %1311 = vst.msk [vmem:[#allocation4 + $0x50] sm:$0xff] %vm1282, %v1301
  %v1312 = vld [vmem:[#allocation2] sm:$0xff]
  %v1313 = vld [vmem:[#allocation2 + $0x8] sm:$0xff]
  %v1314 = vld [vmem:[#allocation2 + $0x20] sm:$0xff]
  %v1315 = vld [vmem:[#allocation2 + $0x28] sm:$0xff]
  %1320 = vrot.lane.b32.xlu0 %v1312, 126
  %v1321 = vpop.permute.xlu0 %1320
  %1322 = vrot.lane.b32.xlu0 %v1313, 126
  %v1323 = vpop.permute.xlu0 %1322
  %1324 = vrot.lane.b32.xlu0 %v1314, 126
  %v1325 = vpop.permute.xlu0 %1324
  %1326 = vrot.lane.b32.xlu0 %v1315, 126
  %v1327 = vpop.permute.xlu0 %1326
  %v1328 = vsel %vm107, %v1321, %v1323
  %v1329 = vsel %vm107, %v1325, %v1327
  %1334 = vst [vmem:[#allocation4 + $0x60] sm:$0xff] %v1328
  %1335 = vst.msk [vmem:[#allocation4 + $0x68] sm:$0xff] %vm1282, %v1323
  %1336 = vst [vmem:[#allocation4 + $0x78] sm:$0xff] %v1329
  %1337 = vst.msk [vmem:[#allocation4 + $0x80] sm:$0xff] %vm1282, %v1327
  %v1338 = vld [vmem:[#allocation2] sm:$0xff]
  %v1339 = vld [vmem:[#allocation2 + $0x8] sm:$0xff]
  %v1340 = vld [vmem:[#allocation2 + $0x20] sm:$0xff]
  %v1341 = vld [vmem:[#allocation2 + $0x28] sm:$0xff]
  %1346 = vrot.lane.b32.xlu0 %v1338, 106
  %v1347 = vpop.permute.xlu0 %1346
  %1348 = vrot.lane.b32.xlu0 %v1339, 106
  %v1349 = vpop.permute.xlu0 %1348
  %1350 = vrot.lane.b32.xlu0 %v1340, 106
  %v1351 = vpop.permute.xlu0 %1350
  %1352 = vrot.lane.b32.xlu0 %v1341, 106
  %v1353 = vpop.permute.xlu0 %1352
  %v1354 = vsel %vm148, %v1347, %v1349
  %v1355 = vsel %vm148, %v1351, %v1353
  %1360 = vst [vmem:[#allocation4 + $0x90] sm:$0xff] %v1354
  %1361 = vst.msk [vmem:[#allocation4 + $0x98] sm:$0xff] %vm1282, %v1349
  %1362 = vst [vmem:[#allocation4 + $0xa8] sm:$0xff] %v1355
  %1363 = vst.msk [vmem:[#allocation4 + $0xb0] sm:$0xff] %vm1282, %v1353
  %v1364 = vld [vmem:[#allocation2] sm:$0xff]
  %v1365 = vld [vmem:[#allocation2 + $0x8] sm:$0xff]
  %v1366 = vld [vmem:[#allocation2 + $0x20] sm:$0xff]
  %v1367 = vld [vmem:[#allocation2 + $0x28] sm:$0xff]
  %1372 = vrot.lane.b32.xlu0 %v1364, 105
  %v1373 = vpop.permute.xlu0 %1372
  %1374 = vrot.lane.b32.xlu0 %v1365, 105
  %v1375 = vpop.permute.xlu0 %1374
  %1376 = vrot.lane.b32.xlu0 %v1366, 105
  %v1377 = vpop.permute.xlu0 %1376
  %1378 = vrot.lane.b32.xlu0 %v1367, 105
  %v1379 = vpop.permute.xlu0 %1378
  %v1380 = vsel %vm189, %v1373, %v1375
  %v1381 = vsel %vm189, %v1377, %v1379
  %1386 = vst [vmem:[#allocation4 + $0xc0] sm:$0xff] %v1380
  %1387 = vst.msk [vmem:[#allocation4 + $0xc8] sm:$0xff] %vm1282, %v1375
  %1388 = vst [vmem:[#allocation4 + $0xd8] sm:$0xff] %v1381
  %1389 = vst.msk [vmem:[#allocation4 + $0xe0] sm:$0xff] %vm1282, %v1379
  %v1390 = vld [vmem:[#allocation2] sm:$0xff]
  %v1391 = vld [vmem:[#allocation2 + $0x8] sm:$0xff]
  %v1392 = vld [vmem:[#allocation2 + $0x20] sm:$0xff]
  %v1393 = vld [vmem:[#allocation2 + $0x28] sm:$0xff]
  %1398 = vrot.lane.b32.xlu0 %v1390, 104
  %v1399 = vpop.permute.xlu0 %1398
  %1400 = vrot.lane.b32.xlu0 %v1391, 104
  %v1401 = vpop.permute.xlu0 %1400
  %1402 = vrot.lane.b32.xlu0 %v1392, 104
  %v1403 = vpop.permute.xlu0 %1402
  %1404 = vrot.lane.b32.xlu0 %v1393, 104
  %v1405 = vpop.permute.xlu0 %1404
  %v1406 = vsel %vm230, %v1399, %v1401
  %v1407 = vsel %vm230, %v1403, %v1405
  %1412 = vst [vmem:[#allocation4 + $0xf0] sm:$0xff] %v1406
  %1413 = vst.msk [vmem:[#allocation4 + $0xf8] sm:$0xff] %vm1282, %v1401
  %1414 = vst [vmem:[#allocation4 + $0x108] sm:$0xff] %v1407
  %1415 = vst.msk [vmem:[#allocation4 + $0x110] sm:$0xff] %vm1282, %v1405
  %v1416 = vld [vmem:[#allocation2] sm:$0xff]
  %v1417 = vld [vmem:[#allocation2 + $0x8] sm:$0xff]
  %v1418 = vld [vmem:[#allocation2 + $0x10] sm:$0xff]
  %v1419 = vld [vmem:[#allocation2 + $0x20] sm:$0xff]
  %v1420 = vld [vmem:[#allocation2 + $0x28] sm:$0xff]
  %v1421 = vld [vmem:[#allocation2 + $0x30] sm:$0xff]
  %1428 = vrot.lane.b32.xlu0 %v1416, 84
  %v1429 = vpop.permute.xlu0 %1428
  %1430 = vrot.lane.b32.xlu0 %v1417, 84
  %v1431 = vpop.permute.xlu0 %1430
  %1432 = vrot.lane.b32.xlu0 %v1418, 84
  %v1433 = vpop.permute.xlu0 %1432
  %1434 = vrot.lane.b32.xlu0 %v1419, 84
  %v1435 = vpop.permute.xlu0 %1434
  %1436 = vrot.lane.b32.xlu0 %v1420, 84
  %v1437 = vpop.permute.xlu0 %1436
  %1438 = vrot.lane.b32.xlu0 %v1421, 84
  %v1439 = vpop.permute.xlu0 %1438
  %v1440 = vsel %vm271, %v1429, %v1431
  %v1441 = vsel %vm271, %v1431, %v1433
  %v1442 = vsel %vm271, %v1435, %v1437
  %v1443 = vsel %vm271, %v1437, %v1439
  %1448 = vst [vmem:[#allocation4 + $0x120] sm:$0xff] %v1440
  %1449 = vst.msk [vmem:[#allocation4 + $0x128] sm:$0xff] %vm1282, %v1441
  %1450 = vst [vmem:[#allocation4 + $0x138] sm:$0xff] %v1442
  %1451 = vst.msk [vmem:[#allocation4 + $0x140] sm:$0xff] %vm1282, %v1443
  %v1452 = vld [vmem:[#allocation2] sm:$0xff]
  %v1453 = vld [vmem:[#allocation2 + $0x8] sm:$0xff]
  %v1454 = vld [vmem:[#allocation2 + $0x10] sm:$0xff]
  %v1455 = vld [vmem:[#allocation2 + $0x20] sm:$0xff]
  %v1456 = vld [vmem:[#allocation2 + $0x28] sm:$0xff]
  %v1457 = vld [vmem:[#allocation2 + $0x30] sm:$0xff]
  %1464 = vrot.lane.b32.xlu0 %v1452, 83
  %v1465 = vpop.permute.xlu0 %1464
  %1466 = vrot.lane.b32.xlu0 %v1453, 83
  %v1467 = vpop.permute.xlu0 %1466
  %1468 = vrot.lane.b32.xlu0 %v1454, 83
  %v1469 = vpop.permute.xlu0 %1468
  %1470 = vrot.lane.b32.xlu0 %v1455, 83
  %v1471 = vpop.permute.xlu0 %1470
  %1472 = vrot.lane.b32.xlu0 %v1456, 83
  %v1473 = vpop.permute.xlu0 %1472
  %1474 = vrot.lane.b32.xlu0 %v1457, 83
  %v1475 = vpop.permute.xlu0 %1474
  %v1476 = vsel %vm312, %v1465, %v1467
  %v1477 = vsel %vm312, %v1467, %v1469
  %v1478 = vsel %vm312, %v1471, %v1473
  %v1479 = vsel %vm312, %v1473, %v1475
  %1484 = vst [vmem:[#allocation4 + $0x150] sm:$0xff] %v1476
  %1485 = vst.msk [vmem:[#allocation4 + $0x158] sm:$0xff] %vm1282, %v1477
  %1486 = vst [vmem:[#allocation4 + $0x168] sm:$0xff] %v1478
  %1487 = vst.msk [vmem:[#allocation4 + $0x170] sm:$0xff] %vm1282, %v1479
  %v1488 = vld [vmem:[#allocation2] sm:$0xff]
  %v1489 = vld [vmem:[#allocation2 + $0x8] sm:$0xff]
  %v1490 = vld [vmem:[#allocation2 + $0x10] sm:$0xff]
  %v1491 = vld [vmem:[#allocation2 + $0x20] sm:$0xff]
  %v1492 = vld [vmem:[#allocation2 + $0x28] sm:$0xff]
  %v1493 = vld [vmem:[#allocation2 + $0x30] sm:$0xff]
  %1500 = vrot.lane.b32.xlu0 %v1488, 82
  %v1501 = vpop.permute.xlu0 %1500
  %1502 = vrot.lane.b32.xlu0 %v1489, 82
  %v1503 = vpop.permute.xlu0 %1502
  %1504 = vrot.lane.b32.xlu0 %v1490, 82
  %v1505 = vpop.permute.xlu0 %1504
  %1506 = vrot.lane.b32.xlu0 %v1491, 82
  %v1507 = vpop.permute.xlu0 %1506
  %1508 = vrot.lane.b32.xlu0 %v1492, 82
  %v1509 = vpop.permute.xlu0 %1508
  %1510 = vrot.lane.b32.xlu0 %v1493, 82
  %v1511 = vpop.permute.xlu0 %1510
  %v1512 = vsel %vm353, %v1501, %v1503
  %v1513 = vsel %vm353, %v1503, %v1505
  %v1514 = vsel %vm353, %v1507, %v1509
  %v1515 = vsel %vm353, %v1509, %v1511
  %1520 = vst [vmem:[#allocation4 + $0x180] sm:$0xff] %v1512
  %1521 = vst.msk [vmem:[#allocation4 + $0x188] sm:$0xff] %vm1282, %v1513
  %1522 = vst [vmem:[#allocation4 + $0x198] sm:$0xff] %v1514
  %1523 = vst.msk [vmem:[#allocation4 + $0x1a0] sm:$0xff] %vm1282, %v1515
  %v1524 = vld [vmem:[#allocation2] sm:$0xff]
  %v1525 = vld [vmem:[#allocation2 + $0x8] sm:$0xff]
  %v1526 = vld [vmem:[#allocation2 + $0x10] sm:$0xff]
  %v1527 = vld [vmem:[#allocation2 + $0x20] sm:$0xff]
  %v1528 = vld [vmem:[#allocation2 + $0x28] sm:$0xff]
  %v1529 = vld [vmem:[#allocation2 + $0x30] sm:$0xff]
  %1536 = vrot.lane.b32.xlu0 %v1524, 62
  %v1537 = vpop.permute.xlu0 %1536
  %1538 = vrot.lane.b32.xlu0 %v1525, 62
  %v1539 = vpop.permute.xlu0 %1538
  %1540 = vrot.lane.b32.xlu0 %v1526, 62
  %v1541 = vpop.permute.xlu0 %1540
  %1542 = vrot.lane.b32.xlu0 %v1527, 62
  %v1543 = vpop.permute.xlu0 %1542
  %1544 = vrot.lane.b32.xlu0 %v1528, 62
  %v1545 = vpop.permute.xlu0 %1544
  %1546 = vrot.lane.b32.xlu0 %v1529, 62
  %v1547 = vpop.permute.xlu0 %1546
  %v1548 = vsel %vm394, %v1537, %v1539
  %v1549 = vsel %vm394, %v1539, %v1541
  %v1550 = vsel %vm394, %v1543, %v1545
  %v1551 = vsel %vm394, %v1545, %v1547
  %1556 = vst [vmem:[#allocation4 + $0x1b0] sm:$0xff] %v1548
  %1557 = vst.msk [vmem:[#allocation4 + $0x1b8] sm:$0xff] %vm1282, %v1549
  %1558 = vst [vmem:[#allocation4 + $0x1c8] sm:$0xff] %v1550
  %1559 = vst.msk [vmem:[#allocation4 + $0x1d0] sm:$0xff] %vm1282, %v1551
  %v1560 = vld [vmem:[#allocation2] sm:$0xff]
  %v1561 = vld [vmem:[#allocation2 + $0x8] sm:$0xff]
  %v1562 = vld [vmem:[#allocation2 + $0x10] sm:$0xff]
  %v1563 = vld [vmem:[#allocation2 + $0x20] sm:$0xff]
  %v1564 = vld [vmem:[#allocation2 + $0x28] sm:$0xff]
  %v1565 = vld [vmem:[#allocation2 + $0x30] sm:$0xff]
  %1572 = vrot.lane.b32.xlu0 %v1560, 61
  %v1573 = vpop.permute.xlu0 %1572
  %1574 = vrot.lane.b32.xlu0 %v1561, 61
  %v1575 = vpop.permute.xlu0 %1574
  %1576 = vrot.lane.b32.xlu0 %v1562, 61
  %v1577 = vpop.permute.xlu0 %1576
  %1578 = vrot.lane.b32.xlu0 %v1563, 61
  %v1579 = vpop.permute.xlu0 %1578
  %1580 = vrot.lane.b32.xlu0 %v1564, 61
  %v1581 = vpop.permute.xlu0 %1580
  %1582 = vrot.lane.b32.xlu0 %v1565, 61
  %v1583 = vpop.permute.xlu0 %1582
  %v1584 = vsel %vm435, %v1573, %v1575
  %v1585 = vsel %vm435, %v1575, %v1577
  %v1586 = vsel %vm435, %v1579, %v1581
  %v1587 = vsel %vm435, %v1581, %v1583
  %1592 = vst [vmem:[#allocation4 + $0x1e0] sm:$0xff] %v1584
  %1593 = vst.msk [vmem:[#allocation4 + $0x1e8] sm:$0xff] %vm1282, %v1585
  %1594 = vst [vmem:[#allocation4 + $0x1f8] sm:$0xff] %v1586
  %1595 = vst.msk [vmem:[#allocation4 + $0x200] sm:$0xff] %vm1282, %v1587
  %v1596 = vld [vmem:[#allocation2] sm:$0xff]
  %v1597 = vld [vmem:[#allocation2 + $0x8] sm:$0xff]
  %v1598 = vld [vmem:[#allocation2 + $0x10] sm:$0xff]
  %v1599 = vld [vmem:[#allocation2 + $0x20] sm:$0xff]
  %v1600 = vld [vmem:[#allocation2 + $0x28] sm:$0xff]
  %v1601 = vld [vmem:[#allocation2 + $0x30] sm:$0xff]
  %1608 = vrot.lane.b32.xlu0 %v1596, 60
  %v1609 = vpop.permute.xlu0 %1608
  %1610 = vrot.lane.b32.xlu0 %v1597, 60
  %v1611 = vpop.permute.xlu0 %1610
  %1612 = vrot.lane.b32.xlu0 %v1598, 60
  %v1613 = vpop.permute.xlu0 %1612
  %1614 = vrot.lane.b32.xlu0 %v1599, 60
  %v1615 = vpop.permute.xlu0 %1614
  %1616 = vrot.lane.b32.xlu0 %v1600, 60
  %v1617 = vpop.permute.xlu0 %1616
  %1618 = vrot.lane.b32.xlu0 %v1601, 60
  %v1619 = vpop.permute.xlu0 %1618
  %v1620 = vsel %vm476, %v1609, %v1611
  %v1621 = vsel %vm476, %v1611, %v1613
  %v1622 = vsel %vm476, %v1615, %v1617
  %v1623 = vsel %vm476, %v1617, %v1619
  %1628 = vst [vmem:[#allocation4 + $0x210] sm:$0xff] %v1620
  %1629 = vst.msk [vmem:[#allocation4 + $0x218] sm:$0xff] %vm1282, %v1621
  %1630 = vst [vmem:[#allocation4 + $0x228] sm:$0xff] %v1622
  %1631 = vst.msk [vmem:[#allocation4 + $0x230] sm:$0xff] %vm1282, %v1623
  %v1632 = vld [vmem:[#allocation2] sm:$0xff]
  %v1633 = vld [vmem:[#allocation2 + $0x8] sm:$0xff]
  %v1634 = vld [vmem:[#allocation2 + $0x10] sm:$0xff]
  %v1635 = vld [vmem:[#allocation2 + $0x20] sm:$0xff]
  %v1636 = vld [vmem:[#allocation2 + $0x28] sm:$0xff]
  %v1637 = vld [vmem:[#allocation2 + $0x30] sm:$0xff]
  %1644 = vrot.lane.b32.xlu0 %v1632, 40
  %v1645 = vpop.permute.xlu0 %1644
  %1646 = vrot.lane.b32.xlu0 %v1633, 40
  %v1647 = vpop.permute.xlu0 %1646
  %1648 = vrot.lane.b32.xlu0 %v1634, 40
  %v1649 = vpop.permute.xlu0 %1648
  %1650 = vrot.lane.b32.xlu0 %v1635, 40
  %v1651 = vpop.permute.xlu0 %1650
  %1652 = vrot.lane.b32.xlu0 %v1636, 40
  %v1653 = vpop.permute.xlu0 %1652
  %1654 = vrot.lane.b32.xlu0 %v1637, 40
  %v1655 = vpop.permute.xlu0 %1654
  %v1656 = vsel %vm517, %v1645, %v1647
  %v1657 = vsel %vm517, %v1647, %v1649
  %v1658 = vsel %vm517, %v1651, %v1653
  %v1659 = vsel %vm517, %v1653, %v1655
  %1664 = vst [vmem:[#allocation4 + $0x240] sm:$0xff] %v1656
  %1665 = vst.msk [vmem:[#allocation4 + $0x248] sm:$0xff] %vm1282, %v1657
  %1666 = vst [vmem:[#allocation4 + $0x258] sm:$0xff] %v1658
  %1667 = vst.msk [vmem:[#allocation4 + $0x260] sm:$0xff] %vm1282, %v1659
  %v1668 = vld [vmem:[#allocation2] sm:$0xff]
  %v1669 = vld [vmem:[#allocation2 + $0x8] sm:$0xff]
  %v1670 = vld [vmem:[#allocation2 + $0x10] sm:$0xff]
  %v1671 = vld [vmem:[#allocation2 + $0x20] sm:$0xff]
  %v1672 = vld [vmem:[#allocation2 + $0x28] sm:$0xff]
  %v1673 = vld [vmem:[#allocation2 + $0x30] sm:$0xff]
  %1680 = vrot.lane.b32.xlu0 %v1668, 39
  %v1681 = vpop.permute.xlu0 %1680
  %1682 = vrot.lane.b32.xlu0 %v1669, 39
  %v1683 = vpop.permute.xlu0 %1682
  %1684 = vrot.lane.b32.xlu0 %v1670, 39
  %v1685 = vpop.permute.xlu0 %1684
  %1686 = vrot.lane.b32.xlu0 %v1671, 39
  %v1687 = vpop.permute.xlu0 %1686
  %1688 = vrot.lane.b32.xlu0 %v1672, 39
  %v1689 = vpop.permute.xlu0 %1688
  %1690 = vrot.lane.b32.xlu0 %v1673, 39
  %v1691 = vpop.permute.xlu0 %1690
  %v1692 = vsel %vm558, %v1681, %v1683
  %v1693 = vsel %vm558, %v1683, %v1685
  %v1694 = vsel %vm558, %v1687, %v1689
  %v1695 = vsel %vm558, %v1689, %v1691
  %1700 = vst [vmem:[#allocation4 + $0x270] sm:$0xff] %v1692
  %1701 = vst.msk [vmem:[#allocation4 + $0x278] sm:$0xff] %vm1282, %v1693
  %1702 = vst [vmem:[#allocation4 + $0x288] sm:$0xff] %v1694
  %1703 = vst.msk [vmem:[#allocation4 + $0x290] sm:$0xff] %vm1282, %v1695
  %v1704 = vld [vmem:[#allocation2] sm:$0xff]
  %v1705 = vld [vmem:[#allocation2 + $0x8] sm:$0xff]
  %v1706 = vld [vmem:[#allocation2 + $0x10] sm:$0xff]
  %v1707 = vld [vmem:[#allocation2 + $0x20] sm:$0xff]
  %v1708 = vld [vmem:[#allocation2 + $0x28] sm:$0xff]
  %v1709 = vld [vmem:[#allocation2 + $0x30] sm:$0xff]
  %1716 = vrot.lane.b32.xlu0 %v1704, 38
  %v1717 = vpop.permute.xlu0 %1716
  %1718 = vrot.lane.b32.xlu0 %v1705, 38
  %v1719 = vpop.permute.xlu0 %1718
  %1720 = vrot.lane.b32.xlu0 %v1706, 38
  %v1721 = vpop.permute.xlu0 %1720
  %1722 = vrot.lane.b32.xlu0 %v1707, 38
  %v1723 = vpop.permute.xlu0 %1722
  %1724 = vrot.lane.b32.xlu0 %v1708, 38
  %v1725 = vpop.permute.xlu0 %1724
  %1726 = vrot.lane.b32.xlu0 %v1709, 38
  %v1727 = vpop.permute.xlu0 %1726
  %v1728 = vsel %vm599, %v1717, %v1719
  %v1729 = vsel %vm599, %v1719, %v1721
  %v1730 = vsel %vm599, %v1723, %v1725
  %v1731 = vsel %vm599, %v1725, %v1727
  %1736 = vst [vmem:[#allocation4 + $0x2a0] sm:$0xff] %v1728
  %1737 = vst.msk [vmem:[#allocation4 + $0x2a8] sm:$0xff] %vm1282, %v1729
  %1738 = vst [vmem:[#allocation4 + $0x2b8] sm:$0xff] %v1730
  %1739 = vst.msk [vmem:[#allocation4 + $0x2c0] sm:$0xff] %vm1282, %v1731
  %v1740 = vld [vmem:[#allocation2] sm:$0xff]
  %v1741 = vld [vmem:[#allocation2 + $0x8] sm:$0xff]
  %v1742 = vld [vmem:[#allocation2 + $0x10] sm:$0xff]
  %v1743 = vld [vmem:[#allocation2 + $0x20] sm:$0xff]
  %v1744 = vld [vmem:[#allocation2 + $0x28] sm:$0xff]
  %v1745 = vld [vmem:[#allocation2 + $0x30] sm:$0xff]
  %1752 = vrot.lane.b32.xlu0 %v1740, 18
  %v1753 = vpop.permute.xlu0 %1752
  %1754 = vrot.lane.b32.xlu0 %v1741, 18
  %v1755 = vpop.permute.xlu0 %1754
  %1756 = vrot.lane.b32.xlu0 %v1742, 18
  %v1757 = vpop.permute.xlu0 %1756
  %1758 = vrot.lane.b32.xlu0 %v1743, 18
  %v1759 = vpop.permute.xlu0 %1758
  %1760 = vrot.lane.b32.xlu0 %v1744, 18
  %v1761 = vpop.permute.xlu0 %1760
  %1762 = vrot.lane.b32.xlu0 %v1745, 18
  %v1763 = vpop.permute.xlu0 %1762
  %v1764 = vsel %vm648, %v1753, %v1755
  %v1765 = vsel %vm648, %v1755, %v1757
  %v1766 = vsel %vm648, %v1759, %v1761
  %v1767 = vsel %vm648, %v1761, %v1763
  %1772 = vst [vmem:[#allocation4 + $0x2d0] sm:$0xff] %v1764
  %1773 = vst.msk [vmem:[#allocation4 + $0x2d8] sm:$0xff] %vm1282, %v1765
  %1774 = vst [vmem:[#allocation4 + $0x2e8] sm:$0xff] %v1766
  %1775 = vst.msk [vmem:[#allocation4 + $0x2f0] sm:$0xff] %vm1282, %v1767
  %v1776 = vld [vmem:[#allocation2] sm:$0xff]
  %v1777 = vld [vmem:[#allocation2 + $0x8] sm:$0xff]
  %v1778 = vld [vmem:[#allocation2 + $0x10] sm:$0xff]
  %v1779 = vld [vmem:[#allocation2 + $0x20] sm:$0xff]
  %v1780 = vld [vmem:[#allocation2 + $0x28] sm:$0xff]
  %v1781 = vld [vmem:[#allocation2 + $0x30] sm:$0xff]
  %1788 = vrot.lane.b32.xlu0 %v1776, 17
  %v1789 = vpop.permute.xlu0 %1788
  %1790 = vrot.lane.b32.xlu0 %v1777, 17
  %v1791 = vpop.permute.xlu0 %1790
  %1792 = vrot.lane.b32.xlu0 %v1778, 17
  %v1793 = vpop.permute.xlu0 %1792
  %1794 = vrot.lane.b32.xlu0 %v1779, 17
  %v1795 = vpop.permute.xlu0 %1794
  %1796 = vrot.lane.b32.xlu0 %v1780, 17
  %v1797 = vpop.permute.xlu0 %1796
  %1798 = vrot.lane.b32.xlu0 %v1781, 17
  %v1799 = vpop.permute.xlu0 %1798
  %v1800 = vsel %vm699, %v1789, %v1791
  %v1801 = vsel %vm699, %v1791, %v1793
  %v1802 = vsel %vm699, %v1795, %v1797
  %v1803 = vsel %vm699, %v1797, %v1799
  %1808 = vst [vmem:[#allocation4 + $0x300] sm:$0xff] %v1800
  %1809 = vst.msk [vmem:[#allocation4 + $0x308] sm:$0xff] %vm1282, %v1801
  %1810 = vst [vmem:[#allocation4 + $0x318] sm:$0xff] %v1802
  %1811 = vst.msk [vmem:[#allocation4 + $0x320] sm:$0xff] %vm1282, %v1803
  %v1812 = vld [vmem:[#allocation2] sm:$0xff]
  %v1813 = vld [vmem:[#allocation2 + $0x8] sm:$0xff]
  %v1814 = vld [vmem:[#allocation2 + $0x10] sm:$0xff]
  %v1815 = vld [vmem:[#allocation2 + $0x20] sm:$0xff]
  %v1816 = vld [vmem:[#allocation2 + $0x28] sm:$0xff]
  %v1817 = vld [vmem:[#allocation2 + $0x30] sm:$0xff]
  %1824 = vrot.lane.b32.xlu0 %v1812, 16
  %v1825 = vpop.permute.xlu0 %1824
  %1826 = vrot.lane.b32.xlu0 %v1813, 16
  %v1827 = vpop.permute.xlu0 %1826
  %1828 = vrot.lane.b32.xlu0 %v1814, 16
  %v1829 = vpop.permute.xlu0 %1828
  %1830 = vrot.lane.b32.xlu0 %v1815, 16
  %v1831 = vpop.permute.xlu0 %1830
  %1832 = vrot.lane.b32.xlu0 %v1816, 16
  %v1833 = vpop.permute.xlu0 %1832
  %1834 = vrot.lane.b32.xlu0 %v1817, 16
  %v1835 = vpop.permute.xlu0 %1834
  %v1836 = vsel %vm750, %v1825, %v1827
  %v1837 = vsel %vm750, %v1827, %v1829
  %v1838 = vsel %vm750, %v1831, %v1833
  %v1839 = vsel %vm750, %v1833, %v1835
  %1844 = vst [vmem:[#allocation4 + $0x330] sm:$0xff] %v1836
  %1845 = vst.msk [vmem:[#allocation4 + $0x338] sm:$0xff] %vm1282, %v1837
  %1846 = vst [vmem:[#allocation4 + $0x348] sm:$0xff] %v1838
  %1847 = vst.msk [vmem:[#allocation4 + $0x350] sm:$0xff] %vm1282, %v1839
  %s1848 = scalar_lea.vmem %s3, 48
  %v1849 = vld [vmem:[%s1848] sm:$0xff]
  %v1850 = vld [vmem:[%s1848 + $0x8] sm:$0xff]
  %v1851 = vld [vmem:[%s1848 + $0x10] sm:$0xff]
  %v1852 = vld [vmem:[%s1848 + $0x18] sm:$0xff]
  %v1853 = vld [vmem:[%s1848 + $0x20] sm:$0xff]
  %v1854 = vld [vmem:[%s1848 + $0x28] sm:$0xff]
  %v1855 = vld [vmem:[#allocation4] sm:$0xff]
  %v1856 = vld [vmem:[#allocation4 + $0x8] sm:$0xff]
  %v1857 = vld [vmem:[#allocation4 + $0x18] sm:$0xff]
  %v1858 = vld [vmem:[#allocation4 + $0x20] sm:$0xff]
  %v1859 = vld [vmem:[#allocation4 + $0x30] sm:$0xff]
  %v1860 = vld [vmem:[#allocation4 + $0x38] sm:$0xff]
  %v1861 = vld [vmem:[#allocation4 + $0x48] sm:$0xff]
  %v1862 = vld [vmem:[#allocation4 + $0x50] sm:$0xff]
  %v1863 = vld [vmem:[#allocation4 + $0x60] sm:$0xff]
  %v1864 = vld [vmem:[#allocation4 + $0x68] sm:$0xff]
  %v1865 = vld [vmem:[#allocation4 + $0x78] sm:$0xff]
  %v1866 = vld [vmem:[#allocation4 + $0x80] sm:$0xff]
  %v1867 = vld [vmem:[#allocation4 + $0x90] sm:$0xff]
  %v1868 = vld [vmem:[#allocation4 + $0x98] sm:$0xff]
  %v1869 = vld [vmem:[#allocation4 + $0xa8] sm:$0xff]
  %v1870 = vld [vmem:[#allocation4 + $0xb0] sm:$0xff]
  %v1871 = vld [vmem:[#allocation4 + $0xc0] sm:$0xff]
  %v1872 = vld [vmem:[#allocation4 + $0xc8] sm:$0xff]
  %v1873 = vld [vmem:[#allocation4 + $0xd8] sm:$0xff]
  %v1874 = vld [vmem:[#allocation4 + $0xe0] sm:$0xff]
  %v1875 = vld [vmem:[#allocation4 + $0xf0] sm:$0xff]
  %v1876 = vld [vmem:[#allocation4 + $0xf8] sm:$0xff]
  %v1877 = vld [vmem:[#allocation4 + $0x108] sm:$0xff]
  %v1878 = vld [vmem:[#allocation4 + $0x110] sm:$0xff]
  %v1879 = vld [vmem:[#allocation4 + $0x120] sm:$0xff]
  %v1880 = vld [vmem:[#allocation4 + $0x128] sm:$0xff]
  %v1881 = vld [vmem:[#allocation4 + $0x138] sm:$0xff]
  %v1882 = vld [vmem:[#allocation4 + $0x140] sm:$0xff]
  %v1883 = vld [vmem:[#allocation4 + $0x150] sm:$0xff]
  %v1884 = vld [vmem:[#allocation4 + $0x158] sm:$0xff]
  %v1885 = vld [vmem:[#allocation4 + $0x168] sm:$0xff]
  %v1886 = vld [vmem:[#allocation4 + $0x170] sm:$0xff]
  %v1887 = vld [vmem:[#allocation4 + $0x180] sm:$0xff]
  %v1888 = vld [vmem:[#allocation4 + $0x188] sm:$0xff]
  %v1889 = vld [vmem:[#allocation4 + $0x198] sm:$0xff]
  %v1890 = vld [vmem:[#allocation4 + $0x1a0] sm:$0xff]
  %v1891 = vld [vmem:[#allocation4 + $0x1b0] sm:$0xff]
  %v1892 = vld [vmem:[#allocation4 + $0x1b8] sm:$0xff]
  %v1893 = vld [vmem:[#allocation4 + $0x1c8] sm:$0xff]
  %v1894 = vld [vmem:[#allocation4 + $0x1d0] sm:$0xff]
  %v1895 = vld [vmem:[#allocation4 + $0x1e0] sm:$0xff]
  %v1896 = vld [vmem:[#allocation4 + $0x1e8] sm:$0xff]
  %v1897 = vld [vmem:[#allocation4 + $0x1f8] sm:$0xff]
  %v1898 = vld [vmem:[#allocation4 + $0x200] sm:$0xff]
  %v1899 = vld [vmem:[#allocation4 + $0x210] sm:$0xff]
  %v1900 = vld [vmem:[#allocation4 + $0x218] sm:$0xff]
  %v1901 = vld [vmem:[#allocation4 + $0x228] sm:$0xff]
  %v1902 = vld [vmem:[#allocation4 + $0x230] sm:$0xff]
  %v1903 = vld [vmem:[#allocation4 + $0x240] sm:$0xff]
  %v1904 = vld [vmem:[#allocation4 + $0x248] sm:$0xff]
  %v1905 = vld [vmem:[#allocation4 + $0x258] sm:$0xff]
  %v1906 = vld [vmem:[#allocation4 + $0x260] sm:$0xff]
  %v1907 = vld [vmem:[#allocation4 + $0x270] sm:$0xff]
  %v1908 = vld [vmem:[#allocation4 + $0x278] sm:$0xff]
  %v1909 = vld [vmem:[#allocation4 + $0x288] sm:$0xff]
  %v1910 = vld [vmem:[#allocation4 + $0x290] sm:$0xff]
  %v1911 = vld [vmem:[#allocation4 + $0x2a0] sm:$0xff]
  %v1912 = vld [vmem:[#allocation4 + $0x2a8] sm:$0xff]
  %v1913 = vld [vmem:[#allocation4 + $0x2b8] sm:$0xff]
  %v1914 = vld [vmem:[#allocation4 + $0x2c0] sm:$0xff]
  %v1915 = vld [vmem:[#allocation4 + $0x2d0] sm:$0xff]
  %v1916 = vld [vmem:[#allocation4 + $0x2d8] sm:$0xff]
  %v1917 = vld [vmem:[#allocation4 + $0x2e8] sm:$0xff]
  %v1918 = vld [vmem:[#allocation4 + $0x2f0] sm:$0xff]
  %v1919 = vld [vmem:[#allocation4 + $0x300] sm:$0xff]
  %v1920 = vld [vmem:[#allocation4 + $0x308] sm:$0xff]
  %v1921 = vld [vmem:[#allocation4 + $0x318] sm:$0xff]
  %v1922 = vld [vmem:[#allocation4 + $0x320] sm:$0xff]
  %v1923 = vld [vmem:[#allocation4 + $0x330] sm:$0xff]
  %v1924 = vld [vmem:[#allocation4 + $0x338] sm:$0xff]
  %v1925 = vld [vmem:[#allocation4 + $0x348] sm:$0xff]
  %v1926 = vld [vmem:[#allocation4 + $0x350] sm:$0xff]
  %s1927 = scalar_lea.vmem %s4, 16
  %v1928 = vld [vmem:[%s1927] sm:$0xff]
  %v1929 = vld [vmem:[%s1927 + $0x8] sm:$0xff]
  %1931 = vset.pattern.permute.xlu0 0
  %1932 = vperm.xlu0 %1931, %v1928
  %v1933 = vpop.permute.xlu0 %1932
  %1936 = vset.pattern.permute.xlu0 0
  %1937 = vperm.xlu0 %1936, %v1929
  %v1938 = vpop.permute.xlu0 %1937
  %v1941 = vsel %vm895, %v1851, 0
  %v1944 = vsel %vm895, %v1854, 0
  %1946 = vmatprep.subr.mxu0 %v1886
  %1947 = vmatpush1.msra.mxu0 %v1885
  %1948 = vmatprep.subr.mxu0 %v1884
  %1949 = vmatpush1.msra.mxu0 %v1883
  %1950 = vmatprep.subr.mxu0 %v1882
  %1951 = vmatpush1.msra.mxu0 %v1881
  %1952 = vmatprep.subr.mxu0 %v1880
  %1953 = vmatpush1.msra.mxu0 %v1879
  %1954 = vmatprep.subr.mxu0 %v1878
  %1955 = vmatpush1.msra.mxu0 %v1877
  %1956 = vmatprep.subr.mxu0 %v1876
  %1957 = vmatpush1.msra.mxu0 %v1875
  %1958 = vmatprep.subr.mxu0 %v1874
  %1959 = vmatpush1.msra.mxu0 %v1873
  %1960 = vmatprep.subr.mxu0 %v1872
  %1961 = vmatpush1.msra.mxu0 %v1871
  %1962 = vmatprep.subr.mxu0 %v1870
  %1963 = vmatpush1.msra.mxu0 %v1869
  %1964 = vmatprep.subr.mxu0 %v1868
  %1965 = vmatpush1.msra.mxu0 %v1867
  %1966 = vmatprep.subr.mxu0 %v1866
  %1967 = vmatpush1.msra.mxu0 %v1865
  %1968 = vmatprep.subr.mxu0 %v1864
  %1969 = vmatpush1.msra.mxu0 %v1863
  %1970 = vmatprep.subr.mxu0 %v1862
  %1971 = vmatpush1.msra.mxu0 %v1861
  %1972 = vmatprep.subr.mxu0 %v1860
  %1973 = vmatpush1.msra.mxu0 %v1859
  %1974 = vmatprep.subr.mxu0 %v1858
  %1975 = vmatpush1.msra.mxu0 %v1857
  %1976 = vmatprep.subr.mxu0 %v1856
  %1977 = vmatpush1.msra.mxu0 %v1855
  %1978 = vmatprep.subr.mxu0 %v1918
  %1979 = vmatpush2.msra.mxu0 %v1917
  %1980 = vmatprep.subr.mxu0 %v1916
  %1981 = vmatpush2.msra.mxu0 %v1915
  %1982 = vmatprep.subr.mxu0 %v1914
  %1983 = vmatpush2.msra.mxu0 %v1913
  %1984 = vmatprep.subr.mxu0 %v1912
  %1985 = vmatpush2.msra.mxu0 %v1911
  %1986 = vmatprep.subr.mxu0 %v1910
  %1987 = vmatpush2.msra.mxu0 %v1909
  %1988 = vmatprep.subr.mxu0 %v1908
  %1989 = vmatpush2.msra.mxu0 %v1907
  %1990 = vmatprep.subr.mxu0 %v1906
  %1991 = vmatpush2.msra.mxu0 %v1905
  %1992 = vmatprep.subr.mxu0 %v1904
  %1993 = vmatpush2.msra.mxu0 %v1903
  %1994 = vmatprep.subr.mxu0 %v1902
  %1995 = vmatpush2.msra.mxu0 %v1901
  %1996 = vmatprep.subr.mxu0 %v1900
  %1997 = vmatpush2.msra.mxu0 %v1899
  %1998 = vmatprep.subr.mxu0 %v1898
  %1999 = vmatpush2.msra.mxu0 %v1897
  %2000 = vmatprep.subr.mxu0 %v1896
  %2001 = vmatpush2.msra.mxu0 %v1895
  %2002 = vmatprep.subr.mxu0 %v1894
  %2003 = vmatpush2.msra.mxu0 %v1893
  %2004 = vmatprep.subr.mxu0 %v1892
  %2005 = vmatpush2.msra.mxu0 %v1891
  %2006 = vmatprep.subr.mxu0 %v1890
  %2007 = vmatpush2.msra.mxu0 %v1889
  %2008 = vmatprep.subr.mxu0 %v1888
  %2009 = vmatpush2.msra.mxu0 %v1887
  %2010 = vmatprep.mubr.f32.mxu0 %v1850
  %2011 = vmatmul.mubr.f32.gmra.mxu0 %v1849
  %v2012 = vpop.f32.mrf.mxu0
  %v2013 = vadd.f32 %v1933, %v2012
  %v2014 = vpop.f32.mrf.mxu0
  %v2015 = vadd.f32 %v1933, %v2014
  %2016 = vmatprep.mubr.f32.mxu0 %v1853
  %2017 = vmatmul.mubr.f32.gmra.mxu0 %v1852
  %v2018 = vpop.f32.mrf.mxu0
  %v2019 = vadd.f32 %v1938, %v2018
  %v2020 = vpop.f32.mrf.mxu0
  %v2021 = vadd.f32 %v1938, %v2020
  %2022 = vdwg.mxu0
  %2023 = vmatprep.subr.mxu0 0.0
  %2024 = vmatpush1.msra.mxu0 0.0
  %2025 = vmatprep.subr.mxu0 0.0
  %2026 = vmatpush1.msra.mxu0 0.0
  %2027 = vmatprep.subr.mxu0 0.0
  %2028 = vmatpush1.msra.mxu0 0.0
  %2029 = vmatprep.subr.mxu0 0.0
  %2030 = vmatpush1.msra.mxu0 0.0
  %2031 = vmatprep.subr.mxu0 0.0
  %2032 = vmatpush1.msra.mxu0 0.0
  %2033 = vmatprep.subr.mxu0 0.0
  %2034 = vmatpush1.msra.mxu0 0.0
  %2035 = vmatprep.subr.mxu0 0.0
  %2036 = vmatpush1.msra.mxu0 0.0
  %2037 = vmatprep.subr.mxu0 0.0
  %2038 = vmatpush1.msra.mxu0 0.0
  %2039 = vmatprep.subr.mxu0 0.0
  %2040 = vmatpush1.msra.mxu0 0.0
  %2041 = vmatprep.subr.mxu0 0.0
  %2042 = vmatpush1.msra.mxu0 0.0
  %2043 = vmatprep.subr.mxu0 0.0
  %2044 = vmatpush1.msra.mxu0 0.0
  %2045 = vmatprep.subr.mxu0 0.0
  %2046 = vmatpush1.msra.mxu0 0.0
  %2047 = vmatprep.subr.mxu0 %v1926
  %2048 = vmatpush1.msra.mxu0 %v1925
  %2049 = vmatprep.subr.mxu0 %v1924
  %2050 = vmatpush1.msra.mxu0 %v1923
  %2051 = vmatprep.subr.mxu0 %v1922
  %2052 = vmatpush1.msra.mxu0 %v1921
  %2053 = vmatprep.subr.mxu0 %v1920
  %2054 = vmatpush1.msra.mxu0 %v1919
  %2055 = vmatprep.subr.mxu0 0.0
  %2056 = vmatpush2.msra.mxu0 0.0
  %2057 = vmatprep.subr.mxu0 0.0
  %2058 = vmatpush2.msra.mxu0 0.0
  %2059 = vmatprep.subr.mxu0 0.0
  %2060 = vmatpush2.msra.mxu0 0.0
  %2061 = vmatprep.subr.mxu0 0.0
  %2062 = vmatpush2.msra.mxu0 0.0
  %2063 = vmatprep.subr.mxu0 0.0
  %2064 = vmatpush2.msra.mxu0 0.0
  %2065 = vmatprep.subr.mxu0 0.0
  %2066 = vmatpush2.msra.mxu0 0.0
  %2067 = vmatprep.subr.mxu0 0.0
  %2068 = vmatpush2.msra.mxu0 0.0
  %2069 = vmatprep.subr.mxu0 0.0
  %2070 = vmatpush2.msra.mxu0 0.0
  %2071 = vmatprep.subr.mxu0 0.0
  %2072 = vmatpush2.msra.mxu0 0.0
  %2073 = vmatprep.subr.mxu0 0.0
  %2074 = vmatpush2.msra.mxu0 0.0
  %2075 = vmatprep.subr.mxu0 0.0
  %2076 = vmatpush2.msra.mxu0 0.0
  %2077 = vmatprep.subr.mxu0 0.0
  %2078 = vmatpush2.msra.mxu0 0.0
  %2079 = vmatprep.subr.mxu0 0.0
  %2080 = vmatpush2.msra.mxu0 0.0
  %2081 = vmatprep.subr.mxu0 0.0
  %2082 = vmatpush2.msra.mxu0 0.0
  %2083 = vmatprep.subr.mxu0 0.0
  %2084 = vmatpush2.msra.mxu0 0.0
  %2085 = vmatprep.subr.mxu0 0.0
  %2086 = vmatpush2.msra.mxu0 0.0
  %2087 = vmatprep.mubr.f32.mxu0 0.0
  %2088 = vmatmul.mubr.f32.gmra.mxu0 %v1941
  %v2089 = vpop.f32.mrf.mxu0
  %v2090 = vadd.f32 %v2013, %v2089
  %v2091 = vpop.f32.mrf.mxu0
  %v2092 = vadd.f32 %v2015, %v2091
  %2093 = vmatprep.mubr.f32.mxu0 0.0
  %2094 = vmatmul.mubr.f32.gmra.mxu0 %v1944
  %v2095 = vpop.f32.mrf.mxu0
  %v2096 = vadd.f32 %v2019, %v2095
  %v2097 = vpop.f32.mrf.mxu0
  %v2098 = vadd.f32 %v2021, %v2097
  %2099 = vdwg.mxu0
  %v2100 = vmax.f32 %v2090, 0.0
  %v2101 = vmax.f32 %v2092, 0.0
  %v2102 = vmax.f32 %v2096, 0.0
  %v2103 = vmax.f32 %v2098, 0.0
  %v2104 = vld [vmem:[%s2] sm:$0x3]
  %v2106 = vlaneseq
  %v2107 = vshrl.u32 %v2106, 7
  %v2108 = vsub.s32 0, %v2107
  %v2109 = vrot.slane %v2104, %v2108
  %v2110 = vlaneseq
  %v2111 = vshrl.u32 %v2110, 7
  %v2112 = vsub.s32 1, %v2111
  %v2113 = vrot.slane %v2104, %v2112
  %v2116 = vmul.f32 %v2100, %v2109
  %v2117 = vmul.f32 %v2101, %v2113
  %v2118 = vmul.f32 %v2102, %v2109
  %v2119 = vmul.f32 %v2103, %v2113
  %2120 = vst.msk [vmem:[#allocation3] sm:$0xff] %vm1235, 0.0
  %2121 = vst.msk [vmem:[#allocation3 + $0x20] sm:$0xff] %vm1235, 0.0
  %2126 = vrot.lane.b32.xlu0 %v2116, 23
  %v2127 = vpop.permute.xlu0 %2126
  %2128 = vrot.lane.b32.xlu0 %v2117, 23
  %v2129 = vpop.permute.xlu0 %2128
  %2130 = vrot.lane.b32.xlu0 %v2118, 23
  %v2131 = vpop.permute.xlu0 %2130
  %2132 = vrot.lane.b32.xlu0 %v2119, 23
  %v2133 = vpop.permute.xlu0 %2132
  %v2134 = vsel %vm1235, %v2127, %v2129
  %v2135 = vsel %vm1235, %v2131, %v2133
  %2140 = vst.msk [vmem:[#allocation3] sm:$0xff] %vm1266, %v2127
  %vm2141 = vcmask 941056
  %2142 = vst.msk [vmem:[#allocation3 + $0x8] sm:$0xff] %vm2141, %v2134
  %2143 = vst.msk [vmem:[#allocation3 + $0x20] sm:$0xff] %vm1266, %v2131
  %2144 = vst.msk [vmem:[#allocation3 + $0x28] sm:$0xff] %vm2141, %v2135
  %vm2145 = vcmask 1048472
  %2146 = vst.msk [vmem:[#allocation3 + $0x8] sm:$0xff] %vm2145, 0.0
  %vm2147 = vcmask 80896
  %2148 = vst.msk [vmem:[#allocation3 + $0x10] sm:$0xff] %vm2147, 0.0
  %2149 = vst.msk [vmem:[#allocation3 + $0x28] sm:$0xff] %vm2145, 0.0
  %2150 = vst.msk [vmem:[#allocation3 + $0x30] sm:$0xff] %vm2147, 0.0
  %v2151 = vld [vmem:[#allocation3] sm:$0xff]
  %v2152 = vld [vmem:[#allocation3 + $0x8] sm:$0xff]
  %v2153 = vld [vmem:[#allocation3 + $0x20] sm:$0xff]
  %v2154 = vld [vmem:[#allocation3 + $0x28] sm:$0xff]
  %2155 = vst [vmem:[#allocation4] sm:$0xff] %v2151
  %vm2156 = vcmask 211968
  %2157 = vst.msk [vmem:[#allocation4 + $0x8] sm:$0xff] %vm2156, %v2152
  %2158 = vst [vmem:[#allocation4 + $0x18] sm:$0xff] %v2153
  %2159 = vst.msk [vmem:[#allocation4 + $0x20] sm:$0xff] %vm2156, %v2154
  %v2160 = vld [vmem:[#allocation3] sm:$0xff]
  %v2161 = vld [vmem:[#allocation3 + $0x8] sm:$0xff]
  %v2162 = vld [vmem:[#allocation3 + $0x20] sm:$0xff]
  %v2163 = vld [vmem:[#allocation3 + $0x28] sm:$0xff]
  %2168 = vrot.lane.b32.xlu0 %v2160, 127
  %v2169 = vpop.permute.xlu0 %2168
  %2170 = vrot.lane.b32.xlu0 %v2161, 127
  %v2171 = vpop.permute.xlu0 %2170
  %2172 = vrot.lane.b32.xlu0 %v2162, 127
  %v2173 = vpop.permute.xlu0 %2172
  %2174 = vrot.lane.b32.xlu0 %v2163, 127
  %v2175 = vpop.permute.xlu0 %2174
  %v2176 = vsel %vm66, %v2169, %v2171
  %v2177 = vsel %vm66, %v2173, %v2175
  %2182 = vst [vmem:[#allocation4 + $0x30] sm:$0xff] %v2176
  %2183 = vst.msk [vmem:[#allocation4 + $0x38] sm:$0xff] %vm2156, %v2171
  %2184 = vst [vmem:[#allocation4 + $0x48] sm:$0xff] %v2177
  %2185 = vst.msk [vmem:[#allocation4 + $0x50] sm:$0xff] %vm2156, %v2175
  %v2186 = vld [vmem:[#allocation3] sm:$0xff]
  %v2187 = vld [vmem:[#allocation3 + $0x8] sm:$0xff]
  %v2188 = vld [vmem:[#allocation3 + $0x20] sm:$0xff]
  %v2189 = vld [vmem:[#allocation3 + $0x28] sm:$0xff]
  %2194 = vrot.lane.b32.xlu0 %v2186, 126
  %v2195 = vpop.permute.xlu0 %2194
  %2196 = vrot.lane.b32.xlu0 %v2187, 126
  %v2197 = vpop.permute.xlu0 %2196
  %2198 = vrot.lane.b32.xlu0 %v2188, 126
  %v2199 = vpop.permute.xlu0 %2198
  %2200 = vrot.lane.b32.xlu0 %v2189, 126
  %v2201 = vpop.permute.xlu0 %2200
  %v2202 = vsel %vm107, %v2195, %v2197
  %v2203 = vsel %vm107, %v2199, %v2201
  %2208 = vst [vmem:[#allocation4 + $0x60] sm:$0xff] %v2202
  %2209 = vst.msk [vmem:[#allocation4 + $0x68] sm:$0xff] %vm2156, %v2197
  %2210 = vst [vmem:[#allocation4 + $0x78] sm:$0xff] %v2203
  %2211 = vst.msk [vmem:[#allocation4 + $0x80] sm:$0xff] %vm2156, %v2201
  %v2212 = vld [vmem:[#allocation3] sm:$0xff]
  %v2213 = vld [vmem:[#allocation3 + $0x8] sm:$0xff]
  %v2214 = vld [vmem:[#allocation3 + $0x20] sm:$0xff]
  %v2215 = vld [vmem:[#allocation3 + $0x28] sm:$0xff]
  %2220 = vrot.lane.b32.xlu0 %v2212, 106
  %v2221 = vpop.permute.xlu0 %2220
  %2222 = vrot.lane.b32.xlu0 %v2213, 106
  %v2223 = vpop.permute.xlu0 %2222
  %2224 = vrot.lane.b32.xlu0 %v2214, 106
  %v2225 = vpop.permute.xlu0 %2224
  %2226 = vrot.lane.b32.xlu0 %v2215, 106
  %v2227 = vpop.permute.xlu0 %2226
  %v2228 = vsel %vm148, %v2221, %v2223
  %v2229 = vsel %vm148, %v2225, %v2227
  %2234 = vst [vmem:[#allocation4 + $0x90] sm:$0xff] %v2228
  %2235 = vst.msk [vmem:[#allocation4 + $0x98] sm:$0xff] %vm2156, %v2223
  %2236 = vst [vmem:[#allocation4 + $0xa8] sm:$0xff] %v2229
  %2237 = vst.msk [vmem:[#allocation4 + $0xb0] sm:$0xff] %vm2156, %v2227
  %v2238 = vld [vmem:[#allocation3] sm:$0xff]
  %v2239 = vld [vmem:[#allocation3 + $0x8] sm:$0xff]
  %v2240 = vld [vmem:[#allocation3 + $0x20] sm:$0xff]
  %v2241 = vld [vmem:[#allocation3 + $0x28] sm:$0xff]
  %2246 = vrot.lane.b32.xlu0 %v2238, 105
  %v2247 = vpop.permute.xlu0 %2246
  %2248 = vrot.lane.b32.xlu0 %v2239, 105
  %v2249 = vpop.permute.xlu0 %2248
  %2250 = vrot.lane.b32.xlu0 %v2240, 105
  %v2251 = vpop.permute.xlu0 %2250
  %2252 = vrot.lane.b32.xlu0 %v2241, 105
  %v2253 = vpop.permute.xlu0 %2252
  %v2254 = vsel %vm189, %v2247, %v2249
  %v2255 = vsel %vm189, %v2251, %v2253
  %2260 = vst [vmem:[#allocation4 + $0xc0] sm:$0xff] %v2254
  %2261 = vst.msk [vmem:[#allocation4 + $0xc8] sm:$0xff] %vm2156, %v2249
  %2262 = vst [vmem:[#allocation4 + $0xd8] sm:$0xff] %v2255
  %2263 = vst.msk [vmem:[#allocation4 + $0xe0] sm:$0xff] %vm2156, %v2253
  %v2264 = vld [vmem:[#allocation3] sm:$0xff]
  %v2265 = vld [vmem:[#allocation3 + $0x8] sm:$0xff]
  %v2266 = vld [vmem:[#allocation3 + $0x20] sm:$0xff]
  %v2267 = vld [vmem:[#allocation3 + $0x28] sm:$0xff]
  %2272 = vrot.lane.b32.xlu0 %v2264, 104
  %v2273 = vpop.permute.xlu0 %2272
  %2274 = vrot.lane.b32.xlu0 %v2265, 104
  %v2275 = vpop.permute.xlu0 %2274
  %2276 = vrot.lane.b32.xlu0 %v2266, 104
  %v2277 = vpop.permute.xlu0 %2276
  %2278 = vrot.lane.b32.xlu0 %v2267, 104
  %v2279 = vpop.permute.xlu0 %2278
  %v2280 = vsel %vm230, %v2273, %v2275
  %v2281 = vsel %vm230, %v2277, %v2279
  %2286 = vst [vmem:[#allocation4 + $0xf0] sm:$0xff] %v2280
  %2287 = vst.msk [vmem:[#allocation4 + $0xf8] sm:$0xff] %vm2156, %v2275
  %2288 = vst [vmem:[#allocation4 + $0x108] sm:$0xff] %v2281
  %2289 = vst.msk [vmem:[#allocation4 + $0x110] sm:$0xff] %vm2156, %v2279
  %v2290 = vld [vmem:[#allocation3] sm:$0xff]
  %v2291 = vld [vmem:[#allocation3 + $0x8] sm:$0xff]
  %v2292 = vld [vmem:[#allocation3 + $0x20] sm:$0xff]
  %v2293 = vld [vmem:[#allocation3 + $0x28] sm:$0xff]
  %2298 = vrot.lane.b32.xlu0 %v2290, 84
  %v2299 = vpop.permute.xlu0 %2298
  %2300 = vrot.lane.b32.xlu0 %v2291, 84
  %v2301 = vpop.permute.xlu0 %2300
  %2302 = vrot.lane.b32.xlu0 %v2292, 84
  %v2303 = vpop.permute.xlu0 %2302
  %2304 = vrot.lane.b32.xlu0 %v2293, 84
  %v2305 = vpop.permute.xlu0 %2304
  %v2306 = vsel %vm271, %v2299, %v2301
  %v2307 = vsel %vm271, %v2303, %v2305
  %2312 = vst [vmem:[#allocation4 + $0x120] sm:$0xff] %v2306
  %2313 = vst.msk [vmem:[#allocation4 + $0x128] sm:$0xff] %vm2156, %v2301
  %2314 = vst [vmem:[#allocation4 + $0x138] sm:$0xff] %v2307
  %2315 = vst.msk [vmem:[#allocation4 + $0x140] sm:$0xff] %vm2156, %v2305
  %v2316 = vld [vmem:[#allocation3] sm:$0xff]
  %v2317 = vld [vmem:[#allocation3 + $0x8] sm:$0xff]
  %v2318 = vld [vmem:[#allocation3 + $0x20] sm:$0xff]
  %v2319 = vld [vmem:[#allocation3 + $0x28] sm:$0xff]
  %2324 = vrot.lane.b32.xlu0 %v2316, 83
  %v2325 = vpop.permute.xlu0 %2324
  %2326 = vrot.lane.b32.xlu0 %v2317, 83
  %v2327 = vpop.permute.xlu0 %2326
  %2328 = vrot.lane.b32.xlu0 %v2318, 83
  %v2329 = vpop.permute.xlu0 %2328
  %2330 = vrot.lane.b32.xlu0 %v2319, 83
  %v2331 = vpop.permute.xlu0 %2330
  %v2332 = vsel %vm312, %v2325, %v2327
  %v2333 = vsel %vm312, %v2329, %v2331
  %2338 = vst [vmem:[#allocation4 + $0x150] sm:$0xff] %v2332
  %2339 = vst.msk [vmem:[#allocation4 + $0x158] sm:$0xff] %vm2156, %v2327
  %2340 = vst [vmem:[#allocation4 + $0x168] sm:$0xff] %v2333
  %2341 = vst.msk [vmem:[#allocation4 + $0x170] sm:$0xff] %vm2156, %v2331
  %v2342 = vld [vmem:[#allocation3] sm:$0xff]
  %v2343 = vld [vmem:[#allocation3 + $0x8] sm:$0xff]
  %v2344 = vld [vmem:[#allocation3 + $0x20] sm:$0xff]
  %v2345 = vld [vmem:[#allocation3 + $0x28] sm:$0xff]
  %2350 = vrot.lane.b32.xlu0 %v2342, 82
  %v2351 = vpop.permute.xlu0 %2350
  %2352 = vrot.lane.b32.xlu0 %v2343, 82
  %v2353 = vpop.permute.xlu0 %2352
  %2354 = vrot.lane.b32.xlu0 %v2344, 82
  %v2355 = vpop.permute.xlu0 %2354
  %2356 = vrot.lane.b32.xlu0 %v2345, 82
  %v2357 = vpop.permute.xlu0 %2356
  %v2358 = vsel %vm353, %v2351, %v2353
  %v2359 = vsel %vm353, %v2355, %v2357
  %2364 = vst [vmem:[#allocation4 + $0x180] sm:$0xff] %v2358
  %2365 = vst.msk [vmem:[#allocation4 + $0x188] sm:$0xff] %vm2156, %v2353
  %2366 = vst [vmem:[#allocation4 + $0x198] sm:$0xff] %v2359
  %2367 = vst.msk [vmem:[#allocation4 + $0x1a0] sm:$0xff] %vm2156, %v2357
  %v2368 = vld [vmem:[#allocation3] sm:$0xff]
  %v2369 = vld [vmem:[#allocation3 + $0x8] sm:$0xff]
  %v2370 = vld [vmem:[#allocation3 + $0x20] sm:$0xff]
  %v2371 = vld [vmem:[#allocation3 + $0x28] sm:$0xff]
  %2376 = vrot.lane.b32.xlu0 %v2368, 62
  %v2377 = vpop.permute.xlu0 %2376
  %2378 = vrot.lane.b32.xlu0 %v2369, 62
  %v2379 = vpop.permute.xlu0 %2378
  %2380 = vrot.lane.b32.xlu0 %v2370, 62
  %v2381 = vpop.permute.xlu0 %2380
  %2382 = vrot.lane.b32.xlu0 %v2371, 62
  %v2383 = vpop.permute.xlu0 %2382
  %v2384 = vsel %vm394, %v2377, %v2379
  %v2385 = vsel %vm394, %v2381, %v2383
  %2390 = vst [vmem:[#allocation4 + $0x1b0] sm:$0xff] %v2384
  %2391 = vst.msk [vmem:[#allocation4 + $0x1b8] sm:$0xff] %vm2156, %v2379
  %2392 = vst [vmem:[#allocation4 + $0x1c8] sm:$0xff] %v2385
  %2393 = vst.msk [vmem:[#allocation4 + $0x1d0] sm:$0xff] %vm2156, %v2383
  %v2394 = vld [vmem:[#allocation3] sm:$0xff]
  %v2395 = vld [vmem:[#allocation3 + $0x8] sm:$0xff]
  %v2396 = vld [vmem:[#allocation3 + $0x20] sm:$0xff]
  %v2397 = vld [vmem:[#allocation3 + $0x28] sm:$0xff]
  %2402 = vrot.lane.b32.xlu0 %v2394, 61
  %v2403 = vpop.permute.xlu0 %2402
  %2404 = vrot.lane.b32.xlu0 %v2395, 61
  %v2405 = vpop.permute.xlu0 %2404
  %2406 = vrot.lane.b32.xlu0 %v2396, 61
  %v2407 = vpop.permute.xlu0 %2406
  %2408 = vrot.lane.b32.xlu0 %v2397, 61
  %v2409 = vpop.permute.xlu0 %2408
  %v2410 = vsel %vm435, %v2403, %v2405
  %v2411 = vsel %vm435, %v2407, %v2409
  %2416 = vst [vmem:[#allocation4 + $0x1e0] sm:$0xff] %v2410
  %2417 = vst.msk [vmem:[#allocation4 + $0x1e8] sm:$0xff] %vm2156, %v2405
  %2418 = vst [vmem:[#allocation4 + $0x1f8] sm:$0xff] %v2411
  %2419 = vst.msk [vmem:[#allocation4 + $0x200] sm:$0xff] %vm2156, %v2409
  %v2420 = vld [vmem:[#allocation3] sm:$0xff]
  %v2421 = vld [vmem:[#allocation3 + $0x8] sm:$0xff]
  %v2422 = vld [vmem:[#allocation3 + $0x20] sm:$0xff]
  %v2423 = vld [vmem:[#allocation3 + $0x28] sm:$0xff]
  %2428 = vrot.lane.b32.xlu0 %v2420, 60
  %v2429 = vpop.permute.xlu0 %2428
  %2430 = vrot.lane.b32.xlu0 %v2421, 60
  %v2431 = vpop.permute.xlu0 %2430
  %2432 = vrot.lane.b32.xlu0 %v2422, 60
  %v2433 = vpop.permute.xlu0 %2432
  %2434 = vrot.lane.b32.xlu0 %v2423, 60
  %v2435 = vpop.permute.xlu0 %2434
  %v2436 = vsel %vm476, %v2429, %v2431
  %v2437 = vsel %vm476, %v2433, %v2435
  %2442 = vst [vmem:[#allocation4 + $0x210] sm:$0xff] %v2436
  %2443 = vst.msk [vmem:[#allocation4 + $0x218] sm:$0xff] %vm2156, %v2431
  %2444 = vst [vmem:[#allocation4 + $0x228] sm:$0xff] %v2437
  %2445 = vst.msk [vmem:[#allocation4 + $0x230] sm:$0xff] %vm2156, %v2435
  %v2446 = vld [vmem:[#allocation3] sm:$0xff]
  %v2447 = vld [vmem:[#allocation3 + $0x8] sm:$0xff]
  %v2448 = vld [vmem:[#allocation3 + $0x20] sm:$0xff]
  %v2449 = vld [vmem:[#allocation3 + $0x28] sm:$0xff]
  %2454 = vrot.lane.b32.xlu0 %v2446, 40
  %v2455 = vpop.permute.xlu0 %2454
  %2456 = vrot.lane.b32.xlu0 %v2447, 40
  %v2457 = vpop.permute.xlu0 %2456
  %2458 = vrot.lane.b32.xlu0 %v2448, 40
  %v2459 = vpop.permute.xlu0 %2458
  %2460 = vrot.lane.b32.xlu0 %v2449, 40
  %v2461 = vpop.permute.xlu0 %2460
  %v2462 = vsel %vm517, %v2455, %v2457
  %v2463 = vsel %vm517, %v2459, %v2461
  %2468 = vst [vmem:[#allocation4 + $0x240] sm:$0xff] %v2462
  %2469 = vst.msk [vmem:[#allocation4 + $0x248] sm:$0xff] %vm2156, %v2457
  %2470 = vst [vmem:[#allocation4 + $0x258] sm:$0xff] %v2463
  %2471 = vst.msk [vmem:[#allocation4 + $0x260] sm:$0xff] %vm2156, %v2461
  %v2472 = vld [vmem:[#allocation3] sm:$0xff]
  %v2473 = vld [vmem:[#allocation3 + $0x8] sm:$0xff]
  %v2474 = vld [vmem:[#allocation3 + $0x20] sm:$0xff]
  %v2475 = vld [vmem:[#allocation3 + $0x28] sm:$0xff]
  %2480 = vrot.lane.b32.xlu0 %v2472, 39
  %v2481 = vpop.permute.xlu0 %2480
  %2482 = vrot.lane.b32.xlu0 %v2473, 39
  %v2483 = vpop.permute.xlu0 %2482
  %2484 = vrot.lane.b32.xlu0 %v2474, 39
  %v2485 = vpop.permute.xlu0 %2484
  %2486 = vrot.lane.b32.xlu0 %v2475, 39
  %v2487 = vpop.permute.xlu0 %2486
  %v2488 = vsel %vm558, %v2481, %v2483
  %v2489 = vsel %vm558, %v2485, %v2487
  %2494 = vst [vmem:[#allocation4 + $0x270] sm:$0xff] %v2488
  %2495 = vst.msk [vmem:[#allocation4 + $0x278] sm:$0xff] %vm2156, %v2483
  %2496 = vst [vmem:[#allocation4 + $0x288] sm:$0xff] %v2489
  %2497 = vst.msk [vmem:[#allocation4 + $0x290] sm:$0xff] %vm2156, %v2487
  %v2498 = vld [vmem:[#allocation3] sm:$0xff]
  %v2499 = vld [vmem:[#allocation3 + $0x8] sm:$0xff]
  %v2500 = vld [vmem:[#allocation3 + $0x20] sm:$0xff]
  %v2501 = vld [vmem:[#allocation3 + $0x28] sm:$0xff]
  %2506 = vrot.lane.b32.xlu0 %v2498, 38
  %v2507 = vpop.permute.xlu0 %2506
  %2508 = vrot.lane.b32.xlu0 %v2499, 38
  %v2509 = vpop.permute.xlu0 %2508
  %2510 = vrot.lane.b32.xlu0 %v2500, 38
  %v2511 = vpop.permute.xlu0 %2510
  %2512 = vrot.lane.b32.xlu0 %v2501, 38
  %v2513 = vpop.permute.xlu0 %2512
  %v2514 = vsel %vm599, %v2507, %v2509
  %v2515 = vsel %vm599, %v2511, %v2513
  %2520 = vst [vmem:[#allocation4 + $0x2a0] sm:$0xff] %v2514
  %2521 = vst.msk [vmem:[#allocation4 + $0x2a8] sm:$0xff] %vm2156, %v2509
  %2522 = vst [vmem:[#allocation4 + $0x2b8] sm:$0xff] %v2515
  %2523 = vst.msk [vmem:[#allocation4 + $0x2c0] sm:$0xff] %vm2156, %v2513
  %v2524 = vld [vmem:[#allocation3] sm:$0xff]
  %v2525 = vld [vmem:[#allocation3 + $0x8] sm:$0xff]
  %v2526 = vld [vmem:[#allocation3 + $0x10] sm:$0xff]
  %v2527 = vld [vmem:[#allocation3 + $0x20] sm:$0xff]
  %v2528 = vld [vmem:[#allocation3 + $0x28] sm:$0xff]
  %v2529 = vld [vmem:[#allocation3 + $0x30] sm:$0xff]
  %2536 = vrot.lane.b32.xlu0 %v2524, 18
  %v2537 = vpop.permute.xlu0 %2536
  %2538 = vrot.lane.b32.xlu0 %v2525, 18
  %v2539 = vpop.permute.xlu0 %2538
  %2540 = vrot.lane.b32.xlu0 %v2526, 18
  %v2541 = vpop.permute.xlu0 %2540
  %2542 = vrot.lane.b32.xlu0 %v2527, 18
  %v2543 = vpop.permute.xlu0 %2542
  %2544 = vrot.lane.b32.xlu0 %v2528, 18
  %v2545 = vpop.permute.xlu0 %2544
  %2546 = vrot.lane.b32.xlu0 %v2529, 18
  %v2547 = vpop.permute.xlu0 %2546
  %v2548 = vsel %vm648, %v2537, %v2539
  %v2549 = vsel %vm648, %v2539, %v2541
  %v2550 = vsel %vm648, %v2543, %v2545
  %v2551 = vsel %vm648, %v2545, %v2547
  %2556 = vst [vmem:[#allocation4 + $0x2d0] sm:$0xff] %v2548
  %2557 = vst.msk [vmem:[#allocation4 + $0x2d8] sm:$0xff] %vm2156, %v2549
  %2558 = vst [vmem:[#allocation4 + $0x2e8] sm:$0xff] %v2550
  %2559 = vst.msk [vmem:[#allocation4 + $0x2f0] sm:$0xff] %vm2156, %v2551
  %v2560 = vld [vmem:[#allocation3] sm:$0xff]
  %v2561 = vld [vmem:[#allocation3 + $0x8] sm:$0xff]
  %v2562 = vld [vmem:[#allocation3 + $0x10] sm:$0xff]
  %v2563 = vld [vmem:[#allocation3 + $0x20] sm:$0xff]
  %v2564 = vld [vmem:[#allocation3 + $0x28] sm:$0xff]
  %v2565 = vld [vmem:[#allocation3 + $0x30] sm:$0xff]
  %2572 = vrot.lane.b32.xlu0 %v2560, 17
  %v2573 = vpop.permute.xlu0 %2572
  %2574 = vrot.lane.b32.xlu0 %v2561, 17
  %v2575 = vpop.permute.xlu0 %2574
  %2576 = vrot.lane.b32.xlu0 %v2562, 17
  %v2577 = vpop.permute.xlu0 %2576
  %2578 = vrot.lane.b32.xlu0 %v2563, 17
  %v2579 = vpop.permute.xlu0 %2578
  %2580 = vrot.lane.b32.xlu0 %v2564, 17
  %v2581 = vpop.permute.xlu0 %2580
  %2582 = vrot.lane.b32.xlu0 %v2565, 17
  %v2583 = vpop.permute.xlu0 %2582
  %v2584 = vsel %vm699, %v2573, %v2575
  %v2585 = vsel %vm699, %v2575, %v2577
  %v2586 = vsel %vm699, %v2579, %v2581
  %v2587 = vsel %vm699, %v2581, %v2583
  %2592 = vst [vmem:[#allocation4 + $0x300] sm:$0xff] %v2584
  %2593 = vst.msk [vmem:[#allocation4 + $0x308] sm:$0xff] %vm2156, %v2585
  %2594 = vst [vmem:[#allocation4 + $0x318] sm:$0xff] %v2586
  %2595 = vst.msk [vmem:[#allocation4 + $0x320] sm:$0xff] %vm2156, %v2587
  %v2596 = vld [vmem:[#allocation3] sm:$0xff]
  %v2597 = vld [vmem:[#allocation3 + $0x8] sm:$0xff]
  %v2598 = vld [vmem:[#allocation3 + $0x10] sm:$0xff]
  %v2599 = vld [vmem:[#allocation3 + $0x20] sm:$0xff]
  %v2600 = vld [vmem:[#allocation3 + $0x28] sm:$0xff]
  %v2601 = vld [vmem:[#allocation3 + $0x30] sm:$0xff]
  %2608 = vrot.lane.b32.xlu0 %v2596, 16
  %v2609 = vpop.permute.xlu0 %2608
  %2610 = vrot.lane.b32.xlu0 %v2597, 16
  %v2611 = vpop.permute.xlu0 %2610
  %2612 = vrot.lane.b32.xlu0 %v2598, 16
  %v2613 = vpop.permute.xlu0 %2612
  %2614 = vrot.lane.b32.xlu0 %v2599, 16
  %v2615 = vpop.permute.xlu0 %2614
  %2616 = vrot.lane.b32.xlu0 %v2600, 16
  %v2617 = vpop.permute.xlu0 %2616
  %2618 = vrot.lane.b32.xlu0 %v2601, 16
  %v2619 = vpop.permute.xlu0 %2618
  %v2620 = vsel %vm750, %v2609, %v2611
  %v2621 = vsel %vm750, %v2611, %v2613
  %v2622 = vsel %vm750, %v2615, %v2617
  %v2623 = vsel %vm750, %v2617, %v2619
  %2628 = vst [vmem:[#allocation4 + $0x330] sm:$0xff] %v2620
  %2629 = vst.msk [vmem:[#allocation4 + $0x338] sm:$0xff] %vm2156, %v2621
  %2630 = vst [vmem:[#allocation4 + $0x348] sm:$0xff] %v2622
  %2631 = vst.msk [vmem:[#allocation4 + $0x350] sm:$0xff] %vm2156, %v2623
  %s2632 = scalar_lea.vmem %s3, 96
  %v2633 = vld [vmem:[%s2632] sm:$0xff]
  %v2634 = vld [vmem:[%s2632 + $0x8] sm:$0xff]
  %v2635 = vld [vmem:[%s2632 + $0x10] sm:$0xff]
  %v2636 = vld [vmem:[%s2632 + $0x18] sm:$0xff]
  %v2637 = vld [vmem:[%s2632 + $0x20] sm:$0xff]
  %v2638 = vld [vmem:[%s2632 + $0x28] sm:$0xff]
  %v2639 = vld [vmem:[#allocation4] sm:$0xff]
  %v2640 = vld [vmem:[#allocation4 + $0x8] sm:$0xff]
  %v2641 = vld [vmem:[#allocation4 + $0x18] sm:$0xff]
  %v2642 = vld [vmem:[#allocation4 + $0x20] sm:$0xff]
  %v2643 = vld [vmem:[#allocation4 + $0x30] sm:$0xff]
  %v2644 = vld [vmem:[#allocation4 + $0x38] sm:$0xff]
  %v2645 = vld [vmem:[#allocation4 + $0x48] sm:$0xff]
  %v2646 = vld [vmem:[#allocation4 + $0x50] sm:$0xff]
  %v2647 = vld [vmem:[#allocation4 + $0x60] sm:$0xff]
  %v2648 = vld [vmem:[#allocation4 + $0x68] sm:$0xff]
  %v2649 = vld [vmem:[#allocation4 + $0x78] sm:$0xff]
  %v2650 = vld [vmem:[#allocation4 + $0x80] sm:$0xff]
  %v2651 = vld [vmem:[#allocation4 + $0x90] sm:$0xff]
  %v2652 = vld [vmem:[#allocation4 + $0x98] sm:$0xff]
  %v2653 = vld [vmem:[#allocation4 + $0xa8] sm:$0xff]
  %v2654 = vld [vmem:[#allocation4 + $0xb0] sm:$0xff]
  %v2655 = vld [vmem:[#allocation4 + $0xc0] sm:$0xff]
  %v2656 = vld [vmem:[#allocation4 + $0xc8] sm:$0xff]
  %v2657 = vld [vmem:[#allocation4 + $0xd8] sm:$0xff]
  %v2658 = vld [vmem:[#allocation4 + $0xe0] sm:$0xff]
  %v2659 = vld [vmem:[#allocation4 + $0xf0] sm:$0xff]
  %v2660 = vld [vmem:[#allocation4 + $0xf8] sm:$0xff]
  %v2661 = vld [vmem:[#allocation4 + $0x108] sm:$0xff]
  %v2662 = vld [vmem:[#allocation4 + $0x110] sm:$0xff]
  %v2663 = vld [vmem:[#allocation4 + $0x120] sm:$0xff]
  %v2664 = vld [vmem:[#allocation4 + $0x128] sm:$0xff]
  %v2665 = vld [vmem:[#allocation4 + $0x138] sm:$0xff]
  %v2666 = vld [vmem:[#allocation4 + $0x140] sm:$0xff]
  %v2667 = vld [vmem:[#allocation4 + $0x150] sm:$0xff]
  %v2668 = vld [vmem:[#allocation4 + $0x158] sm:$0xff]
  %v2669 = vld [vmem:[#allocation4 + $0x168] sm:$0xff]
  %v2670 = vld [vmem:[#allocation4 + $0x170] sm:$0xff]
  %v2671 = vld [vmem:[#allocation4 + $0x180] sm:$0xff]
  %v2672 = vld [vmem:[#allocation4 + $0x188] sm:$0xff]
  %v2673 = vld [vmem:[#allocation4 + $0x198] sm:$0xff]
  %v2674 = vld [vmem:[#allocation4 + $0x1a0] sm:$0xff]
  %v2675 = vld [vmem:[#allocation4 + $0x1b0] sm:$0xff]
  %v2676 = vld [vmem:[#allocation4 + $0x1b8] sm:$0xff]
  %v2677 = vld [vmem:[#allocation4 + $0x1c8] sm:$0xff]
  %v2678 = vld [vmem:[#allocation4 + $0x1d0] sm:$0xff]
  %v2679 = vld [vmem:[#allocation4 + $0x1e0] sm:$0xff]
  %v2680 = vld [vmem:[#allocation4 + $0x1e8] sm:$0xff]
  %v2681 = vld [vmem:[#allocation4 + $0x1f8] sm:$0xff]
  %v2682 = vld [vmem:[#allocation4 + $0x200] sm:$0xff]
  %v2683 = vld [vmem:[#allocation4 + $0x210] sm:$0xff]
  %v2684 = vld [vmem:[#allocation4 + $0x218] sm:$0xff]
  %v2685 = vld [vmem:[#allocation4 + $0x228] sm:$0xff]
  %v2686 = vld [vmem:[#allocation4 + $0x230] sm:$0xff]
  %v2687 = vld [vmem:[#allocation4 + $0x240] sm:$0xff]
  %v2688 = vld [vmem:[#allocation4 + $0x248] sm:$0xff]
  %v2689 = vld [vmem:[#allocation4 + $0x258] sm:$0xff]
  %v2690 = vld [vmem:[#allocation4 + $0x260] sm:$0xff]
  %v2691 = vld [vmem:[#allocation4 + $0x270] sm:$0xff]
  %v2692 = vld [vmem:[#allocation4 + $0x278] sm:$0xff]
  %v2693 = vld [vmem:[#allocation4 + $0x288] sm:$0xff]
  %v2694 = vld [vmem:[#allocation4 + $0x290] sm:$0xff]
  %v2695 = vld [vmem:[#allocation4 + $0x2a0] sm:$0xff]
  %v2696 = vld [vmem:[#allocation4 + $0x2a8] sm:$0xff]
  %v2697 = vld [vmem:[#allocation4 + $0x2b8] sm:$0xff]
  %v2698 = vld [vmem:[#allocation4 + $0x2c0] sm:$0xff]
  %v2699 = vld [vmem:[#allocation4 + $0x2d0] sm:$0xff]
  %v2700 = vld [vmem:[#allocation4 + $0x2d8] sm:$0xff]
  %v2701 = vld [vmem:[#allocation4 + $0x2e8] sm:$0xff]
  %v2702 = vld [vmem:[#allocation4 + $0x2f0] sm:$0xff]
  %v2703 = vld [vmem:[#allocation4 + $0x300] sm:$0xff]
  %v2704 = vld [vmem:[#allocation4 + $0x308] sm:$0xff]
  %v2705 = vld [vmem:[#allocation4 + $0x318] sm:$0xff]
  %v2706 = vld [vmem:[#allocation4 + $0x320] sm:$0xff]
  %v2707 = vld [vmem:[#allocation4 + $0x330] sm:$0xff]
  %v2708 = vld [vmem:[#allocation4 + $0x338] sm:$0xff]
  %v2709 = vld [vmem:[#allocation4 + $0x348] sm:$0xff]
  %v2710 = vld [vmem:[#allocation4 + $0x350] sm:$0xff]
  %s2711 = scalar_lea.vmem %s4, 32
  %v2712 = vld [vmem:[%s2711] sm:$0xff]
  %v2713 = vld [vmem:[%s2711 + $0x8] sm:$0xff]
  %2715 = vset.pattern.permute.xlu0 0
  %2716 = vperm.xlu0 %2715, %v2712
  %v2717 = vpop.permute.xlu0 %2716
  %2720 = vset.pattern.permute.xlu0 0
  %2721 = vperm.xlu0 %2720, %v2713
  %v2722 = vpop.permute.xlu0 %2721
  %v2725 = vsel %vm895, %v2635, 0
  %v2728 = vsel %vm895, %v2638, 0
  %2730 = vmatprep.subr.mxu0 %v2670
  %2731 = vmatpush1.msra.mxu0 %v2669
  %2732 = vmatprep.subr.mxu0 %v2668
  %2733 = vmatpush1.msra.mxu0 %v2667
  %2734 = vmatprep.subr.mxu0 %v2666
  %2735 = vmatpush1.msra.mxu0 %v2665
  %2736 = vmatprep.subr.mxu0 %v2664
  %2737 = vmatpush1.msra.mxu0 %v2663
  %2738 = vmatprep.subr.mxu0 %v2662
  %2739 = vmatpush1.msra.mxu0 %v2661
  %2740 = vmatprep.subr.mxu0 %v2660
  %2741 = vmatpush1.msra.mxu0 %v2659
  %2742 = vmatprep.subr.mxu0 %v2658
  %2743 = vmatpush1.msra.mxu0 %v2657
  %2744 = vmatprep.subr.mxu0 %v2656
  %2745 = vmatpush1.msra.mxu0 %v2655
  %2746 = vmatprep.subr.mxu0 %v2654
  %2747 = vmatpush1.msra.mxu0 %v2653
  %2748 = vmatprep.subr.mxu0 %v2652
  %2749 = vmatpush1.msra.mxu0 %v2651
  %2750 = vmatprep.subr.mxu0 %v2650
  %2751 = vmatpush1.msra.mxu0 %v2649
  %2752 = vmatprep.subr.mxu0 %v2648
  %2753 = vmatpush1.msra.mxu0 %v2647
  %2754 = vmatprep.subr.mxu0 %v2646
  %2755 = vmatpush1.msra.mxu0 %v2645
  %2756 = vmatprep.subr.mxu0 %v2644
  %2757 = vmatpush1.msra.mxu0 %v2643
  %2758 = vmatprep.subr.mxu0 %v2642
  %2759 = vmatpush1.msra.mxu0 %v2641
  %2760 = vmatprep.subr.mxu0 %v2640
  %2761 = vmatpush1.msra.mxu0 %v2639
  %2762 = vmatprep.subr.mxu0 %v2702
  %2763 = vmatpush2.msra.mxu0 %v2701
  %2764 = vmatprep.subr.mxu0 %v2700
  %2765 = vmatpush2.msra.mxu0 %v2699
  %2766 = vmatprep.subr.mxu0 %v2698
  %2767 = vmatpush2.msra.mxu0 %v2697
  %2768 = vmatprep.subr.mxu0 %v2696
  %2769 = vmatpush2.msra.mxu0 %v2695
  %2770 = vmatprep.subr.mxu0 %v2694
  %2771 = vmatpush2.msra.mxu0 %v2693
  %2772 = vmatprep.subr.mxu0 %v2692
  %2773 = vmatpush2.msra.mxu0 %v2691
  %2774 = vmatprep.subr.mxu0 %v2690
  %2775 = vmatpush2.msra.mxu0 %v2689
  %2776 = vmatprep.subr.mxu0 %v2688
  %2777 = vmatpush2.msra.mxu0 %v2687
  %2778 = vmatprep.subr.mxu0 %v2686
  %2779 = vmatpush2.msra.mxu0 %v2685
  %2780 = vmatprep.subr.mxu0 %v2684
  %2781 = vmatpush2.msra.mxu0 %v2683
  %2782 = vmatprep.subr.mxu0 %v2682
  %2783 = vmatpush2.msra.mxu0 %v2681
  %2784 = vmatprep.subr.mxu0 %v2680
  %2785 = vmatpush2.msra.mxu0 %v2679
  %2786 = vmatprep.subr.mxu0 %v2678
  %2787 = vmatpush2.msra.mxu0 %v2677
  %2788 = vmatprep.subr.mxu0 %v2676
  %2789 = vmatpush2.msra.mxu0 %v2675
  %2790 = vmatprep.subr.mxu0 %v2674
  %2791 = vmatpush2.msra.mxu0 %v2673
  %2792 = vmatprep.subr.mxu0 %v2672
  %2793 = vmatpush2.msra.mxu0 %v2671
  %2794 = vmatprep.mubr.f32.mxu0 %v2634
  %2795 = vmatmul.mubr.f32.gmra.mxu0 %v2633
  %v2796 = vpop.f32.mrf.mxu0
  %v2797 = vadd.f32 %v2717, %v2796
  %v2798 = vpop.f32.mrf.mxu0
  %v2799 = vadd.f32 %v2717, %v2798
  %2800 = vmatprep.mubr.f32.mxu0 %v2637
  %2801 = vmatmul.mubr.f32.gmra.mxu0 %v2636
  %v2802 = vpop.f32.mrf.mxu0
  %v2803 = vadd.f32 %v2722, %v2802
  %v2804 = vpop.f32.mrf.mxu0
  %v2805 = vadd.f32 %v2722, %v2804
  %2806 = vdwg.mxu0
  %2807 = vmatprep.subr.mxu0 0.0
  %2808 = vmatpush1.msra.mxu0 0.0
  %2809 = vmatprep.subr.mxu0 0.0
  %2810 = vmatpush1.msra.mxu0 0.0
  %2811 = vmatprep.subr.mxu0 0.0
  %2812 = vmatpush1.msra.mxu0 0.0
  %2813 = vmatprep.subr.mxu0 0.0
  %2814 = vmatpush1.msra.mxu0 0.0
  %2815 = vmatprep.subr.mxu0 0.0
  %2816 = vmatpush1.msra.mxu0 0.0
  %2817 = vmatprep.subr.mxu0 0.0
  %2818 = vmatpush1.msra.mxu0 0.0
  %2819 = vmatprep.subr.mxu0 0.0
  %2820 = vmatpush1.msra.mxu0 0.0
  %2821 = vmatprep.subr.mxu0 0.0
  %2822 = vmatpush1.msra.mxu0 0.0
  %2823 = vmatprep.subr.mxu0 0.0
  %2824 = vmatpush1.msra.mxu0 0.0
  %2825 = vmatprep.subr.mxu0 0.0
  %2826 = vmatpush1.msra.mxu0 0.0
  %2827 = vmatprep.subr.mxu0 0.0
  %2828 = vmatpush1.msra.mxu0 0.0
  %2829 = vmatprep.subr.mxu0 0.0
  %2830 = vmatpush1.msra.mxu0 0.0
  %2831 = vmatprep.subr.mxu0 %v2710
  %2832 = vmatpush1.msra.mxu0 %v2709
  %2833 = vmatprep.subr.mxu0 %v2708
  %2834 = vmatpush1.msra.mxu0 %v2707
  %2835 = vmatprep.subr.mxu0 %v2706
  %2836 = vmatpush1.msra.mxu0 %v2705
  %2837 = vmatprep.subr.mxu0 %v2704
  %2838 = vmatpush1.msra.mxu0 %v2703
  %2839 = vmatprep.subr.mxu0 0.0
  %2840 = vmatpush2.msra.mxu0 0.0
  %2841 = vmatprep.subr.mxu0 0.0
  %2842 = vmatpush2.msra.mxu0 0.0
  %2843 = vmatprep.subr.mxu0 0.0
  %2844 = vmatpush2.msra.mxu0 0.0
  %2845 = vmatprep.subr.mxu0 0.0
  %2846 = vmatpush2.msra.mxu0 0.0
  %2847 = vmatprep.subr.mxu0 0.0
  %2848 = vmatpush2.msra.mxu0 0.0
  %2849 = vmatprep.subr.mxu0 0.0
  %2850 = vmatpush2.msra.mxu0 0.0
  %2851 = vmatprep.subr.mxu0 0.0
  %2852 = vmatpush2.msra.mxu0 0.0
  %2853 = vmatprep.subr.mxu0 0.0
  %2854 = vmatpush2.msra.mxu0 0.0
  %2855 = vmatprep.subr.mxu0 0.0
  %2856 = vmatpush2.msra.mxu0 0.0
  %2857 = vmatprep.subr.mxu0 0.0
  %2858 = vmatpush2.msra.mxu0 0.0
  %2859 = vmatprep.subr.mxu0 0.0
  %2860 = vmatpush2.msra.mxu0 0.0
  %2861 = vmatprep.subr.mxu0 0.0
  %2862 = vmatpush2.msra.mxu0 0.0
  %2863 = vmatprep.subr.mxu0 0.0
  %2864 = vmatpush2.msra.mxu0 0.0
  %2865 = vmatprep.subr.mxu0 0.0
  %2866 = vmatpush2.msra.mxu0 0.0
  %2867 = vmatprep.subr.mxu0 0.0
  %2868 = vmatpush2.msra.mxu0 0.0
  %2869 = vmatprep.subr.mxu0 0.0
  %2870 = vmatpush2.msra.mxu0 0.0
  %2871 = vmatprep.mubr.f32.mxu0 0.0
  %2872 = vmatmul.mubr.f32.gmra.mxu0 %v2725
  %v2873 = vpop.f32.mrf.mxu0
  %v2874 = vadd.f32 %v2797, %v2873
  %v2875 = vpop.f32.mrf.mxu0
  %v2876 = vadd.f32 %v2799, %v2875
  %2877 = vmatprep.mubr.f32.mxu0 0.0
  %2878 = vmatmul.mubr.f32.gmra.mxu0 %v2728
  %v2879 = vpop.f32.mrf.mxu0
  %v2880 = vadd.f32 %v2803, %v2879
  %v2881 = vpop.f32.mrf.mxu0
  %v2882 = vadd.f32 %v2805, %v2881
  %2883 = vdwg.mxu0
  %v2884 = vmax.f32 %v2874, 0.0
  %v2885 = vmax.f32 %v2876, 0.0
  %v2886 = vmax.f32 %v2880, 0.0
  %v2887 = vmax.f32 %v2882, 0.0
  %v2888 = vld [vmem:[%s2] sm:$0x3]
  %v2890 = vlaneseq
  %v2891 = vshrl.u32 %v2890, 7
  %v2892 = vsub.s32 0, %v2891
  %v2893 = vrot.slane %v2888, %v2892
  %v2894 = vlaneseq
  %v2895 = vshrl.u32 %v2894, 7
  %v2896 = vsub.s32 1, %v2895
  %v2897 = vrot.slane %v2888, %v2896
  %v2900 = vmul.f32 %v2884, %v2893
  %v2901 = vmul.f32 %v2885, %v2897
  %v2902 = vmul.f32 %v2886, %v2893
  %v2903 = vmul.f32 %v2887, %v2897
  %2904 = vst.msk [vmem:[#allocation2] sm:$0xff] %vm1235, 0.0
  %2905 = vst.msk [vmem:[#allocation2 + $0x20] sm:$0xff] %vm1235, 0.0
  %2910 = vrot.lane.b32.xlu0 %v2900, 23
  %v2911 = vpop.permute.xlu0 %2910
  %2912 = vrot.lane.b32.xlu0 %v2901, 23
  %v2913 = vpop.permute.xlu0 %2912
  %2914 = vrot.lane.b32.xlu0 %v2902, 23
  %v2915 = vpop.permute.xlu0 %2914
  %2916 = vrot.lane.b32.xlu0 %v2903, 23
  %v2917 = vpop.permute.xlu0 %2916
  %v2918 = vsel %vm1235, %v2911, %v2913
  %v2919 = vsel %vm1235, %v2915, %v2917
  %2924 = vst.msk [vmem:[#allocation2] sm:$0xff] %vm1266, %v2911
  %vm2925 = vcmask 400384
  %2926 = vst.msk [vmem:[#allocation2 + $0x8] sm:$0xff] %vm2925, %v2918
  %2927 = vst.msk [vmem:[#allocation2 + $0x20] sm:$0xff] %vm1266, %v2915
  %2928 = vst.msk [vmem:[#allocation2 + $0x28] sm:$0xff] %vm2925, %v2919
  %vm2929 = vcmask 589192
  %2930 = vst.msk [vmem:[#allocation2 + $0x8] sm:$0xff] %vm2929, 0.0
  %2931 = vst.msk [vmem:[#allocation2 + $0x28] sm:$0xff] %vm2929, 0.0
  %v2932 = vld [vmem:[#allocation2] sm:$0xff]
  %v2933 = vld [vmem:[#allocation2 + $0x20] sm:$0xff]
  %vm2934 = vcmask 719872
  %2935 = vst.msk [vmem:[#allocation4] sm:$0xff] %vm2934, %v2932
  %2936 = vst.msk [vmem:[#allocation4 + $0x18] sm:$0xff] %vm2934, %v2933
  %v2937 = vld [vmem:[#allocation2] sm:$0xff]
  %v2938 = vld [vmem:[#allocation2 + $0x20] sm:$0xff]
  %2941 = vrot.lane.b32.xlu0 %v2937, 127
  %v2942 = vpop.permute.xlu0 %2941
  %2943 = vrot.lane.b32.xlu0 %v2938, 127
  %v2944 = vpop.permute.xlu0 %2943
  %2947 = vst.msk [vmem:[#allocation4 + $0x30] sm:$0xff] %vm2934, %v2942
  %2948 = vst.msk [vmem:[#allocation4 + $0x48] sm:$0xff] %vm2934, %v2944
  %v2949 = vld [vmem:[#allocation2] sm:$0xff]
  %v2950 = vld [vmem:[#allocation2 + $0x20] sm:$0xff]
  %2953 = vrot.lane.b32.xlu0 %v2949, 126
  %v2954 = vpop.permute.xlu0 %2953
  %2955 = vrot.lane.b32.xlu0 %v2950, 126
  %v2956 = vpop.permute.xlu0 %2955
  %2959 = vst.msk [vmem:[#allocation4 + $0x60] sm:$0xff] %vm2934, %v2954
  %2960 = vst.msk [vmem:[#allocation4 + $0x78] sm:$0xff] %vm2934, %v2956
  %v2961 = vld [vmem:[#allocation2] sm:$0xff]
  %v2962 = vld [vmem:[#allocation2 + $0x20] sm:$0xff]
  %2965 = vrot.lane.b32.xlu0 %v2961, 106
  %v2966 = vpop.permute.xlu0 %2965
  %2967 = vrot.lane.b32.xlu0 %v2962, 106
  %v2968 = vpop.permute.xlu0 %2967
  %2971 = vst.msk [vmem:[#allocation4 + $0x90] sm:$0xff] %vm2934, %v2966
  %2972 = vst.msk [vmem:[#allocation4 + $0xa8] sm:$0xff] %vm2934, %v2968
  %v2973 = vld [vmem:[#allocation2] sm:$0xff]
  %v2974 = vld [vmem:[#allocation2 + $0x20] sm:$0xff]
  %2977 = vrot.lane.b32.xlu0 %v2973, 105
  %v2978 = vpop.permute.xlu0 %2977
  %2979 = vrot.lane.b32.xlu0 %v2974, 105
  %v2980 = vpop.permute.xlu0 %2979
  %2983 = vst.msk [vmem:[#allocation4 + $0xc0] sm:$0xff] %vm2934, %v2978
  %2984 = vst.msk [vmem:[#allocation4 + $0xd8] sm:$0xff] %vm2934, %v2980
  %v2985 = vld [vmem:[#allocation2] sm:$0xff]
  %v2986 = vld [vmem:[#allocation2 + $0x20] sm:$0xff]
  %2989 = vrot.lane.b32.xlu0 %v2985, 104
  %v2990 = vpop.permute.xlu0 %2989
  %2991 = vrot.lane.b32.xlu0 %v2986, 104
  %v2992 = vpop.permute.xlu0 %2991
  %2995 = vst.msk [vmem:[#allocation4 + $0xf0] sm:$0xff] %vm2934, %v2990
  %2996 = vst.msk [vmem:[#allocation4 + $0x108] sm:$0xff] %vm2934, %v2992
  %v2997 = vld [vmem:[#allocation2] sm:$0xff]
  %v2998 = vld [vmem:[#allocation2 + $0x8] sm:$0xff]
  %v2999 = vld [vmem:[#allocation2 + $0x20] sm:$0xff]
  %v3000 = vld [vmem:[#allocation2 + $0x28] sm:$0xff]
  %3005 = vrot.lane.b32.xlu0 %v2997, 84
  %v3006 = vpop.permute.xlu0 %3005
  %3007 = vrot.lane.b32.xlu0 %v2998, 84
  %v3008 = vpop.permute.xlu0 %3007
  %3009 = vrot.lane.b32.xlu0 %v2999, 84
  %v3010 = vpop.permute.xlu0 %3009
  %3011 = vrot.lane.b32.xlu0 %v3000, 84
  %v3012 = vpop.permute.xlu0 %3011
  %v3013 = vsel %vm271, %v3006, %v3008
  %v3014 = vsel %vm271, %v3010, %v3012
  %3017 = vst.msk [vmem:[#allocation4 + $0x120] sm:$0xff] %vm2934, %v3013
  %3018 = vst.msk [vmem:[#allocation4 + $0x138] sm:$0xff] %vm2934, %v3014
  %v3019 = vld [vmem:[#allocation2] sm:$0xff]
  %v3020 = vld [vmem:[#allocation2 + $0x8] sm:$0xff]
  %v3021 = vld [vmem:[#allocation2 + $0x20] sm:$0xff]
  %v3022 = vld [vmem:[#allocation2 + $0x28] sm:$0xff]
  %3027 = vrot.lane.b32.xlu0 %v3019, 83
  %v3028 = vpop.permute.xlu0 %3027
  %3029 = vrot.lane.b32.xlu0 %v3020, 83
  %v3030 = vpop.permute.xlu0 %3029
  %3031 = vrot.lane.b32.xlu0 %v3021, 83
  %v3032 = vpop.permute.xlu0 %3031
  %3033 = vrot.lane.b32.xlu0 %v3022, 83
  %v3034 = vpop.permute.xlu0 %3033
  %v3035 = vsel %vm312, %v3028, %v3030
  %v3036 = vsel %vm312, %v3032, %v3034
  %3039 = vst.msk [vmem:[#allocation4 + $0x150] sm:$0xff] %vm2934, %v3035
  %3040 = vst.msk [vmem:[#allocation4 + $0x168] sm:$0xff] %vm2934, %v3036
  %v3041 = vld [vmem:[#allocation2] sm:$0xff]
  %v3042 = vld [vmem:[#allocation2 + $0x8] sm:$0xff]
  %v3043 = vld [vmem:[#allocation2 + $0x20] sm:$0xff]
  %v3044 = vld [vmem:[#allocation2 + $0x28] sm:$0xff]
  %3049 = vrot.lane.b32.xlu0 %v3041, 82
  %v3050 = vpop.permute.xlu0 %3049
  %3051 = vrot.lane.b32.xlu0 %v3042, 82
  %v3052 = vpop.permute.xlu0 %3051
  %3053 = vrot.lane.b32.xlu0 %v3043, 82
  %v3054 = vpop.permute.xlu0 %3053
  %3055 = vrot.lane.b32.xlu0 %v3044, 82
  %v3056 = vpop.permute.xlu0 %3055
  %v3057 = vsel %vm353, %v3050, %v3052
  %v3058 = vsel %vm353, %v3054, %v3056
  %3061 = vst.msk [vmem:[#allocation4 + $0x180] sm:$0xff] %vm2934, %v3057
  %3062 = vst.msk [vmem:[#allocation4 + $0x198] sm:$0xff] %vm2934, %v3058
  %v3063 = vld [vmem:[#allocation2] sm:$0xff]
  %v3064 = vld [vmem:[#allocation2 + $0x8] sm:$0xff]
  %v3065 = vld [vmem:[#allocation2 + $0x20] sm:$0xff]
  %v3066 = vld [vmem:[#allocation2 + $0x28] sm:$0xff]
  %3071 = vrot.lane.b32.xlu0 %v3063, 62
  %v3072 = vpop.permute.xlu0 %3071
  %3073 = vrot.lane.b32.xlu0 %v3064, 62
  %v3074 = vpop.permute.xlu0 %3073
  %3075 = vrot.lane.b32.xlu0 %v3065, 62
  %v3076 = vpop.permute.xlu0 %3075
  %3077 = vrot.lane.b32.xlu0 %v3066, 62
  %v3078 = vpop.permute.xlu0 %3077
  %v3079 = vsel %vm394, %v3072, %v3074
  %v3080 = vsel %vm394, %v3076, %v3078
  %3083 = vst.msk [vmem:[#allocation4 + $0x1b0] sm:$0xff] %vm2934, %v3079
  %3084 = vst.msk [vmem:[#allocation4 + $0x1c8] sm:$0xff] %vm2934, %v3080
  %v3085 = vld [vmem:[#allocation2] sm:$0xff]
  %v3086 = vld [vmem:[#allocation2 + $0x8] sm:$0xff]
  %v3087 = vld [vmem:[#allocation2 + $0x20] sm:$0xff]
  %v3088 = vld [vmem:[#allocation2 + $0x28] sm:$0xff]
  %3093 = vrot.lane.b32.xlu0 %v3085, 61
  %v3094 = vpop.permute.xlu0 %3093
  %3095 = vrot.lane.b32.xlu0 %v3086, 61
  %v3096 = vpop.permute.xlu0 %3095
  %3097 = vrot.lane.b32.xlu0 %v3087, 61
  %v3098 = vpop.permute.xlu0 %3097
  %3099 = vrot.lane.b32.xlu0 %v3088, 61
  %v3100 = vpop.permute.xlu0 %3099
  %v3101 = vsel %vm435, %v3094, %v3096
  %v3102 = vsel %vm435, %v3098, %v3100
  %3105 = vst.msk [vmem:[#allocation4 + $0x1e0] sm:$0xff] %vm2934, %v3101
  %3106 = vst.msk [vmem:[#allocation4 + $0x1f8] sm:$0xff] %vm2934, %v3102
  %v3107 = vld [vmem:[#allocation2] sm:$0xff]
  %v3108 = vld [vmem:[#allocation2 + $0x8] sm:$0xff]
  %v3109 = vld [vmem:[#allocation2 + $0x20] sm:$0xff]
  %v3110 = vld [vmem:[#allocation2 + $0x28] sm:$0xff]
  %3115 = vrot.lane.b32.xlu0 %v3107, 60
  %v3116 = vpop.permute.xlu0 %3115
  %3117 = vrot.lane.b32.xlu0 %v3108, 60
  %v3118 = vpop.permute.xlu0 %3117
  %3119 = vrot.lane.b32.xlu0 %v3109, 60
  %v3120 = vpop.permute.xlu0 %3119
  %3121 = vrot.lane.b32.xlu0 %v3110, 60
  %v3122 = vpop.permute.xlu0 %3121
  %v3123 = vsel %vm476, %v3116, %v3118
  %v3124 = vsel %vm476, %v3120, %v3122
  %3127 = vst.msk [vmem:[#allocation4 + $0x210] sm:$0xff] %vm2934, %v3123
  %3128 = vst.msk [vmem:[#allocation4 + $0x228] sm:$0xff] %vm2934, %v3124
  %v3129 = vld [vmem:[#allocation2] sm:$0xff]
  %v3130 = vld [vmem:[#allocation2 + $0x8] sm:$0xff]
  %v3131 = vld [vmem:[#allocation2 + $0x20] sm:$0xff]
  %v3132 = vld [vmem:[#allocation2 + $0x28] sm:$0xff]
  %3137 = vrot.lane.b32.xlu0 %v3129, 40
  %v3138 = vpop.permute.xlu0 %3137
  %3139 = vrot.lane.b32.xlu0 %v3130, 40
  %v3140 = vpop.permute.xlu0 %3139
  %3141 = vrot.lane.b32.xlu0 %v3131, 40
  %v3142 = vpop.permute.xlu0 %3141
  %3143 = vrot.lane.b32.xlu0 %v3132, 40
  %v3144 = vpop.permute.xlu0 %3143
  %v3145 = vsel %vm517, %v3138, %v3140
  %v3146 = vsel %vm517, %v3142, %v3144
  %3149 = vst.msk [vmem:[#allocation4 + $0x240] sm:$0xff] %vm2934, %v3145
  %3150 = vst.msk [vmem:[#allocation4 + $0x258] sm:$0xff] %vm2934, %v3146
  %v3151 = vld [vmem:[#allocation2] sm:$0xff]
  %v3152 = vld [vmem:[#allocation2 + $0x8] sm:$0xff]
  %v3153 = vld [vmem:[#allocation2 + $0x20] sm:$0xff]
  %v3154 = vld [vmem:[#allocation2 + $0x28] sm:$0xff]
  %3159 = vrot.lane.b32.xlu0 %v3151, 39
  %v3160 = vpop.permute.xlu0 %3159
  %3161 = vrot.lane.b32.xlu0 %v3152, 39
  %v3162 = vpop.permute.xlu0 %3161
  %3163 = vrot.lane.b32.xlu0 %v3153, 39
  %v3164 = vpop.permute.xlu0 %3163
  %3165 = vrot.lane.b32.xlu0 %v3154, 39
  %v3166 = vpop.permute.xlu0 %3165
  %v3167 = vsel %vm558, %v3160, %v3162
  %v3168 = vsel %vm558, %v3164, %v3166
  %3171 = vst.msk [vmem:[#allocation4 + $0x270] sm:$0xff] %vm2934, %v3167
  %3172 = vst.msk [vmem:[#allocation4 + $0x288] sm:$0xff] %vm2934, %v3168
  %v3173 = vld [vmem:[#allocation2] sm:$0xff]
  %v3174 = vld [vmem:[#allocation2 + $0x8] sm:$0xff]
  %v3175 = vld [vmem:[#allocation2 + $0x20] sm:$0xff]
  %v3176 = vld [vmem:[#allocation2 + $0x28] sm:$0xff]
  %3181 = vrot.lane.b32.xlu0 %v3173, 38
  %v3182 = vpop.permute.xlu0 %3181
  %3183 = vrot.lane.b32.xlu0 %v3174, 38
  %v3184 = vpop.permute.xlu0 %3183
  %3185 = vrot.lane.b32.xlu0 %v3175, 38
  %v3186 = vpop.permute.xlu0 %3185
  %3187 = vrot.lane.b32.xlu0 %v3176, 38
  %v3188 = vpop.permute.xlu0 %3187
  %v3189 = vsel %vm599, %v3182, %v3184
  %v3190 = vsel %vm599, %v3186, %v3188
  %3193 = vst.msk [vmem:[#allocation4 + $0x2a0] sm:$0xff] %vm2934, %v3189
  %3194 = vst.msk [vmem:[#allocation4 + $0x2b8] sm:$0xff] %vm2934, %v3190
  %v3195 = vld [vmem:[#allocation2] sm:$0xff]
  %v3196 = vld [vmem:[#allocation2 + $0x8] sm:$0xff]
  %v3197 = vld [vmem:[#allocation2 + $0x20] sm:$0xff]
  %v3198 = vld [vmem:[#allocation2 + $0x28] sm:$0xff]
  %3203 = vrot.lane.b32.xlu0 %v3195, 18
  %v3204 = vpop.permute.xlu0 %3203
  %3205 = vrot.lane.b32.xlu0 %v3196, 18
  %v3206 = vpop.permute.xlu0 %3205
  %3207 = vrot.lane.b32.xlu0 %v3197, 18
  %v3208 = vpop.permute.xlu0 %3207
  %3209 = vrot.lane.b32.xlu0 %v3198, 18
  %v3210 = vpop.permute.xlu0 %3209
  %v3211 = vsel %vm648, %v3204, %v3206
  %v3212 = vsel %vm648, %v3208, %v3210
  %3215 = vst.msk [vmem:[#allocation4 + $0x2d0] sm:$0xff] %vm2934, %v3211
  %3216 = vst.msk [vmem:[#allocation4 + $0x2e8] sm:$0xff] %vm2934, %v3212
  %v3217 = vld [vmem:[#allocation2] sm:$0xff]
  %v3218 = vld [vmem:[#allocation2 + $0x8] sm:$0xff]
  %v3219 = vld [vmem:[#allocation2 + $0x20] sm:$0xff]
  %v3220 = vld [vmem:[#allocation2 + $0x28] sm:$0xff]
  %3225 = vrot.lane.b32.xlu0 %v3217, 17
  %v3226 = vpop.permute.xlu0 %3225
  %3227 = vrot.lane.b32.xlu0 %v3218, 17
  %v3228 = vpop.permute.xlu0 %3227
  %3229 = vrot.lane.b32.xlu0 %v3219, 17
  %v3230 = vpop.permute.xlu0 %3229
  %3231 = vrot.lane.b32.xlu0 %v3220, 17
  %v3232 = vpop.permute.xlu0 %3231
  %v3233 = vsel %vm699, %v3226, %v3228
  %v3234 = vsel %vm699, %v3230, %v3232
  %3237 = vst.msk [vmem:[#allocation4 + $0x300] sm:$0xff] %vm2934, %v3233
  %3238 = vst.msk [vmem:[#allocation4 + $0x318] sm:$0xff] %vm2934, %v3234
  %v3239 = vld [vmem:[#allocation2] sm:$0xff]
  %v3240 = vld [vmem:[#allocation2 + $0x8] sm:$0xff]
  %v3241 = vld [vmem:[#allocation2 + $0x20] sm:$0xff]
  %v3242 = vld [vmem:[#allocation2 + $0x28] sm:$0xff]
  %3247 = vrot.lane.b32.xlu0 %v3239, 16
  %v3248 = vpop.permute.xlu0 %3247
  %3249 = vrot.lane.b32.xlu0 %v3240, 16
  %v3250 = vpop.permute.xlu0 %3249
  %3251 = vrot.lane.b32.xlu0 %v3241, 16
  %v3252 = vpop.permute.xlu0 %3251
  %3253 = vrot.lane.b32.xlu0 %v3242, 16
  %v3254 = vpop.permute.xlu0 %3253
  %v3255 = vsel %vm750, %v3248, %v3250
  %v3256 = vsel %vm750, %v3252, %v3254
  %3259 = vst.msk [vmem:[#allocation4 + $0x330] sm:$0xff] %vm2934, %v3255
  %3260 = vst.msk [vmem:[#allocation4 + $0x348] sm:$0xff] %vm2934, %v3256
  %s3261 = scalar_lea.vmem %s3, 144
  %v3262 = vld [vmem:[%s3261] sm:$0xff]
  %v3263 = vld [vmem:[%s3261 + $0x8] sm:$0xff]
  %v3264 = vld [vmem:[%s3261 + $0x10] sm:$0xff]
  %v3265 = vld [vmem:[%s3261 + $0x18] sm:$0xff]
  %v3266 = vld [vmem:[%s3261 + $0x20] sm:$0xff]
  %v3267 = vld [vmem:[%s3261 + $0x28] sm:$0xff]
  %v3268 = vld [vmem:[#allocation4] sm:$0xff]
  %v3269 = vld [vmem:[#allocation4 + $0x18] sm:$0xff]
  %v3270 = vld [vmem:[#allocation4 + $0x30] sm:$0xff]
  %v3271 = vld [vmem:[#allocation4 + $0x48] sm:$0xff]
  %v3272 = vld [vmem:[#allocation4 + $0x60] sm:$0xff]
  %v3273 = vld [vmem:[#allocation4 + $0x78] sm:$0xff]
  %v3274 = vld [vmem:[#allocation4 + $0x90] sm:$0xff]
  %v3275 = vld [vmem:[#allocation4 + $0xa8] sm:$0xff]
  %v3276 = vld [vmem:[#allocation4 + $0xc0] sm:$0xff]
  %v3277 = vld [vmem:[#allocation4 + $0xd8] sm:$0xff]
  %v3278 = vld [vmem:[#allocation4 + $0xf0] sm:$0xff]
  %v3279 = vld [vmem:[#allocation4 + $0x108] sm:$0xff]
  %v3280 = vld [vmem:[#allocation4 + $0x120] sm:$0xff]
  %v3281 = vld [vmem:[#allocation4 + $0x138] sm:$0xff]
  %v3282 = vld [vmem:[#allocation4 + $0x150] sm:$0xff]
  %v3283 = vld [vmem:[#allocation4 + $0x168] sm:$0xff]
  %v3284 = vld [vmem:[#allocation4 + $0x180] sm:$0xff]
  %v3285 = vld [vmem:[#allocation4 + $0x198] sm:$0xff]
  %v3286 = vld [vmem:[#allocation4 + $0x1b0] sm:$0xff]
  %v3287 = vld [vmem:[#allocation4 + $0x1c8] sm:$0xff]
  %v3288 = vld [vmem:[#allocation4 + $0x1e0] sm:$0xff]
  %v3289 = vld [vmem:[#allocation4 + $0x1f8] sm:$0xff]
  %v3290 = vld [vmem:[#allocation4 + $0x210] sm:$0xff]
  %v3291 = vld [vmem:[#allocation4 + $0x228] sm:$0xff]
  %v3292 = vld [vmem:[#allocation4 + $0x240] sm:$0xff]
  %v3293 = vld [vmem:[#allocation4 + $0x258] sm:$0xff]
  %v3294 = vld [vmem:[#allocation4 + $0x270] sm:$0xff]
  %v3295 = vld [vmem:[#allocation4 + $0x288] sm:$0xff]
  %v3296 = vld [vmem:[#allocation4 + $0x2a0] sm:$0xff]
  %v3297 = vld [vmem:[#allocation4 + $0x2b8] sm:$0xff]
  %v3298 = vld [vmem:[#allocation4 + $0x2d0] sm:$0xff]
  %v3299 = vld [vmem:[#allocation4 + $0x2e8] sm:$0xff]
  %v3300 = vld [vmem:[#allocation4 + $0x300] sm:$0xff]
  %v3301 = vld [vmem:[#allocation4 + $0x318] sm:$0xff]
  %v3302 = vld [vmem:[#allocation4 + $0x330] sm:$0xff]
  %v3303 = vld [vmem:[#allocation4 + $0x348] sm:$0xff]
  %s3304 = scalar_lea.vmem %s4, 48
  %v3305 = vld [vmem:[%s3304] sm:$0xff]
  %v3306 = vld [vmem:[%s3304 + $0x8] sm:$0xff]
  %3308 = vset.pattern.permute.xlu0 0
  %3309 = vperm.xlu0 %3308, %v3305
  %v3310 = vpop.permute.xlu0 %3309
  %3313 = vset.pattern.permute.xlu0 0
  %3314 = vperm.xlu0 %3313, %v3306
  %v3315 = vpop.permute.xlu0 %3314
  %v3318 = vsel %vm895, %v3264, 0
  %v3321 = vsel %vm895, %v3267, 0
  %3323 = vmatprep.subr.mxu0 0.0
  %3324 = vmatpush1.msra.mxu0 %v3283
  %3325 = vmatprep.subr.mxu0 0.0
  %3326 = vmatpush1.msra.mxu0 %v3282
  %3327 = vmatprep.subr.mxu0 0.0
  %3328 = vmatpush1.msra.mxu0 %v3281
  %3329 = vmatprep.subr.mxu0 0.0
  %3330 = vmatpush1.msra.mxu0 %v3280
  %3331 = vmatprep.subr.mxu0 0.0
  %3332 = vmatpush1.msra.mxu0 %v3279
  %3333 = vmatprep.subr.mxu0 0.0
  %3334 = vmatpush1.msra.mxu0 %v3278
  %3335 = vmatprep.subr.mxu0 0.0
  %3336 = vmatpush1.msra.mxu0 %v3277
  %3337 = vmatprep.subr.mxu0 0.0
  %3338 = vmatpush1.msra.mxu0 %v3276
  %3339 = vmatprep.subr.mxu0 0.0
  %3340 = vmatpush1.msra.mxu0 %v3275
  %3341 = vmatprep.subr.mxu0 0.0
  %3342 = vmatpush1.msra.mxu0 %v3274
  %3343 = vmatprep.subr.mxu0 0.0
  %3344 = vmatpush1.msra.mxu0 %v3273
  %3345 = vmatprep.subr.mxu0 0.0
  %3346 = vmatpush1.msra.mxu0 %v3272
  %3347 = vmatprep.subr.mxu0 0.0
  %3348 = vmatpush1.msra.mxu0 %v3271
  %3349 = vmatprep.subr.mxu0 0.0
  %3350 = vmatpush1.msra.mxu0 %v3270
  %3351 = vmatprep.subr.mxu0 0.0
  %3352 = vmatpush1.msra.mxu0 %v3269
  %3353 = vmatprep.subr.mxu0 0.0
  %3354 = vmatpush1.msra.mxu0 %v3268
  %3355 = vmatprep.subr.mxu0 0.0
  %3356 = vmatpush2.msra.mxu0 %v3299
  %3357 = vmatprep.subr.mxu0 0.0
  %3358 = vmatpush2.msra.mxu0 %v3298
  %3359 = vmatprep.subr.mxu0 0.0
  %3360 = vmatpush2.msra.mxu0 %v3297
  %3361 = vmatprep.subr.mxu0 0.0
  %3362 = vmatpush2.msra.mxu0 %v3296
  %3363 = vmatprep.subr.mxu0 0.0
  %3364 = vmatpush2.msra.mxu0 %v3295
  %3365 = vmatprep.subr.mxu0 0.0
  %3366 = vmatpush2.msra.mxu0 %v3294
  %3367 = vmatprep.subr.mxu0 0.0
  %3368 = vmatpush2.msra.mxu0 %v3293
  %3369 = vmatprep.subr.mxu0 0.0
  %3370 = vmatpush2.msra.mxu0 %v3292
  %3371 = vmatprep.subr.mxu0 0.0
  %3372 = vmatpush2.msra.mxu0 %v3291
  %3373 = vmatprep.subr.mxu0 0.0
  %3374 = vmatpush2.msra.mxu0 %v3290
  %3375 = vmatprep.subr.mxu0 0.0
  %3376 = vmatpush2.msra.mxu0 %v3289
  %3377 = vmatprep.subr.mxu0 0.0
  %3378 = vmatpush2.msra.mxu0 %v3288
  %3379 = vmatprep.subr.mxu0 0.0
  %3380 = vmatpush2.msra.mxu0 %v3287
  %3381 = vmatprep.subr.mxu0 0.0
  %3382 = vmatpush2.msra.mxu0 %v3286
  %3383 = vmatprep.subr.mxu0 0.0
  %3384 = vmatpush2.msra.mxu0 %v3285
  %3385 = vmatprep.subr.mxu0 0.0
  %3386 = vmatpush2.msra.mxu0 %v3284
  %3387 = vmatprep.mubr.f32.mxu0 %v3263
  %3388 = vmatmul.mubr.f32.gmra.mxu0 %v3262
  %v3389 = vpop.f32.mrf.mxu0
  %v3390 = vadd.f32 %v3310, %v3389
  %v3391 = vpop.f32.mrf.mxu0
  %3392 = vmatprep.mubr.f32.mxu0 %v3266
  %3393 = vmatmul.mubr.f32.gmra.mxu0 %v3265
  %v3394 = vpop.f32.mrf.mxu0
  %v3395 = vadd.f32 %v3315, %v3394
  %v3396 = vpop.f32.mrf.mxu0
  %3397 = vdwg.mxu0
  %3398 = vmatprep.subr.mxu0 0.0
  %3399 = vmatpush1.msra.mxu0 0.0
  %3400 = vmatprep.subr.mxu0 0.0
  %3401 = vmatpush1.msra.mxu0 0.0
  %3402 = vmatprep.subr.mxu0 0.0
  %3403 = vmatpush1.msra.mxu0 0.0
  %3404 = vmatprep.subr.mxu0 0.0
  %3405 = vmatpush1.msra.mxu0 0.0
  %3406 = vmatprep.subr.mxu0 0.0
  %3407 = vmatpush1.msra.mxu0 0.0
  %3408 = vmatprep.subr.mxu0 0.0
  %3409 = vmatpush1.msra.mxu0 0.0
  %3410 = vmatprep.subr.mxu0 0.0
  %3411 = vmatpush1.msra.mxu0 0.0
  %3412 = vmatprep.subr.mxu0 0.0
  %3413 = vmatpush1.msra.mxu0 0.0
  %3414 = vmatprep.subr.mxu0 0.0
  %3415 = vmatpush1.msra.mxu0 0.0
  %3416 = vmatprep.subr.mxu0 0.0
  %3417 = vmatpush1.msra.mxu0 0.0
  %3418 = vmatprep.subr.mxu0 0.0
  %3419 = vmatpush1.msra.mxu0 0.0
  %3420 = vmatprep.subr.mxu0 0.0
  %3421 = vmatpush1.msra.mxu0 0.0
  %3422 = vmatprep.subr.mxu0 0.0
  %3423 = vmatpush1.msra.mxu0 %v3303
  %3424 = vmatprep.subr.mxu0 0.0
  %3425 = vmatpush1.msra.mxu0 %v3302
  %3426 = vmatprep.subr.mxu0 0.0
  %3427 = vmatpush1.msra.mxu0 %v3301
  %3428 = vmatprep.subr.mxu0 0.0
  %3429 = vmatpush1.msra.mxu0 %v3300
  %3430 = vmatprep.subr.mxu0 0.0
  %3431 = vmatpush2.msra.mxu0 0.0
  %3432 = vmatprep.subr.mxu0 0.0
  %3433 = vmatpush2.msra.mxu0 0.0
  %3434 = vmatprep.subr.mxu0 0.0
  %3435 = vmatpush2.msra.mxu0 0.0
  %3436 = vmatprep.subr.mxu0 0.0
  %3437 = vmatpush2.msra.mxu0 0.0
  %3438 = vmatprep.subr.mxu0 0.0
  %3439 = vmatpush2.msra.mxu0 0.0
  %3440 = vmatprep.subr.mxu0 0.0
  %3441 = vmatpush2.msra.mxu0 0.0
  %3442 = vmatprep.subr.mxu0 0.0
  %3443 = vmatpush2.msra.mxu0 0.0
  %3444 = vmatprep.subr.mxu0 0.0
  %3445 = vmatpush2.msra.mxu0 0.0
  %3446 = vmatprep.subr.mxu0 0.0
  %3447 = vmatpush2.msra.mxu0 0.0
  %3448 = vmatprep.subr.mxu0 0.0
  %3449 = vmatpush2.msra.mxu0 0.0
  %3450 = vmatprep.subr.mxu0 0.0
  %3451 = vmatpush2.msra.mxu0 0.0
  %3452 = vmatprep.subr.mxu0 0.0
  %3453 = vmatpush2.msra.mxu0 0.0
  %3454 = vmatprep.subr.mxu0 0.0
  %3455 = vmatpush2.msra.mxu0 0.0
  %3456 = vmatprep.subr.mxu0 0.0
  %3457 = vmatpush2.msra.mxu0 0.0
  %3458 = vmatprep.subr.mxu0 0.0
  %3459 = vmatpush2.msra.mxu0 0.0
  %3460 = vmatprep.subr.mxu0 0.0
  %3461 = vmatpush2.msra.mxu0 0.0
  %3462 = vmatprep.mubr.f32.mxu0 0.0
  %3463 = vmatmul.mubr.f32.gmra.mxu0 %v3318
  %v3464 = vpop.f32.mrf.mxu0
  %v3465 = vadd.f32 %v3390, %v3464
  %v3466 = vpop.f32.mrf.mxu0
  %3467 = vmatprep.mubr.f32.mxu0 0.0
  %3468 = vmatmul.mubr.f32.gmra.mxu0 %v3321
  %v3469 = vpop.f32.mrf.mxu0
  %v3470 = vadd.f32 %v3395, %v3469
  %v3471 = vpop.f32.mrf.mxu0
  %3472 = vdwg.mxu0
  %v3473 = vmax.f32 %v3465, 0.0
  %v3474 = vmax.f32 %v3470, 0.0
  %v3475 = vld [vmem:[%s2] sm:$0x1]
  %v3477 = vlaneseq
  %v3478 = vshrl.u32 %v3477, 7
  %v3479 = vsub.s32 0, %v3478
  %v3480 = vrot.slane %v3475, %v3479
  %v3482 = vmul.f32 %v3473, %v3480
  %v3483 = vmul.f32 %v3474, %v3480
  %v3484 = vld [vmem:[%s5] sm:$0xff]
  %v3485 = vld [vmem:[%s5 + $0x8] sm:$0xff]
  %v3486 = vld [vmem:[%s5 + $0x10] sm:$0xff]
  %v3487 = vld [vmem:[%s5 + $0x18] sm:$0xff]
  %v3488 = vld [vmem:[%s5 + $0x20] sm:$0xff]
  %v3489 = vld [vmem:[%s5 + $0x28] sm:$0xff]
  %v3490 = vld [vmem:[%s5 + $0x30] sm:$0xff]
  %v3491 = vld [vmem:[%s5 + $0x38] sm:$0xff]
  %v3492 = vld [vmem:[%s5 + $0x40] sm:$0xff]
  %v3493 = vld [vmem:[%s5 + $0x48] sm:$0xff]
  %v3494 = vld [vmem:[%s5 + $0x50] sm:$0xff]
  %s3495 = scalar_lea.vmem %s5, 88
  %v3496 = vld [vmem:[%s3495] sm:$0xff]
  %v3497 = vld [vmem:[%s3495 + $0x8] sm:$0xff]
  %v3498 = vld [vmem:[%s3495 + $0x10] sm:$0xff]
  %v3499 = vld [vmem:[%s3495 + $0x18] sm:$0xff]
  %v3500 = vld [vmem:[%s3495 + $0x20] sm:$0xff]
  %v3501 = vld [vmem:[%s3495 + $0x28] sm:$0xff]
  %v3502 = vld [vmem:[%s3495 + $0x30] sm:$0xff]
  %v3503 = vld [vmem:[%s3495 + $0x38] sm:$0xff]
  %v3504 = vld [vmem:[%s3495 + $0x40] sm:$0xff]
  %v3505 = vld [vmem:[%s3495 + $0x48] sm:$0xff]
  %v3506 = vld [vmem:[%s3495 + $0x50] sm:$0xff]
  %v3508 = vrot.slane %v3482, 4
  %v3509 = vsel %vm2934, %v3508, 0
  %3511 = vmatprep.subr.mxu0 0.0
  %3512 = vmatpush1.msra.mxu0 0.0
  %3513 = vmatprep.subr.mxu0 0.0
  %3514 = vmatpush1.msra.mxu0 0.0
  %3515 = vmatprep.subr.mxu0 0.0
  %3516 = vmatpush1.msra.mxu0 0.0
  %3517 = vmatprep.subr.mxu0 0.0
  %3518 = vmatpush1.msra.mxu0 0.0
  %3519 = vmatprep.subr.mxu0 0.0
  %3520 = vmatpush1.msra.mxu0 0.0
  %3521 = vmatprep.subr.mxu0 0.0
  %3522 = vmatpush1.msra.mxu0 %v3506
  %3523 = vmatprep.subr.mxu0 0.0
  %3524 = vmatpush1.msra.mxu0 %v3505
  %3525 = vmatprep.subr.mxu0 0.0
  %3526 = vmatpush1.msra.mxu0 %v3504
  %3527 = vmatprep.subr.mxu0 0.0
  %3528 = vmatpush1.msra.mxu0 %v3503
  %3529 = vmatprep.subr.mxu0 0.0
  %3530 = vmatpush1.msra.mxu0 %v3502
  %3531 = vmatprep.subr.mxu0 0.0
  %3532 = vmatpush1.msra.mxu0 %v3501
  %3533 = vmatprep.subr.mxu0 0.0
  %3534 = vmatpush1.msra.mxu0 %v3500
  %3535 = vmatprep.subr.mxu0 0.0
  %3536 = vmatpush1.msra.mxu0 %v3499
  %3537 = vmatprep.subr.mxu0 0.0
  %3538 = vmatpush1.msra.mxu0 %v3498
  %3539 = vmatprep.subr.mxu0 0.0
  %3540 = vmatpush1.msra.mxu0 %v3497
  %3541 = vmatprep.subr.mxu0 0.0
  %3542 = vmatpush1.msra.mxu0 %v3496
  %3543 = vmatprep.subr.mxu0 0.0
  %3544 = vmatpush2.msra.mxu0 0.0
  %3545 = vmatprep.subr.mxu0 0.0
  %3546 = vmatpush2.msra.mxu0 0.0
  %3547 = vmatprep.subr.mxu0 0.0
  %3548 = vmatpush2.msra.mxu0 0.0
  %3549 = vmatprep.subr.mxu0 0.0
  %3550 = vmatpush2.msra.mxu0 0.0
  %3551 = vmatprep.subr.mxu0 0.0
  %3552 = vmatpush2.msra.mxu0 0.0
  %3553 = vmatprep.subr.mxu0 0.0
  %3554 = vmatpush2.msra.mxu0 0.0
  %3555 = vmatprep.subr.mxu0 0.0
  %3556 = vmatpush2.msra.mxu0 0.0
  %3557 = vmatprep.subr.mxu0 0.0
  %3558 = vmatpush2.msra.mxu0 0.0
  %3559 = vmatprep.subr.mxu0 0.0
  %3560 = vmatpush2.msra.mxu0 0.0
  %3561 = vmatprep.subr.mxu0 0.0
  %3562 = vmatpush2.msra.mxu0 0.0
  %3563 = vmatprep.subr.mxu0 0.0
  %3564 = vmatpush2.msra.mxu0 0.0
  %3565 = vmatprep.subr.mxu0 0.0
  %3566 = vmatpush2.msra.mxu0 0.0
  %3567 = vmatprep.subr.mxu0 0.0
  %3568 = vmatpush2.msra.mxu0 0.0
  %3569 = vmatprep.subr.mxu0 0.0
  %3570 = vmatpush2.msra.mxu0 0.0
  %3571 = vmatprep.subr.mxu0 0.0
  %3572 = vmatpush2.msra.mxu0 0.0
  %3573 = vmatprep.subr.mxu0 0.0
  %3574 = vmatpush2.msra.mxu0 0.0
  %3575 = vmatprep.mubr.f32.mxu0 0.0
  %3576 = vmatmul.mubr.f32.gmra.mxu0 %v3509
  %v3577 = vpop.f32.mrf.mxu0
  %v3578 = vadd.f32 0.0, %v3577
  %v3579 = vpop.f32.mrf.mxu0
  %3580 = vdwg.mxu0
  %v3581 = vsel %vm2934, %v3482, 0
  %3583 = vmatprep.subr.mxu0 0.0
  %3584 = vmatpush1.msra.mxu0 0.0
  %3585 = vmatprep.subr.mxu0 0.0
  %3586 = vmatpush1.msra.mxu0 0.0
  %3587 = vmatprep.subr.mxu0 0.0
  %3588 = vmatpush1.msra.mxu0 0.0
  %3589 = vmatprep.subr.mxu0 0.0
  %3590 = vmatpush1.msra.mxu0 0.0
  %3591 = vmatprep.subr.mxu0 0.0
  %3592 = vmatpush1.msra.mxu0 0.0
  %3593 = vmatprep.subr.mxu0 0.0
  %3594 = vmatpush1.msra.mxu0 %v3494
  %3595 = vmatprep.subr.mxu0 0.0
  %3596 = vmatpush1.msra.mxu0 %v3493
  %3597 = vmatprep.subr.mxu0 0.0
  %3598 = vmatpush1.msra.mxu0 %v3492
  %3599 = vmatprep.subr.mxu0 0.0
  %3600 = vmatpush1.msra.mxu0 %v3491
  %3601 = vmatprep.subr.mxu0 0.0
  %3602 = vmatpush1.msra.mxu0 %v3490
  %3603 = vmatprep.subr.mxu0 0.0
  %3604 = vmatpush1.msra.mxu0 %v3489
  %3605 = vmatprep.subr.mxu0 0.0
  %3606 = vmatpush1.msra.mxu0 %v3488
  %3607 = vmatprep.subr.mxu0 0.0
  %3608 = vmatpush1.msra.mxu0 %v3487
  %3609 = vmatprep.subr.mxu0 0.0
  %3610 = vmatpush1.msra.mxu0 %v3486
  %3611 = vmatprep.subr.mxu0 0.0
  %3612 = vmatpush1.msra.mxu0 %v3485
  %3613 = vmatprep.subr.mxu0 0.0
  %3614 = vmatpush1.msra.mxu0 %v3484
  %3615 = vmatprep.subr.mxu0 0.0
  %3616 = vmatpush2.msra.mxu0 0.0
  %3617 = vmatprep.subr.mxu0 0.0
  %3618 = vmatpush2.msra.mxu0 0.0
  %3619 = vmatprep.subr.mxu0 0.0
  %3620 = vmatpush2.msra.mxu0 0.0
  %3621 = vmatprep.subr.mxu0 0.0
  %3622 = vmatpush2.msra.mxu0 0.0
  %3623 = vmatprep.subr.mxu0 0.0
  %3624 = vmatpush2.msra.mxu0 0.0
  %3625 = vmatprep.subr.mxu0 0.0
  %3626 = vmatpush2.msra.mxu0 0.0
  %3627 = vmatprep.subr.mxu0 0.0
  %3628 = vmatpush2.msra.mxu0 0.0
  %3629 = vmatprep.subr.mxu0 0.0
  %3630 = vmatpush2.msra.mxu0 0.0
  %3631 = vmatprep.subr.mxu0 0.0
  %3632 = vmatpush2.msra.mxu0 0.0
  %3633 = vmatprep.subr.mxu0 0.0
  %3634 = vmatpush2.msra.mxu0 0.0
  %3635 = vmatprep.subr.mxu0 0.0
  %3636 = vmatpush2.msra.mxu0 0.0
  %3637 = vmatprep.subr.mxu0 0.0
  %3638 = vmatpush2.msra.mxu0 0.0
  %3639 = vmatprep.subr.mxu0 0.0
  %3640 = vmatpush2.msra.mxu0 0.0
  %3641 = vmatprep.subr.mxu0 0.0
  %3642 = vmatpush2.msra.mxu0 0.0
  %3643 = vmatprep.subr.mxu0 0.0
  %3644 = vmatpush2.msra.mxu0 0.0
  %3645 = vmatprep.subr.mxu0 0.0
  %3646 = vmatpush2.msra.mxu0 0.0
  %3647 = vmatprep.mubr.f32.mxu0 0.0
  %3648 = vmatmul.mubr.f32.gmra.mxu0 %v3581
  %v3649 = vpop.f32.mrf.mxu0
  %v3650 = vadd.f32 %v3578, %v3649
  %v3651 = vpop.f32.mrf.mxu0
  %3652 = vdwg.mxu0
  %s3653 = scalar_lea.vmem %s5, 176
  %v3654 = vld [vmem:[%s3653] sm:$0xff]
  %v3655 = vld [vmem:[%s3653 + $0x8] sm:$0xff]
  %v3656 = vld [vmem:[%s3653 + $0x10] sm:$0xff]
  %v3657 = vld [vmem:[%s3653 + $0x18] sm:$0xff]
  %v3658 = vld [vmem:[%s3653 + $0x20] sm:$0xff]
  %v3659 = vld [vmem:[%s3653 + $0x28] sm:$0xff]
  %v3660 = vld [vmem:[%s3653 + $0x30] sm:$0xff]
  %v3661 = vld [vmem:[%s3653 + $0x38] sm:$0xff]
  %v3662 = vld [vmem:[%s3653 + $0x40] sm:$0xff]
  %v3663 = vld [vmem:[%s3653 + $0x48] sm:$0xff]
  %v3664 = vld [vmem:[%s3653 + $0x50] sm:$0xff]
  %v3666 = vsel %vm2934, %v3483, 0
  %3668 = vmatprep.subr.mxu0 0.0
  %3669 = vmatpush1.msra.mxu0 0.0
  %3670 = vmatprep.subr.mxu0 0.0
  %3671 = vmatpush1.msra.mxu0 0.0
  %3672 = vmatprep.subr.mxu0 0.0
  %3673 = vmatpush1.msra.mxu0 0.0
  %3674 = vmatprep.subr.mxu0 0.0
  %3675 = vmatpush1.msra.mxu0 0.0
  %3676 = vmatprep.subr.mxu0 0.0
  %3677 = vmatpush1.msra.mxu0 0.0
  %3678 = vmatprep.subr.mxu0 0.0
  %3679 = vmatpush1.msra.mxu0 %v3664
  %3680 = vmatprep.subr.mxu0 0.0
  %3681 = vmatpush1.msra.mxu0 %v3663
  %3682 = vmatprep.subr.mxu0 0.0
  %3683 = vmatpush1.msra.mxu0 %v3662
  %3684 = vmatprep.subr.mxu0 0.0
  %3685 = vmatpush1.msra.mxu0 %v3661
  %3686 = vmatprep.subr.mxu0 0.0
  %3687 = vmatpush1.msra.mxu0 %v3660
  %3688 = vmatprep.subr.mxu0 0.0
  %3689 = vmatpush1.msra.mxu0 %v3659
  %3690 = vmatprep.subr.mxu0 0.0
  %3691 = vmatpush1.msra.mxu0 %v3658
  %3692 = vmatprep.subr.mxu0 0.0
  %3693 = vmatpush1.msra.mxu0 %v3657
  %3694 = vmatprep.subr.mxu0 0.0
  %3695 = vmatpush1.msra.mxu0 %v3656
  %3696 = vmatprep.subr.mxu0 0.0
  %3697 = vmatpush1.msra.mxu0 %v3655
  %3698 = vmatprep.subr.mxu0 0.0
  %3699 = vmatpush1.msra.mxu0 %v3654
  %3700 = vmatprep.subr.mxu0 0.0
  %3701 = vmatpush2.msra.mxu0 0.0
  %3702 = vmatprep.subr.mxu0 0.0
  %3703 = vmatpush2.msra.mxu0 0.0
  %3704 = vmatprep.subr.mxu0 0.0
  %3705 = vmatpush2.msra.mxu0 0.0
  %3706 = vmatprep.subr.mxu0 0.0
  %3707 = vmatpush2.msra.mxu0 0.0
  %3708 = vmatprep.subr.mxu0 0.0
  %3709 = vmatpush2.msra.mxu0 0.0
  %3710 = vmatprep.subr.mxu0 0.0
  %3711 = vmatpush2.msra.mxu0 0.0
  %3712 = vmatprep.subr.mxu0 0.0
  %3713 = vmatpush2.msra.mxu0 0.0
  %3714 = vmatprep.subr.mxu0 0.0
  %3715 = vmatpush2.msra.mxu0 0.0
  %3716 = vmatprep.subr.mxu0 0.0
  %3717 = vmatpush2.msra.mxu0 0.0
  %3718 = vmatprep.subr.mxu0 0.0
  %3719 = vmatpush2.msra.mxu0 0.0
  %3720 = vmatprep.subr.mxu0 0.0
  %3721 = vmatpush2.msra.mxu0 0.0
  %3722 = vmatprep.subr.mxu0 0.0
  %3723 = vmatpush2.msra.mxu0 0.0
  %3724 = vmatprep.subr.mxu0 0.0
  %3725 = vmatpush2.msra.mxu0 0.0
  %3726 = vmatprep.subr.mxu0 0.0
  %3727 = vmatpush2.msra.mxu0 0.0
  %3728 = vmatprep.subr.mxu0 0.0
  %3729 = vmatpush2.msra.mxu0 0.0
  %3730 = vmatprep.subr.mxu0 0.0
  %3731 = vmatpush2.msra.mxu0 0.0
  %3732 = vmatprep.mubr.f32.mxu0 0.0
  %3733 = vmatmul.mubr.f32.gmra.mxu0 %v3666
  %v3734 = vpop.f32.mrf.mxu0
  %v3735 = vadd.f32 0.0, %v3734
  %v3736 = vpop.f32.mrf.mxu0
  %3737 = vdwg.mxu0
  %v3738 = vadd.f32 %v3650, %v3735
  %s3739 = scalar_lea.vmem %s5, 264
  %v3740 = vld [vmem:[%s3739] sm:$0xff]
  %v3741 = vld [vmem:[%s3739 + $0x8] sm:$0xff]
  %v3742 = vld [vmem:[%s3739 + $0x10] sm:$0xff]
  %v3743 = vld [vmem:[%s3739 + $0x18] sm:$0xff]
  %v3744 = vld [vmem:[%s3739 + $0x20] sm:$0xff]
  %v3745 = vld [vmem:[%s3739 + $0x28] sm:$0xff]
  %v3746 = vld [vmem:[%s3739 + $0x30] sm:$0xff]
  %v3747 = vld [vmem:[%s3739 + $0x38] sm:$0xff]
  %v3748 = vld [vmem:[%s3739 + $0x40] sm:$0xff]
  %v3749 = vld [vmem:[%s3739 + $0x48] sm:$0xff]
  %v3750 = vld [vmem:[%s3739 + $0x50] sm:$0xff]
  %v3751 = vrot.slane %v3483, 4
  %v3752 = vsel %vm2934, %v3751, 0
  %3754 = vmatprep.subr.mxu0 0.0
  %3755 = vmatpush1.msra.mxu0 0.0
  %3756 = vmatprep.subr.mxu0 0.0
  %3757 = vmatpush1.msra.mxu0 0.0
  %3758 = vmatprep.subr.mxu0 0.0
  %3759 = vmatpush1.msra.mxu0 0.0
  %3760 = vmatprep.subr.mxu0 0.0
  %3761 = vmatpush1.msra.mxu0 0.0
  %3762 = vmatprep.subr.mxu0 0.0
  %3763 = vmatpush1.msra.mxu0 0.0
  %3764 = vmatprep.subr.mxu0 0.0
  %3765 = vmatpush1.msra.mxu0 %v3750
  %3766 = vmatprep.subr.mxu0 0.0
  %3767 = vmatpush1.msra.mxu0 %v3749
  %3768 = vmatprep.subr.mxu0 0.0
  %3769 = vmatpush1.msra.mxu0 %v3748
  %3770 = vmatprep.subr.mxu0 0.0
  %3771 = vmatpush1.msra.mxu0 %v3747
  %3772 = vmatprep.subr.mxu0 0.0
  %3773 = vmatpush1.msra.mxu0 %v3746
  %3774 = vmatprep.subr.mxu0 0.0
  %3775 = vmatpush1.msra.mxu0 %v3745
  %3776 = vmatprep.subr.mxu0 0.0
  %3777 = vmatpush1.msra.mxu0 %v3744
  %3778 = vmatprep.subr.mxu0 0.0
  %3779 = vmatpush1.msra.mxu0 %v3743
  %3780 = vmatprep.subr.mxu0 0.0
  %3781 = vmatpush1.msra.mxu0 %v3742
  %3782 = vmatprep.subr.mxu0 0.0
  %3783 = vmatpush1.msra.mxu0 %v3741
  %3784 = vmatprep.subr.mxu0 0.0
  %3785 = vmatpush1.msra.mxu0 %v3740
  %3786 = vmatprep.subr.mxu0 0.0
  %3787 = vmatpush2.msra.mxu0 0.0
  %3788 = vmatprep.subr.mxu0 0.0
  %3789 = vmatpush2.msra.mxu0 0.0
  %3790 = vmatprep.subr.mxu0 0.0
  %3791 = vmatpush2.msra.mxu0 0.0
  %3792 = vmatprep.subr.mxu0 0.0
  %3793 = vmatpush2.msra.mxu0 0.0
  %3794 = vmatprep.subr.mxu0 0.0
  %3795 = vmatpush2.msra.mxu0 0.0
  %3796 = vmatprep.subr.mxu0 0.0
  %3797 = vmatpush2.msra.mxu0 0.0
  %3798 = vmatprep.subr.mxu0 0.0
  %3799 = vmatpush2.msra.mxu0 0.0
  %3800 = vmatprep.subr.mxu0 0.0
  %3801 = vmatpush2.msra.mxu0 0.0
  %3802 = vmatprep.subr.mxu0 0.0
  %3803 = vmatpush2.msra.mxu0 0.0
  %3804 = vmatprep.subr.mxu0 0.0
  %3805 = vmatpush2.msra.mxu0 0.0
  %3806 = vmatprep.subr.mxu0 0.0
  %3807 = vmatpush2.msra.mxu0 0.0
  %3808 = vmatprep.subr.mxu0 0.0
  %3809 = vmatpush2.msra.mxu0 0.0
  %3810 = vmatprep.subr.mxu0 0.0
  %3811 = vmatpush2.msra.mxu0 0.0
  %3812 = vmatprep.subr.mxu0 0.0
  %3813 = vmatpush2.msra.mxu0 0.0
  %3814 = vmatprep.subr.mxu0 0.0
  %3815 = vmatpush2.msra.mxu0 0.0
  %3816 = vmatprep.subr.mxu0 0.0
  %3817 = vmatpush2.msra.mxu0 0.0
  %3818 = vmatprep.mubr.f32.mxu0 0.0
  %3819 = vmatmul.mubr.f32.gmra.mxu0 %v3752
  %v3820 = vpop.f32.mrf.mxu0
  %v3821 = vadd.f32 0.0, %v3820
  %v3822 = vpop.f32.mrf.mxu0
  %3823 = vdwg.mxu0
  %v3824 = vadd.f32 %v3738, %v3821
  %v3825 = vld [vmem:[%s6 + $0x20] sm:$0x1]
  %v3826 = vlaneseq
  %v3827 = vshrl.u32 %v3826, 7
  %v3828 = vsub.s32 0, %v3827
  %v3829 = vrot.slane %v3825, %v3828
  %v3830 = vadd.f32 %v3824, %v3829
  %v3831 = vld [vmem:[%s6] sm:$0xff]
  %v3832 = vld [vmem:[%s6 + $0x8] sm:$0xff]
  %v3833 = vld [vmem:[%s6 + $0x10] sm:$0xff]
  %v3834 = vld [vmem:[%s6 + $0x18] sm:$0xff]
  %v3835 = vld [vmem:[%s1] sm:$0x1]
  %v3837 = vsel %vm895, %v3835, 0
  %3839 = vmatprep.subr.mxu0 0.0
  %3840 = vmatpush1.msra.mxu0 0.0
  %3841 = vmatprep.subr.mxu0 0.0
  %3842 = vmatpush1.msra.mxu0 0.0
  %3843 = vmatprep.subr.mxu0 0.0
  %3844 = vmatpush1.msra.mxu0 0.0
  %3845 = vmatprep.subr.mxu0 0.0
  %3846 = vmatpush1.msra.mxu0 0.0
  %3847 = vmatprep.subr.mxu0 0.0
  %3848 = vmatpush1.msra.mxu0 0.0
  %3849 = vmatprep.subr.mxu0 0.0
  %3850 = vmatpush1.msra.mxu0 0.0
  %3851 = vmatprep.subr.mxu0 0.0
  %3852 = vmatpush1.msra.mxu0 0.0
  %3853 = vmatprep.subr.mxu0 0.0
  %3854 = vmatpush1.msra.mxu0 0.0
  %3855 = vmatprep.subr.mxu0 0.0
  %3856 = vmatpush1.msra.mxu0 0.0
  %3857 = vmatprep.subr.mxu0 0.0
  %3858 = vmatpush1.msra.mxu0 0.0
  %3859 = vmatprep.subr.mxu0 0.0
  %3860 = vmatpush1.msra.mxu0 0.0
  %3861 = vmatprep.subr.mxu0 0.0
  %3862 = vmatpush1.msra.mxu0 0.0
  %3863 = vmatprep.subr.mxu0 0.0
  %3864 = vmatpush1.msra.mxu0 %v3834
  %3865 = vmatprep.subr.mxu0 0.0
  %3866 = vmatpush1.msra.mxu0 %v3833
  %3867 = vmatprep.subr.mxu0 0.0
  %3868 = vmatpush1.msra.mxu0 %v3832
  %3869 = vmatprep.subr.mxu0 0.0
  %3870 = vmatpush1.msra.mxu0 %v3831
  %3871 = vmatprep.subr.mxu0 0.0
  %3872 = vmatpush2.msra.mxu0 0.0
  %3873 = vmatprep.subr.mxu0 0.0
  %3874 = vmatpush2.msra.mxu0 0.0
  %3875 = vmatprep.subr.mxu0 0.0
  %3876 = vmatpush2.msra.mxu0 0.0
  %3877 = vmatprep.subr.mxu0 0.0
  %3878 = vmatpush2.msra.mxu0 0.0
  %3879 = vmatprep.subr.mxu0 0.0
  %3880 = vmatpush2.msra.mxu0 0.0
  %3881 = vmatprep.subr.mxu0 0.0
  %3882 = vmatpush2.msra.mxu0 0.0
  %3883 = vmatprep.subr.mxu0 0.0
  %3884 = vmatpush2.msra.mxu0 0.0
  %3885 = vmatprep.subr.mxu0 0.0
  %3886 = vmatpush2.msra.mxu0 0.0
  %3887 = vmatprep.subr.mxu0 0.0
  %3888 = vmatpush2.msra.mxu0 0.0
  %3889 = vmatprep.subr.mxu0 0.0
  %3890 = vmatpush2.msra.mxu0 0.0
  %3891 = vmatprep.subr.mxu0 0.0
  %3892 = vmatpush2.msra.mxu0 0.0
  %3893 = vmatprep.subr.mxu0 0.0
  %3894 = vmatpush2.msra.mxu0 0.0
  %3895 = vmatprep.subr.mxu0 0.0
  %3896 = vmatpush2.msra.mxu0 0.0
  %3897 = vmatprep.subr.mxu0 0.0
  %3898 = vmatpush2.msra.mxu0 0.0
  %3899 = vmatprep.subr.mxu0 0.0
  %3900 = vmatpush2.msra.mxu0 0.0
  %3901 = vmatprep.subr.mxu0 0.0
  %3902 = vmatpush2.msra.mxu0 0.0
  %3903 = vmatprep.mubr.f32.mxu0 0.0
  %3904 = vmatmul.mubr.f32.gmra.mxu0 %v3837
  %v3905 = vpop.f32.mrf.mxu0
  %v3906 = vadd.f32 0.0, %v3905
  %v3907 = vpop.f32.mrf.mxu0
  %3908 = vdwg.mxu0
  %v3909 = vadd.f32 %v3830, %v3906
  %v3910 = vmul.f32 %v3909, 0.5
  %v3911 = vtanh.pop %v3910
  %v3912 = vmul.f32 %v3911, 0.5
  %v3913 = vadd.f32 %v3912, 0.5
  %v3914 = vtanh.pop %v3909
  %v3915 = vmul.f32 %v3913, %v3835
  %3917 = vrot.lane.b32.xlu0 %v3914, 64
  %v3918 = vpop.permute.xlu0 %3917
  %v3920 = vmul.f32 %v3913, %v3918
  %3922 = vrot.lane.b32.xlu0 %v3920, 32
  %v3923 = vpop.permute.xlu0 %3922
  %v3925 = vadd.f32 %v3915, %v3923
  %v3926 = vtanh.pop %v3925
  %3928 = vrot.lane.b32.xlu0 %v3926, 64
  %v3929 = vpop.permute.xlu0 %3928
  %v3931 = vmul.f32 %v3913, %v3929
  %3933 = vrot.lane.b32.xlu0 %v3931, 32
  %v3934 = vpop.permute.xlu0 %3933
  %v3935 = vsel %vm895, %v3934, 0
  %3937 = vmatprep.subr.mxu0 0.0
  %3938 = vmatpush1.msra.mxu0 0.0
  %3939 = vmatprep.subr.mxu0 0.0
  %3940 = vmatpush1.msra.mxu0 0.0
  %3941 = vmatprep.subr.mxu0 0.0
  %3942 = vmatpush1.msra.mxu0 0.0
  %3943 = vmatprep.subr.mxu0 0.0
  %3944 = vmatpush1.msra.mxu0 0.0
  %3945 = vmatprep.subr.mxu0 0.0
  %3946 = vmatpush1.msra.mxu0 0.0
  %3947 = vmatprep.subr.mxu0 0.0
  %3948 = vmatpush1.msra.mxu0 0.0
  %3949 = vmatprep.subr.mxu0 0.0
  %3950 = vmatpush1.msra.mxu0 0.0
  %3951 = vmatprep.subr.mxu0 0.0
  %3952 = vmatpush1.msra.mxu0 0.0
  %3953 = vmatprep.subr.mxu0 0.0
  %3954 = vmatpush1.msra.mxu0 0.0
  %3955 = vmatprep.subr.mxu0 0.0
  %3956 = vmatpush1.msra.mxu0 0.0
  %3957 = vmatprep.subr.mxu0 0.0
  %3958 = vmatpush1.msra.mxu0 0.0
  %3959 = vmatprep.subr.mxu0 0.0
  %3960 = vmatpush1.msra.mxu0 0.0
  %3961 = vmatprep.subr.mxu0 0.0
  %3962 = vmatpush1.msra.mxu0 %v3834
  %3963 = vmatprep.subr.mxu0 0.0
  %3964 = vmatpush1.msra.mxu0 %v3833
  %3965 = vmatprep.subr.mxu0 0.0
  %3966 = vmatpush1.msra.mxu0 %v3832
  %3967 = vmatprep.subr.mxu0 0.0
  %3968 = vmatpush1.msra.mxu0 %v3831
  %3969 = vmatprep.subr.mxu0 0.0
  %3970 = vmatpush2.msra.mxu0 0.0
  %3971 = vmatprep.subr.mxu0 0.0
  %3972 = vmatpush2.msra.mxu0 0.0
  %3973 = vmatprep.subr.mxu0 0.0
  %3974 = vmatpush2.msra.mxu0 0.0
  %3975 = vmatprep.subr.mxu0 0.0
  %3976 = vmatpush2.msra.mxu0 0.0
  %3977 = vmatprep.subr.mxu0 0.0
  %3978 = vmatpush2.msra.mxu0 0.0
  %3979 = vmatprep.subr.mxu0 0.0
  %3980 = vmatpush2.msra.mxu0 0.0
  %3981 = vmatprep.subr.mxu0 0.0
  %3982 = vmatpush2.msra.mxu0 0.0
  %3983 = vmatprep.subr.mxu0 0.0
  %3984 = vmatpush2.msra.mxu0 0.0
  %3985 = vmatprep.subr.mxu0 0.0
  %3986 = vmatpush2.msra.mxu0 0.0
  %3987 = vmatprep.subr.mxu0 0.0
  %3988 = vmatpush2.msra.mxu0 0.0
  %3989 = vmatprep.subr.mxu0 0.0
  %3990 = vmatpush2.msra.mxu0 0.0
  %3991 = vmatprep.subr.mxu0 0.0
  %3992 = vmatpush2.msra.mxu0 0.0
  %3993 = vmatprep.subr.mxu0 0.0
  %3994 = vmatpush2.msra.mxu0 0.0
  %3995 = vmatprep.subr.mxu0 0.0
  %3996 = vmatpush2.msra.mxu0 0.0
  %3997 = vmatprep.subr.mxu0 0.0
  %3998 = vmatpush2.msra.mxu0 0.0
  %3999 = vmatprep.subr.mxu0 0.0
  %4000 = vmatpush2.msra.mxu0 0.0
  %4001 = vmatprep.mubr.f32.mxu0 0.0
  %4002 = vmatmul.mubr.f32.gmra.mxu0 %v3935
  %v4003 = vpop.f32.mrf.mxu0
  %v4004 = vadd.f32 0.0, %v4003
  %v4005 = vpop.f32.mrf.mxu0
  %4006 = vdwg.mxu0
  %v4008 = vrot.slane %v4004, 7
  %v4010 = vadd.f32 %v3830, %v4008
  %v4011 = vmul.f32 %v4010, 0.5
  %v4012 = vtanh.pop %v4011
  %v4013 = vmul.f32 %v4012, 0.5
  %v4014 = vadd.f32 %v4013, 0.5
  %v4015 = vtanh.pop %v4010
  %v4017 = vrot.slane %v3925, 7
  %v4019 = vmul.f32 %v4014, %v4017
  %4021 = vrot.lane.b32.xlu0 %v4015, 64
  %v4022 = vpop.permute.xlu0 %4021
  %v4024 = vmul.f32 %v4014, %v4022
  %4026 = vrot.lane.b32.xlu0 %v4024, 32
  %v4027 = vpop.permute.xlu0 %4026
  %v4029 = vadd.f32 %v4019, %v4027
  %v4030 = vtanh.pop %v4029
  %4032 = vrot.lane.b32.xlu0 %v4030, 64
  %v4033 = vpop.permute.xlu0 %4032
  %v4035 = vmul.f32 %v4014, %v4033
  %v4037 = vrot.slane %v4035, 1
  %4038 = vrot.lane.b32.xlu0 %v4037, 32
  %v4039 = vpop.permute.xlu0 %4038
  %v4040 = vsel %vm895, %v4039, 0
  %4042 = vmatprep.subr.mxu0 0.0
  %4043 = vmatpush1.msra.mxu0 0.0
  %4044 = vmatprep.subr.mxu0 0.0
  %4045 = vmatpush1.msra.mxu0 0.0
  %4046 = vmatprep.subr.mxu0 0.0
  %4047 = vmatpush1.msra.mxu0 0.0
  %4048 = vmatprep.subr.mxu0 0.0
  %4049 = vmatpush1.msra.mxu0 0.0
  %4050 = vmatprep.subr.mxu0 0.0
  %4051 = vmatpush1.msra.mxu0 0.0
  %4052 = vmatprep.subr.mxu0 0.0
  %4053 = vmatpush1.msra.mxu0 0.0
  %4054 = vmatprep.subr.mxu0 0.0
  %4055 = vmatpush1.msra.mxu0 0.0
  %4056 = vmatprep.subr.mxu0 0.0
  %4057 = vmatpush1.msra.mxu0 0.0
  %4058 = vmatprep.subr.mxu0 0.0
  %4059 = vmatpush1.msra.mxu0 0.0
  %4060 = vmatprep.subr.mxu0 0.0
  %4061 = vmatpush1.msra.mxu0 0.0
  %4062 = vmatprep.subr.mxu0 0.0
  %4063 = vmatpush1.msra.mxu0 0.0
  %4064 = vmatprep.subr.mxu0 0.0
  %4065 = vmatpush1.msra.mxu0 0.0
  %4066 = vmatprep.subr.mxu0 0.0
  %4067 = vmatpush1.msra.mxu0 %v3834
  %4068 = vmatprep.subr.mxu0 0.0
  %4069 = vmatpush1.msra.mxu0 %v3833
  %4070 = vmatprep.subr.mxu0 0.0
  %4071 = vmatpush1.msra.mxu0 %v3832
  %4072 = vmatprep.subr.mxu0 0.0
  %4073 = vmatpush1.msra.mxu0 %v3831
  %4074 = vmatprep.subr.mxu0 0.0
  %4075 = vmatpush2.msra.mxu0 0.0
  %4076 = vmatprep.subr.mxu0 0.0
  %4077 = vmatpush2.msra.mxu0 0.0
  %4078 = vmatprep.subr.mxu0 0.0
  %4079 = vmatpush2.msra.mxu0 0.0
  %4080 = vmatprep.subr.mxu0 0.0
  %4081 = vmatpush2.msra.mxu0 0.0
  %4082 = vmatprep.subr.mxu0 0.0
  %4083 = vmatpush2.msra.mxu0 0.0
  %4084 = vmatprep.subr.mxu0 0.0
  %4085 = vmatpush2.msra.mxu0 0.0
  %4086 = vmatprep.subr.mxu0 0.0
  %4087 = vmatpush2.msra.mxu0 0.0
  %4088 = vmatprep.subr.mxu0 0.0
  %4089 = vmatpush2.msra.mxu0 0.0
  %4090 = vmatprep.subr.mxu0 0.0
  %4091 = vmatpush2.msra.mxu0 0.0
  %4092 = vmatprep.subr.mxu0 0.0
  %4093 = vmatpush2.msra.mxu0 0.0
  %4094 = vmatprep.subr.mxu0 0.0
  %4095 = vmatpush2.msra.mxu0 0.0
  %4096 = vmatprep.subr.mxu0 0.0
  %4097 = vmatpush2.msra.mxu0 0.0
  %4098 = vmatprep.subr.mxu0 0.0
  %4099 = vmatpush2.msra.mxu0 0.0
  %4100 = vmatprep.subr.mxu0 0.0
  %4101 = vmatpush2.msra.mxu0 0.0
  %4102 = vmatprep.subr.mxu0 0.0
  %4103 = vmatpush2.msra.mxu0 0.0
  %4104 = vmatprep.subr.mxu0 0.0
  %4105 = vmatpush2.msra.mxu0 0.0
  %4106 = vmatprep.mubr.f32.mxu0 0.0
  %4107 = vmatmul.mubr.f32.gmra.mxu0 %v4040
  %v4108 = vpop.f32.mrf.mxu0
  %v4109 = vadd.f32 0.0, %v4108
  %v4110 = vpop.f32.mrf.mxu0
  %4111 = vdwg.mxu0
  %v4113 = vrot.slane %v4109, 6
  %v4115 = vadd.f32 %v3830, %v4113
  %v4116 = vmul.f32 %v4115, 0.5
  %v4117 = vtanh.pop %v4116
  %v4118 = vmul.f32 %v4117, 0.5
  %v4119 = vadd.f32 %v4118, 0.5
  %v4120 = vtanh.pop %v4115
  %v4122 = vrot.slane %v4029, 7
  %v4124 = vmul.f32 %v4119, %v4122
  %4126 = vrot.lane.b32.xlu0 %v4120, 64
  %v4127 = vpop.permute.xlu0 %4126
  %v4129 = vmul.f32 %v4119, %v4127
  %4131 = vrot.lane.b32.xlu0 %v4129, 32
  %v4132 = vpop.permute.xlu0 %4131
  %v4134 = vadd.f32 %v4124, %v4132
  %v4135 = vtanh.pop %v4134
  %4137 = vrot.lane.b32.xlu0 %v4135, 64
  %v4138 = vpop.permute.xlu0 %4137
  %v4140 = vmul.f32 %v4119, %v4138
  %v4142 = vrot.slane %v4140, 2
  %4143 = vrot.lane.b32.xlu0 %v4142, 32
  %v4144 = vpop.permute.xlu0 %4143
  %v4145 = vsel %vm895, %v4144, 0
  %4147 = vmatprep.subr.mxu0 0.0
  %4148 = vmatpush1.msra.mxu0 0.0
  %4149 = vmatprep.subr.mxu0 0.0
  %4150 = vmatpush1.msra.mxu0 0.0
  %4151 = vmatprep.subr.mxu0 0.0
  %4152 = vmatpush1.msra.mxu0 0.0
  %4153 = vmatprep.subr.mxu0 0.0
  %4154 = vmatpush1.msra.mxu0 0.0
  %4155 = vmatprep.subr.mxu0 0.0
  %4156 = vmatpush1.msra.mxu0 0.0
  %4157 = vmatprep.subr.mxu0 0.0
  %4158 = vmatpush1.msra.mxu0 0.0
  %4159 = vmatprep.subr.mxu0 0.0
  %4160 = vmatpush1.msra.mxu0 0.0
  %4161 = vmatprep.subr.mxu0 0.0
  %4162 = vmatpush1.msra.mxu0 0.0
  %4163 = vmatprep.subr.mxu0 0.0
  %4164 = vmatpush1.msra.mxu0 0.0
  %4165 = vmatprep.subr.mxu0 0.0
  %4166 = vmatpush1.msra.mxu0 0.0
  %4167 = vmatprep.subr.mxu0 0.0
  %4168 = vmatpush1.msra.mxu0 0.0
  %4169 = vmatprep.subr.mxu0 0.0
  %4170 = vmatpush1.msra.mxu0 0.0
  %4171 = vmatprep.subr.mxu0 0.0
  %4172 = vmatpush1.msra.mxu0 %v3834
  %4173 = vmatprep.subr.mxu0 0.0
  %4174 = vmatpush1.msra.mxu0 %v3833
  %4175 = vmatprep.subr.mxu0 0.0
  %4176 = vmatpush1.msra.mxu0 %v3832
  %4177 = vmatprep.subr.mxu0 0.0
  %4178 = vmatpush1.msra.mxu0 %v3831
  %4179 = vmatprep.subr.mxu0 0.0
  %4180 = vmatpush2.msra.mxu0 0.0
  %4181 = vmatprep.subr.mxu0 0.0
  %4182 = vmatpush2.msra.mxu0 0.0
  %4183 = vmatprep.subr.mxu0 0.0
  %4184 = vmatpush2.msra.mxu0 0.0
  %4185 = vmatprep.subr.mxu0 0.0
  %4186 = vmatpush2.msra.mxu0 0.0
  %4187 = vmatprep.subr.mxu0 0.0
  %4188 = vmatpush2.msra.mxu0 0.0
  %4189 = vmatprep.subr.mxu0 0.0
  %4190 = vmatpush2.msra.mxu0 0.0
  %4191 = vmatprep.subr.mxu0 0.0
  %4192 = vmatpush2.msra.mxu0 0.0
  %4193 = vmatprep.subr.mxu0 0.0
  %4194 = vmatpush2.msra.mxu0 0.0
  %4195 = vmatprep.subr.mxu0 0.0
  %4196 = vmatpush2.msra.mxu0 0.0
  %4197 = vmatprep.subr.mxu0 0.0
  %4198 = vmatpush2.msra.mxu0 0.0
  %4199 = vmatprep.subr.mxu0 0.0
  %4200 = vmatpush2.msra.mxu0 0.0
  %4201 = vmatprep.subr.mxu0 0.0
  %4202 = vmatpush2.msra.mxu0 0.0
  %4203 = vmatprep.subr.mxu0 0.0
  %4204 = vmatpush2.msra.mxu0 0.0
  %4205 = vmatprep.subr.mxu0 0.0
  %4206 = vmatpush2.msra.mxu0 0.0
  %4207 = vmatprep.subr.mxu0 0.0
  %4208 = vmatpush2.msra.mxu0 0.0
  %4209 = vmatprep.subr.mxu0 0.0
  %4210 = vmatpush2.msra.mxu0 0.0
  %4211 = vmatprep.mubr.f32.mxu0 0.0
  %4212 = vmatmul.mubr.f32.gmra.mxu0 %v4145
  %v4213 = vpop.f32.mrf.mxu0
  %v4214 = vadd.f32 0.0, %v4213
  %v4215 = vpop.f32.mrf.mxu0
  %4216 = vdwg.mxu0
  %v4218 = vrot.slane %v4214, 5
  %v4220 = vadd.f32 %v3830, %v4218
  %v4221 = vmul.f32 %v4220, 0.5
  %v4222 = vtanh.pop %v4221
  %v4223 = vmul.f32 %v4222, 0.5
  %v4224 = vadd.f32 %v4223, 0.5
  %v4225 = vtanh.pop %v4220
  %v4227 = vrot.slane %v4134, 7
  %v4229 = vmul.f32 %v4224, %v4227
  %4231 = vrot.lane.b32.xlu0 %v4225, 64
  %v4232 = vpop.permute.xlu0 %4231
  %v4234 = vmul.f32 %v4224, %v4232
  %4236 = vrot.lane.b32.xlu0 %v4234, 32
  %v4237 = vpop.permute.xlu0 %4236
  %v4239 = vadd.f32 %v4229, %v4237
  %v4240 = vtanh.pop %v4239
  %4242 = vrot.lane.b32.xlu0 %v4240, 64
  %v4243 = vpop.permute.xlu0 %4242
  %v4245 = vmul.f32 %v4224, %v4243
  %v4246 = vld [vmem:[%s7 + $0x80] sm:$0x1]
  %v4247 = vld [vmem:[%s7] sm:$0xff]
  %v4248 = vld [vmem:[%s7 + $0x8] sm:$0xff]
  %v4249 = vld [vmem:[%s7 + $0x10] sm:$0xff]
  %v4250 = vld [vmem:[%s7 + $0x18] sm:$0xff]
  %4251 = vmatprep.subr.mxu0 0.0
  %4252 = vmatpush1.msra.mxu0 0.0
  %4253 = vmatprep.subr.mxu0 0.0
  %4254 = vmatpush1.msra.mxu0 0.0
  %4255 = vmatprep.subr.mxu0 0.0
  %4256 = vmatpush1.msra.mxu0 0.0
  %4257 = vmatprep.subr.mxu0 0.0
  %4258 = vmatpush1.msra.mxu0 0.0
  %4259 = vmatprep.subr.mxu0 0.0
  %4260 = vmatpush1.msra.mxu0 0.0
  %4261 = vmatprep.subr.mxu0 0.0
  %4262 = vmatpush1.msra.mxu0 0.0
  %4263 = vmatprep.subr.mxu0 0.0
  %4264 = vmatpush1.msra.mxu0 0.0
  %4265 = vmatprep.subr.mxu0 0.0
  %4266 = vmatpush1.msra.mxu0 0.0
  %4267 = vmatprep.subr.mxu0 0.0
  %4268 = vmatpush1.msra.mxu0 0.0
  %4269 = vmatprep.subr.mxu0 0.0
  %4270 = vmatpush1.msra.mxu0 0.0
  %4271 = vmatprep.subr.mxu0 0.0
  %4272 = vmatpush1.msra.mxu0 0.0
  %4273 = vmatprep.subr.mxu0 0.0
  %4274 = vmatpush1.msra.mxu0 0.0
  %4275 = vmatprep.subr.mxu0 0.0
  %4276 = vmatpush1.msra.mxu0 %v4250
  %4277 = vmatprep.subr.mxu0 0.0
  %4278 = vmatpush1.msra.mxu0 %v4249
  %4279 = vmatprep.subr.mxu0 0.0
  %4280 = vmatpush1.msra.mxu0 %v4248
  %4281 = vmatprep.subr.mxu0 0.0
  %4282 = vmatpush1.msra.mxu0 %v4247
  %4283 = vmatprep.subr.mxu0 0.0
  %4284 = vmatpush2.msra.mxu0 0.0
  %4285 = vmatprep.subr.mxu0 0.0
  %4286 = vmatpush2.msra.mxu0 0.0
  %4287 = vmatprep.subr.mxu0 0.0
  %4288 = vmatpush2.msra.mxu0 0.0
  %4289 = vmatprep.subr.mxu0 0.0
  %4290 = vmatpush2.msra.mxu0 0.0
  %4291 = vmatprep.subr.mxu0 0.0
  %4292 = vmatpush2.msra.mxu0 0.0
  %4293 = vmatprep.subr.mxu0 0.0
  %4294 = vmatpush2.msra.mxu0 0.0
  %4295 = vmatprep.subr.mxu0 0.0
  %4296 = vmatpush2.msra.mxu0 0.0
  %4297 = vmatprep.subr.mxu0 0.0
  %4298 = vmatpush2.msra.mxu0 0.0
  %4299 = vmatprep.subr.mxu0 0.0
  %4300 = vmatpush2.msra.mxu0 0.0
  %4301 = vmatprep.subr.mxu0 0.0
  %4302 = vmatpush2.msra.mxu0 0.0
  %4303 = vmatprep.subr.mxu0 0.0
  %4304 = vmatpush2.msra.mxu0 0.0
  %4305 = vmatprep.subr.mxu0 0.0
  %4306 = vmatpush2.msra.mxu0 0.0
  %4307 = vmatprep.subr.mxu0 0.0
  %4308 = vmatpush2.msra.mxu0 0.0
  %4309 = vmatprep.subr.mxu0 0.0
  %4310 = vmatpush2.msra.mxu0 0.0
  %4311 = vmatprep.subr.mxu0 0.0
  %4312 = vmatpush2.msra.mxu0 0.0
  %4313 = vmatprep.subr.mxu0 0.0
  %4314 = vmatpush2.msra.mxu0 0.0
  %4315 = vmatprep.mubr.f32.mxu0 0.0
  %4316 = vmatmul.mubr.f32.gmra.mxu0 %v3935
  %v4317 = vpop.f32.mrf.mxu0
  %v4318 = vadd.f32 0.0, %v4317
  %v4319 = vpop.f32.mrf.mxu0
  %4320 = vdwg.mxu0
  %v4321 = vadd.f32 %v4246, %v4318
  %v4322 = vld [vmem:[%s7 + $0x20] sm:$0xff]
  %v4323 = vld [vmem:[%s7 + $0x28] sm:$0xff]
  %v4324 = vld [vmem:[%s7 + $0x30] sm:$0xff]
  %v4325 = vld [vmem:[%s7 + $0x38] sm:$0xff]
  %4326 = vmatprep.subr.mxu0 0.0
  %4327 = vmatpush1.msra.mxu0 0.0
  %4328 = vmatprep.subr.mxu0 0.0
  %4329 = vmatpush1.msra.mxu0 0.0
  %4330 = vmatprep.subr.mxu0 0.0
  %4331 = vmatpush1.msra.mxu0 0.0
  %4332 = vmatprep.subr.mxu0 0.0
  %4333 = vmatpush1.msra.mxu0 0.0
  %4334 = vmatprep.subr.mxu0 0.0
  %4335 = vmatpush1.msra.mxu0 0.0
  %4336 = vmatprep.subr.mxu0 0.0
  %4337 = vmatpush1.msra.mxu0 0.0
  %4338 = vmatprep.subr.mxu0 0.0
  %4339 = vmatpush1.msra.mxu0 0.0
  %4340 = vmatprep.subr.mxu0 0.0
  %4341 = vmatpush1.msra.mxu0 0.0
  %4342 = vmatprep.subr.mxu0 0.0
  %4343 = vmatpush1.msra.mxu0 0.0
  %4344 = vmatprep.subr.mxu0 0.0
  %4345 = vmatpush1.msra.mxu0 0.0
  %4346 = vmatprep.subr.mxu0 0.0
  %4347 = vmatpush1.msra.mxu0 0.0
  %4348 = vmatprep.subr.mxu0 0.0
  %4349 = vmatpush1.msra.mxu0 0.0
  %4350 = vmatprep.subr.mxu0 0.0
  %4351 = vmatpush1.msra.mxu0 %v4325
  %4352 = vmatprep.subr.mxu0 0.0
  %4353 = vmatpush1.msra.mxu0 %v4324
  %4354 = vmatprep.subr.mxu0 0.0
  %4355 = vmatpush1.msra.mxu0 %v4323
  %4356 = vmatprep.subr.mxu0 0.0
  %4357 = vmatpush1.msra.mxu0 %v4322
  %4358 = vmatprep.subr.mxu0 0.0
  %4359 = vmatpush2.msra.mxu0 0.0
  %4360 = vmatprep.subr.mxu0 0.0
  %4361 = vmatpush2.msra.mxu0 0.0
  %4362 = vmatprep.subr.mxu0 0.0
  %4363 = vmatpush2.msra.mxu0 0.0
  %4364 = vmatprep.subr.mxu0 0.0
  %4365 = vmatpush2.msra.mxu0 0.0
  %4366 = vmatprep.subr.mxu0 0.0
  %4367 = vmatpush2.msra.mxu0 0.0
  %4368 = vmatprep.subr.mxu0 0.0
  %4369 = vmatpush2.msra.mxu0 0.0
  %4370 = vmatprep.subr.mxu0 0.0
  %4371 = vmatpush2.msra.mxu0 0.0
  %4372 = vmatprep.subr.mxu0 0.0
  %4373 = vmatpush2.msra.mxu0 0.0
  %4374 = vmatprep.subr.mxu0 0.0
  %4375 = vmatpush2.msra.mxu0 0.0
  %4376 = vmatprep.subr.mxu0 0.0
  %4377 = vmatpush2.msra.mxu0 0.0
  %4378 = vmatprep.subr.mxu0 0.0
  %4379 = vmatpush2.msra.mxu0 0.0
  %4380 = vmatprep.subr.mxu0 0.0
  %4381 = vmatpush2.msra.mxu0 0.0
  %4382 = vmatprep.subr.mxu0 0.0
  %4383 = vmatpush2.msra.mxu0 0.0
  %4384 = vmatprep.subr.mxu0 0.0
  %4385 = vmatpush2.msra.mxu0 0.0
  %4386 = vmatprep.subr.mxu0 0.0
  %4387 = vmatpush2.msra.mxu0 0.0
  %4388 = vmatprep.subr.mxu0 0.0
  %4389 = vmatpush2.msra.mxu0 0.0
  %4390 = vmatprep.mubr.f32.mxu0 0.0
  %4391 = vmatmul.mubr.f32.gmra.mxu0 %v4040
  %v4392 = vpop.f32.mrf.mxu0
  %v4393 = vadd.f32 0.0, %v4392
  %v4394 = vpop.f32.mrf.mxu0
  %4395 = vdwg.mxu0
  %v4396 = vadd.f32 %v4321, %v4393
  %v4397 = vld [vmem:[%s7 + $0x40] sm:$0xff]
  %v4398 = vld [vmem:[%s7 + $0x48] sm:$0xff]
  %v4399 = vld [vmem:[%s7 + $0x50] sm:$0xff]
  %v4400 = vld [vmem:[%s7 + $0x58] sm:$0xff]
  %4401 = vmatprep.subr.mxu0 0.0
  %4402 = vmatpush1.msra.mxu0 0.0
  %4403 = vmatprep.subr.mxu0 0.0
  %4404 = vmatpush1.msra.mxu0 0.0
  %4405 = vmatprep.subr.mxu0 0.0
  %4406 = vmatpush1.msra.mxu0 0.0
  %4407 = vmatprep.subr.mxu0 0.0
  %4408 = vmatpush1.msra.mxu0 0.0
  %4409 = vmatprep.subr.mxu0 0.0
  %4410 = vmatpush1.msra.mxu0 0.0
  %4411 = vmatprep.subr.mxu0 0.0
  %4412 = vmatpush1.msra.mxu0 0.0
  %4413 = vmatprep.subr.mxu0 0.0
  %4414 = vmatpush1.msra.mxu0 0.0
  %4415 = vmatprep.subr.mxu0 0.0
  %4416 = vmatpush1.msra.mxu0 0.0
  %4417 = vmatprep.subr.mxu0 0.0
  %4418 = vmatpush1.msra.mxu0 0.0
  %4419 = vmatprep.subr.mxu0 0.0
  %4420 = vmatpush1.msra.mxu0 0.0
  %4421 = vmatprep.subr.mxu0 0.0
  %4422 = vmatpush1.msra.mxu0 0.0
  %4423 = vmatprep.subr.mxu0 0.0
  %4424 = vmatpush1.msra.mxu0 0.0
  %4425 = vmatprep.subr.mxu0 0.0
  %4426 = vmatpush1.msra.mxu0 %v4400
  %4427 = vmatprep.subr.mxu0 0.0
  %4428 = vmatpush1.msra.mxu0 %v4399
  %4429 = vmatprep.subr.mxu0 0.0
  %4430 = vmatpush1.msra.mxu0 %v4398
  %4431 = vmatprep.subr.mxu0 0.0
  %4432 = vmatpush1.msra.mxu0 %v4397
  %4433 = vmatprep.subr.mxu0 0.0
  %4434 = vmatpush2.msra.mxu0 0.0
  %4435 = vmatprep.subr.mxu0 0.0
  %4436 = vmatpush2.msra.mxu0 0.0
  %4437 = vmatprep.subr.mxu0 0.0
  %4438 = vmatpush2.msra.mxu0 0.0
  %4439 = vmatprep.subr.mxu0 0.0
  %4440 = vmatpush2.msra.mxu0 0.0
  %4441 = vmatprep.subr.mxu0 0.0
  %4442 = vmatpush2.msra.mxu0 0.0
  %4443 = vmatprep.subr.mxu0 0.0
  %4444 = vmatpush2.msra.mxu0 0.0
  %4445 = vmatprep.subr.mxu0 0.0
  %4446 = vmatpush2.msra.mxu0 0.0
  %4447 = vmatprep.subr.mxu0 0.0
  %4448 = vmatpush2.msra.mxu0 0.0
  %4449 = vmatprep.subr.mxu0 0.0
  %4450 = vmatpush2.msra.mxu0 0.0
  %4451 = vmatprep.subr.mxu0 0.0
  %4452 = vmatpush2.msra.mxu0 0.0
  %4453 = vmatprep.subr.mxu0 0.0
  %4454 = vmatpush2.msra.mxu0 0.0
  %4455 = vmatprep.subr.mxu0 0.0
  %4456 = vmatpush2.msra.mxu0 0.0
  %4457 = vmatprep.subr.mxu0 0.0
  %4458 = vmatpush2.msra.mxu0 0.0
  %4459 = vmatprep.subr.mxu0 0.0
  %4460 = vmatpush2.msra.mxu0 0.0
  %4461 = vmatprep.subr.mxu0 0.0
  %4462 = vmatpush2.msra.mxu0 0.0
  %4463 = vmatprep.subr.mxu0 0.0
  %4464 = vmatpush2.msra.mxu0 0.0
  %4465 = vmatprep.mubr.f32.mxu0 0.0
  %4466 = vmatmul.mubr.f32.gmra.mxu0 %v4145
  %v4467 = vpop.f32.mrf.mxu0
  %v4468 = vadd.f32 0.0, %v4467
  %v4469 = vpop.f32.mrf.mxu0
  %4470 = vdwg.mxu0
  %v4471 = vadd.f32 %v4396, %v4468
  %v4472 = vld [vmem:[%s7 + $0x60] sm:$0xff]
  %v4473 = vld [vmem:[%s7 + $0x68] sm:$0xff]
  %v4474 = vld [vmem:[%s7 + $0x70] sm:$0xff]
  %v4475 = vld [vmem:[%s7 + $0x78] sm:$0xff]
  %v4477 = vrot.slane %v4245, 3
  %4478 = vrot.lane.b32.xlu0 %v4477, 32
  %v4479 = vpop.permute.xlu0 %4478
  %v4480 = vsel %vm895, %v4479, 0
  %4482 = vmatprep.subr.mxu0 0.0
  %4483 = vmatpush1.msra.mxu0 0.0
  %4484 = vmatprep.subr.mxu0 0.0
  %4485 = vmatpush1.msra.mxu0 0.0
  %4486 = vmatprep.subr.mxu0 0.0
  %4487 = vmatpush1.msra.mxu0 0.0
  %4488 = vmatprep.subr.mxu0 0.0
  %4489 = vmatpush1.msra.mxu0 0.0
  %4490 = vmatprep.subr.mxu0 0.0
  %4491 = vmatpush1.msra.mxu0 0.0
  %4492 = vmatprep.subr.mxu0 0.0
  %4493 = vmatpush1.msra.mxu0 0.0
  %4494 = vmatprep.subr.mxu0 0.0
  %4495 = vmatpush1.msra.mxu0 0.0
  %4496 = vmatprep.subr.mxu0 0.0
  %4497 = vmatpush1.msra.mxu0 0.0
  %4498 = vmatprep.subr.mxu0 0.0
  %4499 = vmatpush1.msra.mxu0 0.0
  %4500 = vmatprep.subr.mxu0 0.0
  %4501 = vmatpush1.msra.mxu0 0.0
  %4502 = vmatprep.subr.mxu0 0.0
  %4503 = vmatpush1.msra.mxu0 0.0
  %4504 = vmatprep.subr.mxu0 0.0
  %4505 = vmatpush1.msra.mxu0 0.0
  %4506 = vmatprep.subr.mxu0 0.0
  %4507 = vmatpush1.msra.mxu0 %v4475
  %4508 = vmatprep.subr.mxu0 0.0
  %4509 = vmatpush1.msra.mxu0 %v4474
  %4510 = vmatprep.subr.mxu0 0.0
  %4511 = vmatpush1.msra.mxu0 %v4473
  %4512 = vmatprep.subr.mxu0 0.0
  %4513 = vmatpush1.msra.mxu0 %v4472
  %4514 = vmatprep.subr.mxu0 0.0
  %4515 = vmatpush2.msra.mxu0 0.0
  %4516 = vmatprep.subr.mxu0 0.0
  %4517 = vmatpush2.msra.mxu0 0.0
  %4518 = vmatprep.subr.mxu0 0.0
  %4519 = vmatpush2.msra.mxu0 0.0
  %4520 = vmatprep.subr.mxu0 0.0
  %4521 = vmatpush2.msra.mxu0 0.0
  %4522 = vmatprep.subr.mxu0 0.0
  %4523 = vmatpush2.msra.mxu0 0.0
  %4524 = vmatprep.subr.mxu0 0.0
  %4525 = vmatpush2.msra.mxu0 0.0
  %4526 = vmatprep.subr.mxu0 0.0
  %4527 = vmatpush2.msra.mxu0 0.0
  %4528 = vmatprep.subr.mxu0 0.0
  %4529 = vmatpush2.msra.mxu0 0.0
  %4530 = vmatprep.subr.mxu0 0.0
  %4531 = vmatpush2.msra.mxu0 0.0
  %4532 = vmatprep.subr.mxu0 0.0
  %4533 = vmatpush2.msra.mxu0 0.0
  %4534 = vmatprep.subr.mxu0 0.0
  %4535 = vmatpush2.msra.mxu0 0.0
  %4536 = vmatprep.subr.mxu0 0.0
  %4537 = vmatpush2.msra.mxu0 0.0
  %4538 = vmatprep.subr.mxu0 0.0
  %4539 = vmatpush2.msra.mxu0 0.0
  %4540 = vmatprep.subr.mxu0 0.0
  %4541 = vmatpush2.msra.mxu0 0.0
  %4542 = vmatprep.subr.mxu0 0.0
  %4543 = vmatpush2.msra.mxu0 0.0
  %4544 = vmatprep.subr.mxu0 0.0
  %4545 = vmatpush2.msra.mxu0 0.0
  %4546 = vmatprep.mubr.f32.mxu0 0.0
  %4547 = vmatmul.mubr.f32.gmra.mxu0 %v4480
  %v4548 = vpop.f32.mrf.mxu0
  %v4549 = vadd.f32 0.0, %v4548
  %v4550 = vpop.f32.mrf.mxu0
  %4551 = vdwg.mxu0
  %v4552 = vadd.f32 %v4471, %v4549
  %vm4553 = vcmask 24576
  %v4554 = vsel %vm4553, %v4552, -inf
  %4555 = vmax.xlane.f32.xlu0 %v4554
  %v4556 = vpop.xlane.xlu0 %4555
  %v4557 = vsub.f32 %v4552, %v4556
  %v4558 = vmul.f32 %v4557, 1.442695
  %v4559 = vpow.pop %v4558
  %v4560 = vsel %vm4553, %v4559, 0.0
  %4561 = vadd.xlane.f32.xlu0 %v4560
  %v4562 = vpop.xlane.xlu0 %4561
  %v4563 = vlog2.pop %v4562
  %v4564 = vmul.f32 %v4563, 0.6931472
  %v4565 = vsub.f32 %v4557, %v4564
  %vm4566 = vcmask 57376
  %v4567 = vsel %vm4566, %v4552, -inf
  %4568 = vmax.xlane.f32.xlu0 %v4567
  %v4569 = vpop.xlane.xlu0 %4568
  %v4570 = vsub.f32 %v4552, %v4569
  %v4571 = vmul.f32 %v4570, 1.442695
  %v4572 = vpow.pop %v4571
  %4574 = vrot.lane.b32.xlu0 %v4572, 124
  %v4575 = vpop.permute.xlu0 %4574
  %v4577 = vsel %vm4553, %v4575, 0.0
  %4578 = vadd.xlane.f32.xlu0 %v4577
  %v4579 = vpop.xlane.xlu0 %4578
  %v4580 = vlog2.pop %v4579
  %v4581 = vmul.f32 %v4580, 0.6931472
  %v4582 = vsub.f32 %v4570, %v4581
  %vm4583 = vcmask 90176
  %v4584 = vsel %vm4583, %v4552, -inf
  %4585 = vmax.xlane.f32.xlu0 %v4584
  %v4586 = vpop.xlane.xlu0 %4585
  %v4587 = vsub.f32 %v4552, %v4586
  %v4588 = vmul.f32 %v4587, 1.442695
  %v4589 = vpow.pop %v4588
  %4591 = vrot.lane.b32.xlu0 %v4589, 120
  %v4592 = vpop.permute.xlu0 %4591
  %v4594 = vsel %vm4553, %v4592, 0.0
  %4595 = vadd.xlane.f32.xlu0 %v4594
  %v4596 = vpop.xlane.xlu0 %4595
  %v4597 = vlog2.pop %v4596
  %v4598 = vmul.f32 %v4597, 0.6931472
  %v4599 = vsub.f32 %v4587, %v4598
  %vm4600 = vcmask 31744
  %v4601 = vsel %vm4600, %v4565, %v4582
  %vm4602 = vcmask 64512
  %v4603 = vsel %vm4602, %v4601, %v4599
  %4604 = vrot.lane.b32.xlu0 %v4477, 64
  %v4605 = vpop.permute.xlu0 %4604
  %v4608 = vrot.slane %v4239, 3
  %4609 = vrot.lane.b32.xlu0 %v4608, 32
  %v4610 = vpop.permute.xlu0 %4609
  %vm4612 = vcmask 97280
  %v4613 = vsel %vm4612, %v4603, 0.0
  %v4614 = vsel %vm895, %v4613, %v4605
  %vm4615 = vcmask 523264
  %v4616 = vsel %vm4615, %v4614, %v4610
  %vm4617 = vcmask 785408
  %v4618 = vsel %vm4617, %v4616, 0.0
  %4619 = vst [vmem:[%s8] sm:$0x1] %v4618
  // Predicated region
  $region34: #{actor_forward.1} parent=0 // pred_check
    _
  $region35: #{actor_forward.1} parent=0 // pred_check_branch
    %4621 = sbr.rel (0) target = $region37
  $region36: #{actor_forward.1} parent=0 // pred_region
    _
  $region37: #{actor_forward.1} parent=0 // pred_fallthru
    _
  // Predicated region
  $region38: #{actor_forward.1} parent=0 // pred_check
    _
  $region39: #{actor_forward.1} parent=0 // pred_check_branch
    %4623 = sbr.rel (0) target = $region41
  $region40: #{actor_forward.1} parent=0 // pred_region
    _
  $region41: #{actor_forward.1} parent=0 // pred_fallthru
    _

</llo_original>
